<compile_context>
chip_gen: v5e
topology: v5e:2x2
jax: 0.10.0
libtpu: 0.0.40
codegen_flags: <defaults>
</compile_context>

<pallas_src>
import jax
import jax.numpy as jnp
import numpy as np
from jax.experimental import pallas as pl
from jax.experimental.pallas import tpu as pltpu

# ---------------- model dims (small, consistent with the module signature) ----------------
BATCH = 2
C_IN = 4
IMG = 16                 # image spatial size (16 x 16)
POOL = 4                 # adaptive pool output side -> P = POOL*POOL pixels
P = POOL * POOL          # number of attended pixel locations
ENC_DIM = 32             # encoder feature dim
EMBED_DIM = 16           # embed_dim
HIDDEN_DIM = 32          # hidden_dim
VOCAB_SIZE = 48          # vocab_size
VOCAB_PAD = 128          # FC output padded to one full lane width; sliced in the wrapper
ATTENTION_DIM = 32       # attention_dim
SEQ_LEN = 8              # caption length


def _pool_matrix(h, w, pool):
    """(P, H*W) adaptive average-pool matrix (pixel order = row-major h*W + w)."""
    kh, kw = h // pool, w // pool
    m = np.zeros((pool * pool, h * w), dtype=np.float32)
    for ph in range(pool):
        for pw in range(pool):
            p = ph * pool + pw
            for ih in range(kh):
                for iw in range(kw):
                    m[p, (ph * kh + ih) * w + (pw * kw + iw)] = 1.0 / (kh * kw)
    return jnp.asarray(m)


# =========================== fused encoder + decoder kernel ===========================
def fused_kernel(cap_ref, x_ref, emb_ref, enc_w_ref, enc_b_ref, pool_ref,
                 w_init_h_ref, b_init_h_ref, w_init_c_ref, b_init_c_ref,
                 w_enc_att_ref, b_enc_att_ref, w_dec_att_ref, b_dec_att_ref,
                 w_full_att_ref,
                 w_gates_ref, b_gates_ref, w_fc_ref, b_fc_ref,
                 out_ref):
    B, T = cap_ref.shape                 # captions live in SMEM
    P_, HW = pool_ref.shape
    HID = w_dec_att_ref.shape[0]
    ATT = w_dec_att_ref.shape[1]

    # ---- encoder: pointwise conv + ReLU, adaptive avg-pool expressed as a matmul ----
    x = x_ref[...].astype(jnp.float32)                                        # (B*HW, C_IN)
    y = jax.nn.relu(jnp.dot(x, enc_w_ref[...], preferred_element_type=jnp.float32)
                    + enc_b_ref[...])                                         # (B*HW, ENC)
    pool_m = pool_ref[...]                                                    # (P, HW)
    feats2d = jnp.concatenate(
        [jnp.dot(pool_m, y[b * HW:(b + 1) * HW, :], preferred_element_type=jnp.float32)
         for b in range(B)], axis=0)                                          # (B*P, ENC)
    feats = feats2d.reshape(B, P_, -1)                                        # (B, P, ENC)

    # ---- t-invariant attention projection of encoder features (hoisted out of the loop) ----
    att1 = (jnp.dot(feats2d, w_enc_att_ref[...], preferred_element_type=jnp.float32)
            + b_enc_att_ref[...]).reshape(B, P_, ATT)                         # (B, P, A)

    # ---- init LSTM state from mean-pooled features ----
    mean_feat = jnp.mean(feats, axis=1)                                       # (B, ENC)
    h = (jnp.dot(mean_feat, w_init_h_ref[...], preferred_element_type=jnp.float32)
         + b_init_h_ref[...])                                                 # (B, HID)
    c = (jnp.dot(mean_feat, w_init_c_ref[...], preferred_element_type=jnp.float32)
         + b_init_c_ref[...])                                                 # (B, HID)

    w_dec_att = w_dec_att_ref[...]
    b_dec_att = b_dec_att_ref[...]
    w_full_att = w_full_att_ref[...]                                          # (A, 1)
    w_gates = w_gates_ref[...]                                                # (E+ENC+HID, 4*HID)
    b_gates = b_gates_ref[...]                                                # (1, 4*HID)
    w_fc = w_fc_ref[...]                                                      # (HID, VOCAB_PAD)
    b_fc = b_fc_ref[...]                                                      # (1, VOCAB_PAD)

    # ---- decoder: fully unrolled over T (static); h/c carried as live values ----
    for t in range(T):
        # soft attention over the P pixel features
        att2 = jnp.dot(h, w_dec_att, preferred_element_type=jnp.float32) + b_dec_att   # (B, A)
        act = jax.nn.relu(att1 + att2[:, None, :])                                     # (B, P, A)
        e = jnp.dot(act.reshape(B * P_, ATT), w_full_att,
                    preferred_element_type=jnp.float32).reshape(B, P_, 1)               # (B, P, 1)
        # full_att bias omitted: a uniform shift cancels inside the softmax (exact).
        alpha = jax.nn.softmax(e, axis=1)                                                # (B, P, 1)
        context = jnp.sum(alpha * feats, axis=1)                                         # (B, ENC)

        # embedding gather from the VMEM-resident table using SMEM caption indices
        emb_t = jnp.concatenate(
            [emb_ref[pl.ds(cap_ref[b, t], 1), :] for b in range(B)], axis=0)             # (B, E)

        # LSTMCell: single fused gate matmul over [emb ; context ; h] (PyTorch i,f,g,o order)
        xin = jnp.concatenate([emb_t, context, h], axis=-1)                              # (B, E+ENC+HID)
        gates = jnp.dot(xin, w_gates, preferred_element_type=jnp.float32) + b_gates      # (B, 4*HID)
        sg = jax.nn.sigmoid(gates)        # whole-vreg EUP
        tg = jnp.tanh(gates)              # whole-vreg EUP
        i_g = sg[:, 0 * HID:1 * HID]
        f_g = sg[:, 1 * HID:2 * HID]
        g_g = tg[:, 2 * HID:3 * HID]
        o_g = sg[:, 3 * HID:4 * HID]
        c = f_g * c + i_g * g_g
        h = o_g * jnp.tanh(c)

        # output projection (lane-padded to VOCAB_PAD); VMEM-resident output block,
        # single HBM writeback happens once at kernel end.
        logits = jnp.dot(h, w_fc, preferred_element_type=jnp.float32) + b_fc             # (B, VOCAB_PAD)
        out_ref[:, t:t + 1, :] = logits[:, None, :]


# =========================== wrapper ===========================
def image_captioning_forward(images, captions, params):
    B, C, H, W = images.shape
    T = captions.shape[1]
    # NCHW -> pixel-major channels-last (layout plumbing only)
    x = jnp.transpose(images, (0, 2, 3, 1)).reshape(B * H * W, C).astype(jnp.float32)
    pool_mat = _pool_matrix(H, W, POOL)

    # parameter fusion / lane padding (tiny, constant-foldable glue)
    w_gates = jnp.concatenate([params["w_xe"], params["w_xc"], params["w_hh"]], axis=0)
    b_gates = params["b_ih"] + params["b_hh"]
    w_fc_pad = jnp.pad(params["w_fc"], ((0, 0), (0, VOCAB_PAD - VOCAB_SIZE)))
    b_fc_pad = jnp.pad(params["b_fc"], ((0, 0), (0, VOCAB_PAD - VOCAB_SIZE)))
    # NOTE: params["b_full_att"] is intentionally unused in-kernel (softmax-invariant).

    inputs = (
        captions.astype(jnp.int32),                                     # -> SMEM
        x, params["embedding"], params["enc_w"], params["enc_b"], pool_mat,
        params["w_init_h"], params["b_init_h"], params["w_init_c"], params["b_init_c"],
        params["w_enc_att"], params["b_enc_att"], params["w_dec_att"], params["b_dec_att"],
        params["w_full_att"],
        w_gates, b_gates, w_fc_pad, b_fc_pad,
    )
    in_specs = ([pl.BlockSpec(memory_space=pltpu.MemorySpace.SMEM)]
                + [pl.BlockSpec(memory_space=pltpu.MemorySpace.VMEM)] * (len(inputs) - 1))

    preds_pad = pl.pallas_call(
        fused_kernel,
        out_shape=jax.ShapeDtypeStruct((B, T, VOCAB_PAD), jnp.float32),
        in_specs=in_specs,
        out_specs=pl.BlockSpec(memory_space=pltpu.MemorySpace.VMEM),
    )(*inputs)
    return preds_pad[:, :, :VOCAB_SIZE]


# =========================== parameter init ===========================
def init_params(key):
    def nrm(key, shape, scale=0.05):
        return scale * jax.random.normal(key, shape, dtype=jnp.float32)

    keys = jax.random.split(key, 20)
    p = {}
    # encoder (synthetic pointwise conv)
    p["enc_w"] = nrm(keys[0], (C_IN, ENC_DIM))
    p["enc_b"] = nrm(keys[1], (1, ENC_DIM))
    # embedding
    p["embedding"] = nrm(keys[2], (VOCAB_SIZE, EMBED_DIM))
    # init_h / init_c linears
    p["w_init_h"] = nrm(keys[3], (ENC_DIM, HIDDEN_DIM))
    p["b_init_h"] = nrm(keys[4], (1, HIDDEN_DIM))
    p["w_init_c"] = nrm(keys[5], (ENC_DIM, HIDDEN_DIM))
    p["b_init_c"] = nrm(keys[6], (1, HIDDEN_DIM))
    # attention
    p["w_enc_att"] = nrm(keys[7], (ENC_DIM, ATTENTION_DIM))
    p["b_enc_att"] = nrm(keys[8], (1, ATTENTION_DIM))
    p["w_dec_att"] = nrm(keys[9], (HIDDEN_DIM, ATTENTION_DIM))
    p["b_dec_att"] = nrm(keys[10], (1, ATTENTION_DIM))
    p["w_full_att"] = nrm(keys[11], (ATTENTION_DIM, 1))
    p["b_full_att"] = nrm(keys[12], (1, 1))
    # LSTMCell: weight_ih split into embedding part and context part (pre-transposed)
    p["w_xe"] = nrm(keys[13], (EMBED_DIM, 4 * HIDDEN_DIM))
    p["w_xc"] = nrm(keys[14], (ENC_DIM, 4 * HIDDEN_DIM))
    p["b_ih"] = nrm(keys[15], (1, 4 * HIDDEN_DIM))
    p["w_hh"] = nrm(keys[16], (HIDDEN_DIM, 4 * HIDDEN_DIM))
    p["b_hh"] = nrm(keys[17], (1, 4 * HIDDEN_DIM))
    # output FC
    p["w_fc"] = nrm(keys[18], (HIDDEN_DIM, VOCAB_SIZE))
    p["b_fc"] = nrm(keys[19], (1, VOCAB_SIZE))
    return p


if __name__ == "__main__":
    key = jax.random.PRNGKey(0)
    k_img, k_cap, k_par = jax.random.split(key, 3)

    images = jax.random.normal(k_img, (BATCH, C_IN, IMG, IMG), dtype=jnp.float32)  # NCHW
    captions = jax.random.randint(k_cap, (BATCH, SEQ_LEN), 0, VOCAB_SIZE, dtype=jnp.int32)
    params = init_params(k_par)

    preds = jax.jit(image_captioning_forward)(images, captions, params)
    preds = jax.block_until_ready(preds)

    assert preds.shape == (BATCH, SEQ_LEN, VOCAB_SIZE)
    assert bool(jnp.all(jnp.isfinite(preds)))
    print("KERNEL_OK")
</pallas_src>

<mosaic_0001>
module attributes {stable_mosaic.version = 11 : i64} {
  func.func @fused_kernel(%arg0: memref<2x8xi32, #tpu.memory_space<smem>>, %arg1: memref<512x4xf32, #tpu.memory_space<vmem>>, %arg2: memref<48x16xf32, #tpu.memory_space<vmem>>, %arg3: memref<4x32xf32, #tpu.memory_space<vmem>>, %arg4: memref<1x32xf32, #tpu.memory_space<vmem>>, %arg5: memref<16x256xf32, #tpu.memory_space<vmem>>, %arg6: memref<32x32xf32, #tpu.memory_space<vmem>>, %arg7: memref<1x32xf32, #tpu.memory_space<vmem>>, %arg8: memref<32x32xf32, #tpu.memory_space<vmem>>, %arg9: memref<1x32xf32, #tpu.memory_space<vmem>>, %arg10: memref<32x32xf32, #tpu.memory_space<vmem>>, %arg11: memref<1x32xf32, #tpu.memory_space<vmem>>, %arg12: memref<32x32xf32, #tpu.memory_space<vmem>>, %arg13: memref<1x32xf32, #tpu.memory_space<vmem>>, %arg14: memref<32x1xf32, #tpu.memory_space<vmem>>, %arg15: memref<80x128xf32, #tpu.memory_space<vmem>>, %arg16: memref<1x128xf32, #tpu.memory_space<vmem>>, %arg17: memref<32x128xf32, #tpu.memory_space<vmem>>, %arg18: memref<1x128xf32, #tpu.memory_space<vmem>>, %arg19: memref<2x8x128xf32, #tpu.memory_space<vmem>>) attributes {dimension_semantics = [], scalar_prefetch = 0 : i64, scratch_operands = 0 : i64, tpu.core_type = #tpu.core_type<tc>} {
    %c0 = arith.constant 0 : index
    %c0_0 = arith.constant 0 : index
    %0 = vector.load %arg1[%c0, %c0_0] : memref<512x4xf32, #tpu.memory_space<vmem>>, vector<512x4xf32>
    %c0_1 = arith.constant 0 : index
    %c0_2 = arith.constant 0 : index
    %1 = vector.load %arg3[%c0_1, %c0_2] : memref<4x32xf32, #tpu.memory_space<vmem>>, vector<4x32xf32>
    %cst = arith.constant dense<0.000000e+00> : vector<512x32xf32>
    %2 = tpu.matmul %0, %1, %cst {dimension_numbers = #tpu.dot_dimension_numbers<[1], [0], [0], [1], [0, 0, 1, 1], [], []>} : vector<512x4xf32>, vector<4x32xf32>, vector<512x32xf32> -> vector<512x32xf32>
    %c0_3 = arith.constant 0 : index
    %c0_4 = arith.constant 0 : index
    %3 = vector.load %arg4[%c0_3, %c0_4] : memref<1x32xf32, #tpu.memory_space<vmem>>, vector<1x32xf32>
    %4 = vector.broadcast %3 : vector<1x32xf32> to vector<512x32xf32>
    %5 = arith.addf %2, %4 : vector<512x32xf32>
    %cst_5 = arith.constant 0.000000e+00 : f32
    %6 = vector.broadcast %cst_5 : f32 to vector<512x32xf32>
    %7 = arith.maximumf %5, %6 : vector<512x32xf32>
    %c0_6 = arith.constant 0 : index
    %c0_7 = arith.constant 0 : index
    %8 = vector.load %arg5[%c0_6, %c0_7] : memref<16x256xf32, #tpu.memory_space<vmem>>, vector<16x256xf32>
    %9 = vector.extract_strided_slice %7 {offsets = [0, 0], sizes = [256, 32], strides = [1, 1]} : vector<512x32xf32> to vector<256x32xf32>
    %cst_8 = arith.constant dense<0.000000e+00> : vector<16x32xf32>
    %10 = tpu.matmul %8, %9, %cst_8 {dimension_numbers = #tpu.dot_dimension_numbers<[1], [0], [0], [1], [0, 0, 1, 1], [], []>} : vector<16x256xf32>, vector<256x32xf32>, vector<16x32xf32> -> vector<16x32xf32>
    %11 = vector.extract_strided_slice %7 {offsets = [256, 0], sizes = [256, 32], strides = [1, 1]} : vector<512x32xf32> to vector<256x32xf32>
    %cst_9 = arith.constant dense<0.000000e+00> : vector<16x32xf32>
    %12 = tpu.matmul %8, %11, %cst_9 {dimension_numbers = #tpu.dot_dimension_numbers<[1], [0], [0], [1], [0, 0, 1, 1], [], []>} : vector<16x256xf32>, vector<256x32xf32>, vector<16x32xf32> -> vector<16x32xf32>
    %13 = tpu.concatenate %10, %12 in 0 : vector<16x32xf32>, vector<16x32xf32> -> vector<32x32xf32>
    %14 = vector.shape_cast %13 : vector<32x32xf32> to vector<2x16x32xf32>
    %c0_10 = arith.constant 0 : index
    %c0_11 = arith.constant 0 : index
    %15 = vector.load %arg10[%c0_10, %c0_11] : memref<32x32xf32, #tpu.memory_space<vmem>>, vector<32x32xf32>
    %cst_12 = arith.constant dense<0.000000e+00> : vector<32x32xf32>
    %16 = tpu.matmul %13, %15, %cst_12 {dimension_numbers = #tpu.dot_dimension_numbers<[1], [0], [0], [1], [0, 0, 1, 1], [], []>} : vector<32x32xf32>, vector<32x32xf32>, vector<32x32xf32> -> vector<32x32xf32>
    %c0_13 = arith.constant 0 : index
    %c0_14 = arith.constant 0 : index
    %17 = vector.load %arg11[%c0_13, %c0_14] : memref<1x32xf32, #tpu.memory_space<vmem>>, vector<1x32xf32>
    %18 = vector.broadcast %17 : vector<1x32xf32> to vector<32x32xf32>
    %19 = arith.addf %16, %18 : vector<32x32xf32>
    %20 = vector.shape_cast %19 : vector<32x32xf32> to vector<2x16x32xf32>
    %cst_15 = arith.constant dense<0.000000e+00> : vector<2x32xf32>
    %21 = vector.multi_reduction <add>, %14, %cst_15 [1] : vector<2x16x32xf32> to vector<2x32xf32>
    %cst_16 = arith.constant 1.600000e+01 : f32
    %22 = vector.broadcast %cst_16 : f32 to vector<2x32xf32>
    %23 = arith.divf %21, %22 : vector<2x32xf32>
    %c0_17 = arith.constant 0 : index
    %c0_18 = arith.constant 0 : index
    %24 = vector.load %arg6[%c0_17, %c0_18] : memref<32x32xf32, #tpu.memory_space<vmem>>, vector<32x32xf32>
    %cst_19 = arith.constant dense<0.000000e+00> : vector<2x32xf32>
    %25 = tpu.matmul %23, %24, %cst_19 {dimension_numbers = #tpu.dot_dimension_numbers<[1], [0], [0], [1], [0, 0, 1, 1], [], []>} : vector<2x32xf32>, vector<32x32xf32>, vector<2x32xf32> -> vector<2x32xf32>
    %c0_20 = arith.constant 0 : index
    %c0_21 = arith.constant 0 : index
    %26 = vector.load %arg7[%c0_20, %c0_21] : memref<1x32xf32, #tpu.memory_space<vmem>>, vector<1x32xf32>
    %27 = vector.broadcast %26 : vector<1x32xf32> to vector<2x32xf32>
    %28 = arith.addf %25, %27 : vector<2x32xf32>
    %c0_22 = arith.constant 0 : index
    %c0_23 = arith.constant 0 : index
    %29 = vector.load %arg8[%c0_22, %c0_23] : memref<32x32xf32, #tpu.memory_space<vmem>>, vector<32x32xf32>
    %cst_24 = arith.constant dense<0.000000e+00> : vector<2x32xf32>
    %30 = tpu.matmul %23, %29, %cst_24 {dimension_numbers = #tpu.dot_dimension_numbers<[1], [0], [0], [1], [0, 0, 1, 1], [], []>} : vector<2x32xf32>, vector<32x32xf32>, vector<2x32xf32> -> vector<2x32xf32>
    %c0_25 = arith.constant 0 : index
    %c0_26 = arith.constant 0 : index
    %31 = vector.load %arg9[%c0_25, %c0_26] : memref<1x32xf32, #tpu.memory_space<vmem>>, vector<1x32xf32>
    %32 = vector.broadcast %31 : vector<1x32xf32> to vector<2x32xf32>
    %33 = arith.addf %30, %32 : vector<2x32xf32>
    %c0_27 = arith.constant 0 : index
    %c0_28 = arith.constant 0 : index
    %34 = vector.load %arg12[%c0_27, %c0_28] : memref<32x32xf32, #tpu.memory_space<vmem>>, vector<32x32xf32>
    %c0_29 = arith.constant 0 : index
    %c0_30 = arith.constant 0 : index
    %35 = vector.load %arg13[%c0_29, %c0_30] : memref<1x32xf32, #tpu.memory_space<vmem>>, vector<1x32xf32>
    %c0_31 = arith.constant 0 : index
    %c0_32 = arith.constant 0 : index
    %36 = vector.load %arg14[%c0_31, %c0_32] : memref<32x1xf32, #tpu.memory_space<vmem>>, vector<32x1xf32>
    %c0_33 = arith.constant 0 : index
    %c0_34 = arith.constant 0 : index
    %37 = vector.load %arg15[%c0_33, %c0_34] : memref<80x128xf32, #tpu.memory_space<vmem>>, vector<80x128xf32>
    %c0_35 = arith.constant 0 : index
    %c0_36 = arith.constant 0 : index
    %38 = vector.load %arg16[%c0_35, %c0_36] : memref<1x128xf32, #tpu.memory_space<vmem>>, vector<1x128xf32>
    %c0_37 = arith.constant 0 : index
    %c0_38 = arith.constant 0 : index
    %39 = vector.load %arg17[%c0_37, %c0_38] : memref<32x128xf32, #tpu.memory_space<vmem>>, vector<32x128xf32>
    %c0_39 = arith.constant 0 : index
    %c0_40 = arith.constant 0 : index
    %40 = vector.load %arg18[%c0_39, %c0_40] : memref<1x128xf32, #tpu.memory_space<vmem>>, vector<1x128xf32>
    %cst_41 = arith.constant dense<0.000000e+00> : vector<2x32xf32>
    %41 = tpu.matmul %28, %34, %cst_41 {dimension_numbers = #tpu.dot_dimension_numbers<[1], [0], [0], [1], [0, 0, 1, 1], [], []>} : vector<2x32xf32>, vector<32x32xf32>, vector<2x32xf32> -> vector<2x32xf32>
    %42 = vector.broadcast %35 : vector<1x32xf32> to vector<2x32xf32>
    %43 = arith.addf %41, %42 : vector<2x32xf32>
    %44 = vector.shape_cast %43 : vector<2x32xf32> to vector<2x1x32xf32>
    %45 = vector.broadcast %44 : vector<2x1x32xf32> to vector<2x16x32xf32>
    %46 = arith.addf %20, %45 : vector<2x16x32xf32>
    %cst_42 = arith.constant 0.000000e+00 : f32
    %47 = vector.broadcast %cst_42 : f32 to vector<2x16x32xf32>
    %48 = arith.maximumf %46, %47 : vector<2x16x32xf32>
    %49 = vector.shape_cast %48 : vector<2x16x32xf32> to vector<32x32xf32>
    %cst_43 = arith.constant dense<0.000000e+00> : vector<32x1xf32>
    %50 = tpu.matmul %49, %36, %cst_43 {dimension_numbers = #tpu.dot_dimension_numbers<[1], [0], [0], [1], [0, 0, 1, 1], [], []>} : vector<32x32xf32>, vector<32x1xf32>, vector<32x1xf32> -> vector<32x1xf32>
    %51 = vector.shape_cast %50 : vector<32x1xf32> to vector<2x16x1xf32>
    %cst_44 = arith.constant dense<0xFF800000> : vector<2x1xf32>
    %52 = vector.multi_reduction <maximumf>, %51, %cst_44 [1] : vector<2x16x1xf32> to vector<2x1xf32>
    %cst_45 = arith.constant 0xFF800000 : f32
    %53 = vector.broadcast %cst_45 : f32 to vector<2x1xf32>
    %54 = arith.maximumf %53, %52 : vector<2x1xf32>
    %55 = vector.shape_cast %54 : vector<2x1xf32> to vector<2x1x1xf32>
    %56 = vector.broadcast %55 : vector<2x1x1xf32> to vector<2x16x1xf32>
    %57 = arith.subf %51, %56 : vector<2x16x1xf32>
    %58 = math.exp %57 : vector<2x16x1xf32>
    %cst_46 = arith.constant dense<0.000000e+00> : vector<2x1xf32>
    %59 = vector.multi_reduction <add>, %58, %cst_46 [1] : vector<2x16x1xf32> to vector<2x1xf32>
    %60 = vector.shape_cast %59 : vector<2x1xf32> to vector<2x1x1xf32>
    %61 = vector.broadcast %60 : vector<2x1x1xf32> to vector<2x16x1xf32>
    %62 = arith.divf %58, %61 : vector<2x16x1xf32>
    %63 = vector.broadcast %62 : vector<2x16x1xf32> to vector<2x16x32xf32>
    %64 = arith.mulf %63, %14 : vector<2x16x32xf32>
    %cst_47 = arith.constant dense<0.000000e+00> : vector<2x32xf32>
    %65 = vector.multi_reduction <add>, %64, %cst_47 [1] : vector<2x16x32xf32> to vector<2x32xf32>
    %c0_48 = arith.constant 0 : index
    %c0_49 = arith.constant 0 : index
    %66 = memref.load %arg0[%c0_48, %c0_49] : memref<2x8xi32, #tpu.memory_space<smem>>
    %67 = arith.index_cast %66 : i32 to index
    %c0_50 = arith.constant 0 : index
    %68 = vector.load %arg2[%67, %c0_50] : memref<48x16xf32, #tpu.memory_space<vmem>>, vector<1x16xf32>
    %c1 = arith.constant 1 : index
    %c0_51 = arith.constant 0 : index
    %69 = memref.load %arg0[%c1, %c0_51] : memref<2x8xi32, #tpu.memory_space<smem>>
    %70 = arith.index_cast %69 : i32 to index
    %c0_52 = arith.constant 0 : index
    %71 = vector.load %arg2[%70, %c0_52] : memref<48x16xf32, #tpu.memory_space<vmem>>, vector<1x16xf32>
    %72 = tpu.concatenate %68, %71 in 0 : vector<1x16xf32>, vector<1x16xf32> -> vector<2x16xf32>
    %73 = tpu.concatenate %72, %65, %28 in 1 : vector<2x16xf32>, vector<2x32xf32>, vector<2x32xf32> -> vector<2x80xf32>
    %cst_53 = arith.constant dense<0.000000e+00> : vector<2x128xf32>
    %74 = tpu.matmul %73, %37, %cst_53 {dimension_numbers = #tpu.dot_dimension_numbers<[1], [0], [0], [1], [0, 0, 1, 1], [], []>} : vector<2x80xf32>, vector<80x128xf32>, vector<2x128xf32> -> vector<2x128xf32>
    %75 = vector.broadcast %38 : vector<1x128xf32> to vector<2x128xf32>
    %76 = arith.addf %74, %75 : vector<2x128xf32>
    %77 = arith.negf %76 : vector<2x128xf32>
    %78 = math.exp %77 : vector<2x128xf32>
    %cst_54 = arith.constant 1.000000e+00 : f32
    %79 = vector.broadcast %cst_54 : f32 to vector<2x128xf32>
    %80 = arith.addf %79, %78 : vector<2x128xf32>
    %81 = arith.divf %79, %80 : vector<2x128xf32>
    %82 = math.tanh %76 : vector<2x128xf32>
    %83 = vector.extract_strided_slice %81 {offsets = [0, 0], sizes = [2, 32], strides = [1, 1]} : vector<2x128xf32> to vector<2x32xf32>
    %84 = vector.extract_strided_slice %81 {offsets = [0, 32], sizes = [2, 32], strides = [1, 1]} : vector<2x128xf32> to vector<2x32xf32>
    %85 = vector.extract_strided_slice %82 {offsets = [0, 64], sizes = [2, 32], strides = [1, 1]} : vector<2x128xf32> to vector<2x32xf32>
    %86 = vector.extract_strided_slice %81 {offsets = [0, 96], sizes = [2, 32], strides = [1, 1]} : vector<2x128xf32> to vector<2x32xf32>
    %87 = arith.mulf %84, %33 : vector<2x32xf32>
    %88 = arith.mulf %83, %85 : vector<2x32xf32>
    %89 = arith.addf %87, %88 : vector<2x32xf32>
    %90 = math.tanh %89 : vector<2x32xf32>
    %91 = arith.mulf %86, %90 : vector<2x32xf32>
    %cst_55 = arith.constant dense<0.000000e+00> : vector<2x128xf32>
    %92 = tpu.matmul %91, %39, %cst_55 {dimension_numbers = #tpu.dot_dimension_numbers<[1], [0], [0], [1], [0, 0, 1, 1], [], []>} : vector<2x32xf32>, vector<32x128xf32>, vector<2x128xf32> -> vector<2x128xf32>
    %93 = vector.broadcast %40 : vector<1x128xf32> to vector<2x128xf32>
    %94 = arith.addf %92, %93 : vector<2x128xf32>
    %95 = vector.shape_cast %94 : vector<2x128xf32> to vector<2x1x128xf32>
    %c0_56 = arith.constant 0 : index
    %c0_57 = arith.constant 0 : index
    %c0_58 = arith.constant 0 : index
    %96 = vector.load %arg19[%c0_56, %c0_57, %c0_58] : memref<2x8x128xf32, #tpu.memory_space<vmem>>, vector<2x1x128xf32>
    tpu.vector_store %arg19[%c0_56, %c0_57, %c0_58], %95 {strides = array<i32>} : memref<2x8x128xf32, #tpu.memory_space<vmem>>, vector<2x1x128xf32>,
    %cst_59 = arith.constant dense<0.000000e+00> : vector<2x32xf32>
    %97 = tpu.matmul %91, %34, %cst_59 {dimension_numbers = #tpu.dot_dimension_numbers<[1], [0], [0], [1], [0, 0, 1, 1], [], []>} : vector<2x32xf32>, vector<32x32xf32>, vector<2x32xf32> -> vector<2x32xf32>
    %98 = vector.broadcast %35 : vector<1x32xf32> to vector<2x32xf32>
    %99 = arith.addf %97, %98 : vector<2x32xf32>
    %100 = vector.shape_cast %99 : vector<2x32xf32> to vector<2x1x32xf32>
    %101 = vector.broadcast %100 : vector<2x1x32xf32> to vector<2x16x32xf32>
    %102 = arith.addf %20, %101 : vector<2x16x32xf32>
    %cst_60 = arith.constant 0.000000e+00 : f32
    %103 = vector.broadcast %cst_60 : f32 to vector<2x16x32xf32>
    %104 = arith.maximumf %102, %103 : vector<2x16x32xf32>
    %105 = vector.shape_cast %104 : vector<2x16x32xf32> to vector<32x32xf32>
    %cst_61 = arith.constant dense<0.000000e+00> : vector<32x1xf32>
    %106 = tpu.matmul %105, %36, %cst_61 {dimension_numbers = #tpu.dot_dimension_numbers<[1], [0], [0], [1], [0, 0, 1, 1], [], []>} : vector<32x32xf32>, vector<32x1xf32>, vector<32x1xf32> -> vector<32x1xf32>
    %107 = vector.shape_cast %106 : vector<32x1xf32> to vector<2x16x1xf32>
    %cst_62 = arith.constant dense<0xFF800000> : vector<2x1xf32>
    %108 = vector.multi_reduction <maximumf>, %107, %cst_62 [1] : vector<2x16x1xf32> to vector<2x1xf32>
    %cst_63 = arith.constant 0xFF800000 : f32
    %109 = vector.broadcast %cst_63 : f32 to vector<2x1xf32>
    %110 = arith.maximumf %109, %108 : vector<2x1xf32>
    %111 = vector.shape_cast %110 : vector<2x1xf32> to vector<2x1x1xf32>
    %112 = vector.broadcast %111 : vector<2x1x1xf32> to vector<2x16x1xf32>
    %113 = arith.subf %107, %112 : vector<2x16x1xf32>
    %114 = math.exp %113 : vector<2x16x1xf32>
    %cst_64 = arith.constant dense<0.000000e+00> : vector<2x1xf32>
    %115 = vector.multi_reduction <add>, %114, %cst_64 [1] : vector<2x16x1xf32> to vector<2x1xf32>
    %116 = vector.shape_cast %115 : vector<2x1xf32> to vector<2x1x1xf32>
    %117 = vector.broadcast %116 : vector<2x1x1xf32> to vector<2x16x1xf32>
    %118 = arith.divf %114, %117 : vector<2x16x1xf32>
    %119 = vector.broadcast %118 : vector<2x16x1xf32> to vector<2x16x32xf32>
    %120 = arith.mulf %119, %14 : vector<2x16x32xf32>
    %cst_65 = arith.constant dense<0.000000e+00> : vector<2x32xf32>
    %121 = vector.multi_reduction <add>, %120, %cst_65 [1] : vector<2x16x32xf32> to vector<2x32xf32>
    %c0_66 = arith.constant 0 : index
    %c1_67 = arith.constant 1 : index
    %122 = memref.load %arg0[%c0_66, %c1_67] : memref<2x8xi32, #tpu.memory_space<smem>>
    %123 = arith.index_cast %122 : i32 to index
    %c0_68 = arith.constant 0 : index
    %124 = vector.load %arg2[%123, %c0_68] : memref<48x16xf32, #tpu.memory_space<vmem>>, vector<1x16xf32>
    %c1_69 = arith.constant 1 : index
    %c1_70 = arith.constant 1 : index
    %125 = memref.load %arg0[%c1_69, %c1_70] : memref<2x8xi32, #tpu.memory_space<smem>>
    %126 = arith.index_cast %125 : i32 to index
    %c0_71 = arith.constant 0 : index
    %127 = vector.load %arg2[%126, %c0_71] : memref<48x16xf32, #tpu.memory_space<vmem>>, vector<1x16xf32>
    %128 = tpu.concatenate %124, %127 in 0 : vector<1x16xf32>, vector<1x16xf32> -> vector<2x16xf32>
    %129 = tpu.concatenate %128, %121, %91 in 1 : vector<2x16xf32>, vector<2x32xf32>, vector<2x32xf32> -> vector<2x80xf32>
    %cst_72 = arith.constant dense<0.000000e+00> : vector<2x128xf32>
    %130 = tpu.matmul %129, %37, %cst_72 {dimension_numbers = #tpu.dot_dimension_numbers<[1], [0], [0], [1], [0, 0, 1, 1], [], []>} : vector<2x80xf32>, vector<80x128xf32>, vector<2x128xf32> -> vector<2x128xf32>
    %131 = vector.broadcast %38 : vector<1x128xf32> to vector<2x128xf32>
    %132 = arith.addf %130, %131 : vector<2x128xf32>
    %133 = arith.negf %132 : vector<2x128xf32>
    %134 = math.exp %133 : vector<2x128xf32>
    %cst_73 = arith.constant 1.000000e+00 : f32
    %135 = vector.broadcast %cst_73 : f32 to vector<2x128xf32>
    %136 = arith.addf %135, %134 : vector<2x128xf32>
    %137 = arith.divf %135, %136 : vector<2x128xf32>
    %138 = math.tanh %132 : vector<2x128xf32>
    %139 = vector.extract_strided_slice %137 {offsets = [0, 0], sizes = [2, 32], strides = [1, 1]} : vector<2x128xf32> to vector<2x32xf32>
    %140 = vector.extract_strided_slice %137 {offsets = [0, 32], sizes = [2, 32], strides = [1, 1]} : vector<2x128xf32> to vector<2x32xf32>
    %141 = vector.extract_strided_slice %138 {offsets = [0, 64], sizes = [2, 32], strides = [1, 1]} : vector<2x128xf32> to vector<2x32xf32>
    %142 = vector.extract_strided_slice %137 {offsets = [0, 96], sizes = [2, 32], strides = [1, 1]} : vector<2x128xf32> to vector<2x32xf32>
    %143 = arith.mulf %140, %89 : vector<2x32xf32>
    %144 = arith.mulf %139, %141 : vector<2x32xf32>
    %145 = arith.addf %143, %144 : vector<2x32xf32>
    %146 = math.tanh %145 : vector<2x32xf32>
    %147 = arith.mulf %142, %146 : vector<2x32xf32>
    %cst_74 = arith.constant dense<0.000000e+00> : vector<2x128xf32>
    %148 = tpu.matmul %147, %39, %cst_74 {dimension_numbers = #tpu.dot_dimension_numbers<[1], [0], [0], [1], [0, 0, 1, 1], [], []>} : vector<2x32xf32>, vector<32x128xf32>, vector<2x128xf32> -> vector<2x128xf32>
    %149 = vector.broadcast %40 : vector<1x128xf32> to vector<2x128xf32>
    %150 = arith.addf %148, %149 : vector<2x128xf32>
    %151 = vector.shape_cast %150 : vector<2x128xf32> to vector<2x1x128xf32>
    %c0_75 = arith.constant 0 : index
    %c1_76 = arith.constant 1 : index
    %c0_77 = arith.constant 0 : index
    %152 = vector.load %arg19[%c0_75, %c1_76, %c0_77] : memref<2x8x128xf32, #tpu.memory_space<vmem>>, vector<2x1x128xf32>
    tpu.vector_store %arg19[%c0_75, %c1_76, %c0_77], %151 {strides = array<i32>} : memref<2x8x128xf32, #tpu.memory_space<vmem>>, vector<2x1x128xf32>,
    %cst_78 = arith.constant dense<0.000000e+00> : vector<2x32xf32>
    %153 = tpu.matmul %147, %34, %cst_78 {dimension_numbers = #tpu.dot_dimension_numbers<[1], [0], [0], [1], [0, 0, 1, 1], [], []>} : vector<2x32xf32>, vector<32x32xf32>, vector<2x32xf32> -> vector<2x32xf32>
    %154 = vector.broadcast %35 : vector<1x32xf32> to vector<2x32xf32>
    %155 = arith.addf %153, %154 : vector<2x32xf32>
    %156 = vector.shape_cast %155 : vector<2x32xf32> to vector<2x1x32xf32>
    %157 = vector.broadcast %156 : vector<2x1x32xf32> to vector<2x16x32xf32>
    %158 = arith.addf %20, %157 : vector<2x16x32xf32>
    %cst_79 = arith.constant 0.000000e+00 : f32
    %159 = vector.broadcast %cst_79 : f32 to vector<2x16x32xf32>
    %160 = arith.maximumf %158, %159 : vector<2x16x32xf32>
    %161 = vector.shape_cast %160 : vector<2x16x32xf32> to vector<32x32xf32>
    %cst_80 = arith.constant dense<0.000000e+00> : vector<32x1xf32>
    %162 = tpu.matmul %161, %36, %cst_80 {dimension_numbers = #tpu.dot_dimension_numbers<[1], [0], [0], [1], [0, 0, 1, 1], [], []>} : vector<32x32xf32>, vector<32x1xf32>, vector<32x1xf32> -> vector<32x1xf32>
    %163 = vector.shape_cast %162 : vector<32x1xf32> to vector<2x16x1xf32>
    %cst_81 = arith.constant dense<0xFF800000> : vector<2x1xf32>
    %164 = vector.multi_reduction <maximumf>, %163, %cst_81 [1] : vector<2x16x1xf32> to vector<2x1xf32>
    %cst_82 = arith.constant 0xFF800000 : f32
    %165 = vector.broadcast %cst_82 : f32 to vector<2x1xf32>
    %166 = arith.maximumf %165, %164 : vector<2x1xf32>
    %167 = vector.shape_cast %166 : vector<2x1xf32> to vector<2x1x1xf32>
    %168 = vector.broadcast %167 : vector<2x1x1xf32> to vector<2x16x1xf32>
    %169 = arith.subf %163, %168 : vector<2x16x1xf32>
    %170 = math.exp %169 : vector<2x16x1xf32>
    %cst_83 = arith.constant dense<0.000000e+00> : vector<2x1xf32>
    %171 = vector.multi_reduction <add>, %170, %cst_83 [1] : vector<2x16x1xf32> to vector<2x1xf32>
    %172 = vector.shape_cast %171 : vector<2x1xf32> to vector<2x1x1xf32>
    %173 = vector.broadcast %172 : vector<2x1x1xf32> to vector<2x16x1xf32>
    %174 = arith.divf %170, %173 : vector<2x16x1xf32>
    %175 = vector.broadcast %174 : vector<2x16x1xf32> to vector<2x16x32xf32>
    %176 = arith.mulf %175, %14 : vector<2x16x32xf32>
    %cst_84 = arith.constant dense<0.000000e+00> : vector<2x32xf32>
    %177 = vector.multi_reduction <add>, %176, %cst_84 [1] : vector<2x16x32xf32> to vector<2x32xf32>
    %c0_85 = arith.constant 0 : index
    %c2 = arith.constant 2 : index
    %178 = memref.load %arg0[%c0_85, %c2] : memref<2x8xi32, #tpu.memory_space<smem>>
    %179 = arith.index_cast %178 : i32 to index
    %c0_86 = arith.constant 0 : index
    %180 = vector.load %arg2[%179, %c0_86] : memref<48x16xf32, #tpu.memory_space<vmem>>, vector<1x16xf32>
    %c1_87 = arith.constant 1 : index
    %c2_88 = arith.constant 2 : index
    %181 = memref.load %arg0[%c1_87, %c2_88] : memref<2x8xi32, #tpu.memory_space<smem>>
    %182 = arith.index_cast %181 : i32 to index
    %c0_89 = arith.constant 0 : index
    %183 = vector.load %arg2[%182, %c0_89] : memref<48x16xf32, #tpu.memory_space<vmem>>, vector<1x16xf32>
    %184 = tpu.concatenate %180, %183 in 0 : vector<1x16xf32>, vector<1x16xf32> -> vector<2x16xf32>
    %185 = tpu.concatenate %184, %177, %147 in 1 : vector<2x16xf32>, vector<2x32xf32>, vector<2x32xf32> -> vector<2x80xf32>
    %cst_90 = arith.constant dense<0.000000e+00> : vector<2x128xf32>
    %186 = tpu.matmul %185, %37, %cst_90 {dimension_numbers = #tpu.dot_dimension_numbers<[1], [0], [0], [1], [0, 0, 1, 1], [], []>} : vector<2x80xf32>, vector<80x128xf32>, vector<2x128xf32> -> vector<2x128xf32>
    %187 = vector.broadcast %38 : vector<1x128xf32> to vector<2x128xf32>
    %188 = arith.addf %186, %187 : vector<2x128xf32>
    %189 = arith.negf %188 : vector<2x128xf32>
    %190 = math.exp %189 : vector<2x128xf32>
    %cst_91 = arith.constant 1.000000e+00 : f32
    %191 = vector.broadcast %cst_91 : f32 to vector<2x128xf32>
    %192 = arith.addf %191, %190 : vector<2x128xf32>
    %193 = arith.divf %191, %192 : vector<2x128xf32>
    %194 = math.tanh %188 : vector<2x128xf32>
    %195 = vector.extract_strided_slice %193 {offsets = [0, 0], sizes = [2, 32], strides = [1, 1]} : vector<2x128xf32> to vector<2x32xf32>
    %196 = vector.extract_strided_slice %193 {offsets = [0, 32], sizes = [2, 32], strides = [1, 1]} : vector<2x128xf32> to vector<2x32xf32>
    %197 = vector.extract_strided_slice %194 {offsets = [0, 64], sizes = [2, 32], strides = [1, 1]} : vector<2x128xf32> to vector<2x32xf32>
    %198 = vector.extract_strided_slice %193 {offsets = [0, 96], sizes = [2, 32], strides = [1, 1]} : vector<2x128xf32> to vector<2x32xf32>
    %199 = arith.mulf %196, %145 : vector<2x32xf32>
    %200 = arith.mulf %195, %197 : vector<2x32xf32>
    %201 = arith.addf %199, %200 : vector<2x32xf32>
    %202 = math.tanh %201 : vector<2x32xf32>
    %203 = arith.mulf %198, %202 : vector<2x32xf32>
    %cst_92 = arith.constant dense<0.000000e+00> : vector<2x128xf32>
    %204 = tpu.matmul %203, %39, %cst_92 {dimension_numbers = #tpu.dot_dimension_numbers<[1], [0], [0], [1], [0, 0, 1, 1], [], []>} : vector<2x32xf32>, vector<32x128xf32>, vector<2x128xf32> -> vector<2x128xf32>
    %205 = vector.broadcast %40 : vector<1x128xf32> to vector<2x128xf32>
    %206 = arith.addf %204, %205 : vector<2x128xf32>
    %207 = vector.shape_cast %206 : vector<2x128xf32> to vector<2x1x128xf32>
    %c0_93 = arith.constant 0 : index
    %c2_94 = arith.constant 2 : index
    %c0_95 = arith.constant 0 : index
    %208 = vector.load %arg19[%c0_93, %c2_94, %c0_95] : memref<2x8x128xf32, #tpu.memory_space<vmem>>, vector<2x1x128xf32>
    tpu.vector_store %arg19[%c0_93, %c2_94, %c0_95], %207 {strides = array<i32>} : memref<2x8x128xf32, #tpu.memory_space<vmem>>, vector<2x1x128xf32>,
    %cst_96 = arith.constant dense<0.000000e+00> : vector<2x32xf32>
    %209 = tpu.matmul %203, %34, %cst_96 {dimension_numbers = #tpu.dot_dimension_numbers<[1], [0], [0], [1], [0, 0, 1, 1], [], []>} : vector<2x32xf32>, vector<32x32xf32>, vector<2x32xf32> -> vector<2x32xf32>
    %210 = vector.broadcast %35 : vector<1x32xf32> to vector<2x32xf32>
    %211 = arith.addf %209, %210 : vector<2x32xf32>
    %212 = vector.shape_cast %211 : vector<2x32xf32> to vector<2x1x32xf32>
    %213 = vector.broadcast %212 : vector<2x1x32xf32> to vector<2x16x32xf32>
    %214 = arith.addf %20, %213 : vector<2x16x32xf32>
    %cst_97 = arith.constant 0.000000e+00 : f32
    %215 = vector.broadcast %cst_97 : f32 to vector<2x16x32xf32>
    %216 = arith.maximumf %214, %215 : vector<2x16x32xf32>
    %217 = vector.shape_cast %216 : vector<2x16x32xf32> to vector<32x32xf32>
    %cst_98 = arith.constant dense<0.000000e+00> : vector<32x1xf32>
    %218 = tpu.matmul %217, %36, %cst_98 {dimension_numbers = #tpu.dot_dimension_numbers<[1], [0], [0], [1], [0, 0, 1, 1], [], []>} : vector<32x32xf32>, vector<32x1xf32>, vector<32x1xf32> -> vector<32x1xf32>
    %219 = vector.shape_cast %218 : vector<32x1xf32> to vector<2x16x1xf32>
    %cst_99 = arith.constant dense<0xFF800000> : vector<2x1xf32>
    %220 = vector.multi_reduction <maximumf>, %219, %cst_99 [1] : vector<2x16x1xf32> to vector<2x1xf32>
    %cst_100 = arith.constant 0xFF800000 : f32
    %221 = vector.broadcast %cst_100 : f32 to vector<2x1xf32>
    %222 = arith.maximumf %221, %220 : vector<2x1xf32>
    %223 = vector.shape_cast %222 : vector<2x1xf32> to vector<2x1x1xf32>
    %224 = vector.broadcast %223 : vector<2x1x1xf32> to vector<2x16x1xf32>
    %225 = arith.subf %219, %224 : vector<2x16x1xf32>
    %226 = math.exp %225 : vector<2x16x1xf32>
    %cst_101 = arith.constant dense<0.000000e+00> : vector<2x1xf32>
    %227 = vector.multi_reduction <add>, %226, %cst_101 [1] : vector<2x16x1xf32> to vector<2x1xf32>
    %228 = vector.shape_cast %227 : vector<2x1xf32> to vector<2x1x1xf32>
    %229 = vector.broadcast %228 : vector<2x1x1xf32> to vector<2x16x1xf32>
    %230 = arith.divf %226, %229 : vector<2x16x1xf32>
    %231 = vector.broadcast %230 : vector<2x16x1xf32> to vector<2x16x32xf32>
    %232 = arith.mulf %231, %14 : vector<2x16x32xf32>
    %cst_102 = arith.constant dense<0.000000e+00> : vector<2x32xf32>
    %233 = vector.multi_reduction <add>, %232, %cst_102 [1] : vector<2x16x32xf32> to vector<2x32xf32>
    %c0_103 = arith.constant 0 : index
    %c3 = arith.constant 3 : index
    %234 = memref.load %arg0[%c0_103, %c3] : memref<2x8xi32, #tpu.memory_space<smem>>
    %235 = arith.index_cast %234 : i32 to index
    %c0_104 = arith.constant 0 : index
    %236 = vector.load %arg2[%235, %c0_104] : memref<48x16xf32, #tpu.memory_space<vmem>>, vector<1x16xf32>
    %c1_105 = arith.constant 1 : index
    %c3_106 = arith.constant 3 : index
    %237 = memref.load %arg0[%c1_105, %c3_106] : memref<2x8xi32, #tpu.memory_space<smem>>
    %238 = arith.index_cast %237 : i32 to index
    %c0_107 = arith.constant 0 : index
    %239 = vector.load %arg2[%238, %c0_107] : memref<48x16xf32, #tpu.memory_space<vmem>>, vector<1x16xf32>
    %240 = tpu.concatenate %236, %239 in 0 : vector<1x16xf32>, vector<1x16xf32> -> vector<2x16xf32>
    %241 = tpu.concatenate %240, %233, %203 in 1 : vector<2x16xf32>, vector<2x32xf32>, vector<2x32xf32> -> vector<2x80xf32>
    %cst_108 = arith.constant dense<0.000000e+00> : vector<2x128xf32>
    %242 = tpu.matmul %241, %37, %cst_108 {dimension_numbers = #tpu.dot_dimension_numbers<[1], [0], [0], [1], [0, 0, 1, 1], [], []>} : vector<2x80xf32>, vector<80x128xf32>, vector<2x128xf32> -> vector<2x128xf32>
    %243 = vector.broadcast %38 : vector<1x128xf32> to vector<2x128xf32>
    %244 = arith.addf %242, %243 : vector<2x128xf32>
    %245 = arith.negf %244 : vector<2x128xf32>
    %246 = math.exp %245 : vector<2x128xf32>
    %cst_109 = arith.constant 1.000000e+00 : f32
    %247 = vector.broadcast %cst_109 : f32 to vector<2x128xf32>
    %248 = arith.addf %247, %246 : vector<2x128xf32>
    %249 = arith.divf %247, %248 : vector<2x128xf32>
    %250 = math.tanh %244 : vector<2x128xf32>
    %251 = vector.extract_strided_slice %249 {offsets = [0, 0], sizes = [2, 32], strides = [1, 1]} : vector<2x128xf32> to vector<2x32xf32>
    %252 = vector.extract_strided_slice %249 {offsets = [0, 32], sizes = [2, 32], strides = [1, 1]} : vector<2x128xf32> to vector<2x32xf32>
    %253 = vector.extract_strided_slice %250 {offsets = [0, 64], sizes = [2, 32], strides = [1, 1]} : vector<2x128xf32> to vector<2x32xf32>
    %254 = vector.extract_strided_slice %249 {offsets = [0, 96], sizes = [2, 32], strides = [1, 1]} : vector<2x128xf32> to vector<2x32xf32>
    %255 = arith.mulf %252, %201 : vector<2x32xf32>
    %256 = arith.mulf %251, %253 : vector<2x32xf32>
    %257 = arith.addf %255, %256 : vector<2x32xf32>
    %258 = math.tanh %257 : vector<2x32xf32>
    %259 = arith.mulf %254, %258 : vector<2x32xf32>
    %cst_110 = arith.constant dense<0.000000e+00> : vector<2x128xf32>
    %260 = tpu.matmul %259, %39, %cst_110 {dimension_numbers = #tpu.dot_dimension_numbers<[1], [0], [0], [1], [0, 0, 1, 1], [], []>} : vector<2x32xf32>, vector<32x128xf32>, vector<2x128xf32> -> vector<2x128xf32>
    %261 = vector.broadcast %40 : vector<1x128xf32> to vector<2x128xf32>
    %262 = arith.addf %260, %261 : vector<2x128xf32>
    %263 = vector.shape_cast %262 : vector<2x128xf32> to vector<2x1x128xf32>
    %c0_111 = arith.constant 0 : index
    %c3_112 = arith.constant 3 : index
    %c0_113 = arith.constant 0 : index
    %264 = vector.load %arg19[%c0_111, %c3_112, %c0_113] : memref<2x8x128xf32, #tpu.memory_space<vmem>>, vector<2x1x128xf32>
    tpu.vector_store %arg19[%c0_111, %c3_112, %c0_113], %263 {strides = array<i32>} : memref<2x8x128xf32, #tpu.memory_space<vmem>>, vector<2x1x128xf32>,
    %cst_114 = arith.constant dense<0.000000e+00> : vector<2x32xf32>
    %265 = tpu.matmul %259, %34, %cst_114 {dimension_numbers = #tpu.dot_dimension_numbers<[1], [0], [0], [1], [0, 0, 1, 1], [], []>} : vector<2x32xf32>, vector<32x32xf32>, vector<2x32xf32> -> vector<2x32xf32>
    %266 = vector.broadcast %35 : vector<1x32xf32> to vector<2x32xf32>
    %267 = arith.addf %265, %266 : vector<2x32xf32>
    %268 = vector.shape_cast %267 : vector<2x32xf32> to vector<2x1x32xf32>
    %269 = vector.broadcast %268 : vector<2x1x32xf32> to vector<2x16x32xf32>
    %270 = arith.addf %20, %269 : vector<2x16x32xf32>
    %cst_115 = arith.constant 0.000000e+00 : f32
    %271 = vector.broadcast %cst_115 : f32 to vector<2x16x32xf32>
    %272 = arith.maximumf %270, %271 : vector<2x16x32xf32>
    %273 = vector.shape_cast %272 : vector<2x16x32xf32> to vector<32x32xf32>
    %cst_116 = arith.constant dense<0.000000e+00> : vector<32x1xf32>
    %274 = tpu.matmul %273, %36, %cst_116 {dimension_numbers = #tpu.dot_dimension_numbers<[1], [0], [0], [1], [0, 0, 1, 1], [], []>} : vector<32x32xf32>, vector<32x1xf32>, vector<32x1xf32> -> vector<32x1xf32>
    %275 = vector.shape_cast %274 : vector<32x1xf32> to vector<2x16x1xf32>
    %cst_117 = arith.constant dense<0xFF800000> : vector<2x1xf32>
    %276 = vector.multi_reduction <maximumf>, %275, %cst_117 [1] : vector<2x16x1xf32> to vector<2x1xf32>
    %cst_118 = arith.constant 0xFF800000 : f32
    %277 = vector.broadcast %cst_118 : f32 to vector<2x1xf32>
    %278 = arith.maximumf %277, %276 : vector<2x1xf32>
    %279 = vector.shape_cast %278 : vector<2x1xf32> to vector<2x1x1xf32>
    %280 = vector.broadcast %279 : vector<2x1x1xf32> to vector<2x16x1xf32>
    %281 = arith.subf %275, %280 : vector<2x16x1xf32>
    %282 = math.exp %281 : vector<2x16x1xf32>
    %cst_119 = arith.constant dense<0.000000e+00> : vector<2x1xf32>
    %283 = vector.multi_reduction <add>, %282, %cst_119 [1] : vector<2x16x1xf32> to vector<2x1xf32>
    %284 = vector.shape_cast %283 : vector<2x1xf32> to vector<2x1x1xf32>
    %285 = vector.broadcast %284 : vector<2x1x1xf32> to vector<2x16x1xf32>
    %286 = arith.divf %282, %285 : vector<2x16x1xf32>
    %287 = vector.broadcast %286 : vector<2x16x1xf32> to vector<2x16x32xf32>
    %288 = arith.mulf %287, %14 : vector<2x16x32xf32>
    %cst_120 = arith.constant dense<0.000000e+00> : vector<2x32xf32>
    %289 = vector.multi_reduction <add>, %288, %cst_120 [1] : vector<2x16x32xf32> to vector<2x32xf32>
    %c0_121 = arith.constant 0 : index
    %c4 = arith.constant 4 : index
    %290 = memref.load %arg0[%c0_121, %c4] : memref<2x8xi32, #tpu.memory_space<smem>>
    %291 = arith.index_cast %290 : i32 to index
    %c0_122 = arith.constant 0 : index
    %292 = vector.load %arg2[%291, %c0_122] : memref<48x16xf32, #tpu.memory_space<vmem>>, vector<1x16xf32>
    %c1_123 = arith.constant 1 : index
    %c4_124 = arith.constant 4 : index
    %293 = memref.load %arg0[%c1_123, %c4_124] : memref<2x8xi32, #tpu.memory_space<smem>>
    %294 = arith.index_cast %293 : i32 to index
    %c0_125 = arith.constant 0 : index
    %295 = vector.load %arg2[%294, %c0_125] : memref<48x16xf32, #tpu.memory_space<vmem>>, vector<1x16xf32>
    %296 = tpu.concatenate %292, %295 in 0 : vector<1x16xf32>, vector<1x16xf32> -> vector<2x16xf32>
    %297 = tpu.concatenate %296, %289, %259 in 1 : vector<2x16xf32>, vector<2x32xf32>, vector<2x32xf32> -> vector<2x80xf32>
    %cst_126 = arith.constant dense<0.000000e+00> : vector<2x128xf32>
    %298 = tpu.matmul %297, %37, %cst_126 {dimension_numbers = #tpu.dot_dimension_numbers<[1], [0], [0], [1], [0, 0, 1, 1], [], []>} : vector<2x80xf32>, vector<80x128xf32>, vector<2x128xf32> -> vector<2x128xf32>
    %299 = vector.broadcast %38 : vector<1x128xf32> to vector<2x128xf32>
    %300 = arith.addf %298, %299 : vector<2x128xf32>
    %301 = arith.negf %300 : vector<2x128xf32>
    %302 = math.exp %301 : vector<2x128xf32>
    %cst_127 = arith.constant 1.000000e+00 : f32
    %303 = vector.broadcast %cst_127 : f32 to vector<2x128xf32>
    %304 = arith.addf %303, %302 : vector<2x128xf32>
    %305 = arith.divf %303, %304 : vector<2x128xf32>
    %306 = math.tanh %300 : vector<2x128xf32>
    %307 = vector.extract_strided_slice %305 {offsets = [0, 0], sizes = [2, 32], strides = [1, 1]} : vector<2x128xf32> to vector<2x32xf32>
    %308 = vector.extract_strided_slice %305 {offsets = [0, 32], sizes = [2, 32], strides = [1, 1]} : vector<2x128xf32> to vector<2x32xf32>
    %309 = vector.extract_strided_slice %306 {offsets = [0, 64], sizes = [2, 32], strides = [1, 1]} : vector<2x128xf32> to vector<2x32xf32>
    %310 = vector.extract_strided_slice %305 {offsets = [0, 96], sizes = [2, 32], strides = [1, 1]} : vector<2x128xf32> to vector<2x32xf32>
    %311 = arith.mulf %308, %257 : vector<2x32xf32>
    %312 = arith.mulf %307, %309 : vector<2x32xf32>
    %313 = arith.addf %311, %312 : vector<2x32xf32>
    %314 = math.tanh %313 : vector<2x32xf32>
    %315 = arith.mulf %310, %314 : vector<2x32xf32>
    %cst_128 = arith.constant dense<0.000000e+00> : vector<2x128xf32>
    %316 = tpu.matmul %315, %39, %cst_128 {dimension_numbers = #tpu.dot_dimension_numbers<[1], [0], [0], [1], [0, 0, 1, 1], [], []>} : vector<2x32xf32>, vector<32x128xf32>, vector<2x128xf32> -> vector<2x128xf32>
    %317 = vector.broadcast %40 : vector<1x128xf32> to vector<2x128xf32>
    %318 = arith.addf %316, %317 : vector<2x128xf32>
    %319 = vector.shape_cast %318 : vector<2x128xf32> to vector<2x1x128xf32>
    %c0_129 = arith.constant 0 : index
    %c4_130 = arith.constant 4 : index
    %c0_131 = arith.constant 0 : index
    %320 = vector.load %arg19[%c0_129, %c4_130, %c0_131] : memref<2x8x128xf32, #tpu.memory_space<vmem>>, vector<2x1x128xf32>
    tpu.vector_store %arg19[%c0_129, %c4_130, %c0_131], %319 {strides = array<i32>} : memref<2x8x128xf32, #tpu.memory_space<vmem>>, vector<2x1x128xf32>,
    %cst_132 = arith.constant dense<0.000000e+00> : vector<2x32xf32>
    %321 = tpu.matmul %315, %34, %cst_132 {dimension_numbers = #tpu.dot_dimension_numbers<[1], [0], [0], [1], [0, 0, 1, 1], [], []>} : vector<2x32xf32>, vector<32x32xf32>, vector<2x32xf32> -> vector<2x32xf32>
    %322 = vector.broadcast %35 : vector<1x32xf32> to vector<2x32xf32>
    %323 = arith.addf %321, %322 : vector<2x32xf32>
    %324 = vector.shape_cast %323 : vector<2x32xf32> to vector<2x1x32xf32>
    %325 = vector.broadcast %324 : vector<2x1x32xf32> to vector<2x16x32xf32>
    %326 = arith.addf %20, %325 : vector<2x16x32xf32>
    %cst_133 = arith.constant 0.000000e+00 : f32
    %327 = vector.broadcast %cst_133 : f32 to vector<2x16x32xf32>
    %328 = arith.maximumf %326, %327 : vector<2x16x32xf32>
    %329 = vector.shape_cast %328 : vector<2x16x32xf32> to vector<32x32xf32>
    %cst_134 = arith.constant dense<0.000000e+00> : vector<32x1xf32>
    %330 = tpu.matmul %329, %36, %cst_134 {dimension_numbers = #tpu.dot_dimension_numbers<[1], [0], [0], [1], [0, 0, 1, 1], [], []>} : vector<32x32xf32>, vector<32x1xf32>, vector<32x1xf32> -> vector<32x1xf32>
    %331 = vector.shape_cast %330 : vector<32x1xf32> to vector<2x16x1xf32>
    %cst_135 = arith.constant dense<0xFF800000> : vector<2x1xf32>
    %332 = vector.multi_reduction <maximumf>, %331, %cst_135 [1] : vector<2x16x1xf32> to vector<2x1xf32>
    %cst_136 = arith.constant 0xFF800000 : f32
    %333 = vector.broadcast %cst_136 : f32 to vector<2x1xf32>
    %334 = arith.maximumf %333, %332 : vector<2x1xf32>
    %335 = vector.shape_cast %334 : vector<2x1xf32> to vector<2x1x1xf32>
    %336 = vector.broadcast %335 : vector<2x1x1xf32> to vector<2x16x1xf32>
    %337 = arith.subf %331, %336 : vector<2x16x1xf32>
    %338 = math.exp %337 : vector<2x16x1xf32>
    %cst_137 = arith.constant dense<0.000000e+00> : vector<2x1xf32>
    %339 = vector.multi_reduction <add>, %338, %cst_137 [1] : vector<2x16x1xf32> to vector<2x1xf32>
    %340 = vector.shape_cast %339 : vector<2x1xf32> to vector<2x1x1xf32>
    %341 = vector.broadcast %340 : vector<2x1x1xf32> to vector<2x16x1xf32>
    %342 = arith.divf %338, %341 : vector<2x16x1xf32>
    %343 = vector.broadcast %342 : vector<2x16x1xf32> to vector<2x16x32xf32>
    %344 = arith.mulf %343, %14 : vector<2x16x32xf32>
    %cst_138 = arith.constant dense<0.000000e+00> : vector<2x32xf32>
    %345 = vector.multi_reduction <add>, %344, %cst_138 [1] : vector<2x16x32xf32> to vector<2x32xf32>
    %c0_139 = arith.constant 0 : index
    %c5 = arith.constant 5 : index
    %346 = memref.load %arg0[%c0_139, %c5] : memref<2x8xi32, #tpu.memory_space<smem>>
    %347 = arith.index_cast %346 : i32 to index
    %c0_140 = arith.constant 0 : index
    %348 = vector.load %arg2[%347, %c0_140] : memref<48x16xf32, #tpu.memory_space<vmem>>, vector<1x16xf32>
    %c1_141 = arith.constant 1 : index
    %c5_142 = arith.constant 5 : index
    %349 = memref.load %arg0[%c1_141, %c5_142] : memref<2x8xi32, #tpu.memory_space<smem>>
    %350 = arith.index_cast %349 : i32 to index
    %c0_143 = arith.constant 0 : index
    %351 = vector.load %arg2[%350, %c0_143] : memref<48x16xf32, #tpu.memory_space<vmem>>, vector<1x16xf32>
    %352 = tpu.concatenate %348, %351 in 0 : vector<1x16xf32>, vector<1x16xf32> -> vector<2x16xf32>
    %353 = tpu.concatenate %352, %345, %315 in 1 : vector<2x16xf32>, vector<2x32xf32>, vector<2x32xf32> -> vector<2x80xf32>
    %cst_144 = arith.constant dense<0.000000e+00> : vector<2x128xf32>
    %354 = tpu.matmul %353, %37, %cst_144 {dimension_numbers = #tpu.dot_dimension_numbers<[1], [0], [0], [1], [0, 0, 1, 1], [], []>} : vector<2x80xf32>, vector<80x128xf32>, vector<2x128xf32> -> vector<2x128xf32>
    %355 = vector.broadcast %38 : vector<1x128xf32> to vector<2x128xf32>
    %356 = arith.addf %354, %355 : vector<2x128xf32>
    %357 = arith.negf %356 : vector<2x128xf32>
    %358 = math.exp %357 : vector<2x128xf32>
    %cst_145 = arith.constant 1.000000e+00 : f32
    %359 = vector.broadcast %cst_145 : f32 to vector<2x128xf32>
    %360 = arith.addf %359, %358 : vector<2x128xf32>
    %361 = arith.divf %359, %360 : vector<2x128xf32>
    %362 = math.tanh %356 : vector<2x128xf32>
    %363 = vector.extract_strided_slice %361 {offsets = [0, 0], sizes = [2, 32], strides = [1, 1]} : vector<2x128xf32> to vector<2x32xf32>
    %364 = vector.extract_strided_slice %361 {offsets = [0, 32], sizes = [2, 32], strides = [1, 1]} : vector<2x128xf32> to vector<2x32xf32>
    %365 = vector.extract_strided_slice %362 {offsets = [0, 64], sizes = [2, 32], strides = [1, 1]} : vector<2x128xf32> to vector<2x32xf32>
    %366 = vector.extract_strided_slice %361 {offsets = [0, 96], sizes = [2, 32], strides = [1, 1]} : vector<2x128xf32> to vector<2x32xf32>
    %367 = arith.mulf %364, %313 : vector<2x32xf32>
    %368 = arith.mulf %363, %365 : vector<2x32xf32>
    %369 = arith.addf %367, %368 : vector<2x32xf32>
    %370 = math.tanh %369 : vector<2x32xf32>
    %371 = arith.mulf %366, %370 : vector<2x32xf32>
    %cst_146 = arith.constant dense<0.000000e+00> : vector<2x128xf32>
    %372 = tpu.matmul %371, %39, %cst_146 {dimension_numbers = #tpu.dot_dimension_numbers<[1], [0], [0], [1], [0, 0, 1, 1], [], []>} : vector<2x32xf32>, vector<32x128xf32>, vector<2x128xf32> -> vector<2x128xf32>
    %373 = vector.broadcast %40 : vector<1x128xf32> to vector<2x128xf32>
    %374 = arith.addf %372, %373 : vector<2x128xf32>
    %375 = vector.shape_cast %374 : vector<2x128xf32> to vector<2x1x128xf32>
    %c0_147 = arith.constant 0 : index
    %c5_148 = arith.constant 5 : index
    %c0_149 = arith.constant 0 : index
    %376 = vector.load %arg19[%c0_147, %c5_148, %c0_149] : memref<2x8x128xf32, #tpu.memory_space<vmem>>, vector<2x1x128xf32>
    tpu.vector_store %arg19[%c0_147, %c5_148, %c0_149], %375 {strides = array<i32>} : memref<2x8x128xf32, #tpu.memory_space<vmem>>, vector<2x1x128xf32>,
    %cst_150 = arith.constant dense<0.000000e+00> : vector<2x32xf32>
    %377 = tpu.matmul %371, %34, %cst_150 {dimension_numbers = #tpu.dot_dimension_numbers<[1], [0], [0], [1], [0, 0, 1, 1], [], []>} : vector<2x32xf32>, vector<32x32xf32>, vector<2x32xf32> -> vector<2x32xf32>
    %378 = vector.broadcast %35 : vector<1x32xf32> to vector<2x32xf32>
    %379 = arith.addf %377, %378 : vector<2x32xf32>
    %380 = vector.shape_cast %379 : vector<2x32xf32> to vector<2x1x32xf32>
    %381 = vector.broadcast %380 : vector<2x1x32xf32> to vector<2x16x32xf32>
    %382 = arith.addf %20, %381 : vector<2x16x32xf32>
    %cst_151 = arith.constant 0.000000e+00 : f32
    %383 = vector.broadcast %cst_151 : f32 to vector<2x16x32xf32>
    %384 = arith.maximumf %382, %383 : vector<2x16x32xf32>
    %385 = vector.shape_cast %384 : vector<2x16x32xf32> to vector<32x32xf32>
    %cst_152 = arith.constant dense<0.000000e+00> : vector<32x1xf32>
    %386 = tpu.matmul %385, %36, %cst_152 {dimension_numbers = #tpu.dot_dimension_numbers<[1], [0], [0], [1], [0, 0, 1, 1], [], []>} : vector<32x32xf32>, vector<32x1xf32>, vector<32x1xf32> -> vector<32x1xf32>
    %387 = vector.shape_cast %386 : vector<32x1xf32> to vector<2x16x1xf32>
    %cst_153 = arith.constant dense<0xFF800000> : vector<2x1xf32>
    %388 = vector.multi_reduction <maximumf>, %387, %cst_153 [1] : vector<2x16x1xf32> to vector<2x1xf32>
    %cst_154 = arith.constant 0xFF800000 : f32
    %389 = vector.broadcast %cst_154 : f32 to vector<2x1xf32>
    %390 = arith.maximumf %389, %388 : vector<2x1xf32>
    %391 = vector.shape_cast %390 : vector<2x1xf32> to vector<2x1x1xf32>
    %392 = vector.broadcast %391 : vector<2x1x1xf32> to vector<2x16x1xf32>
    %393 = arith.subf %387, %392 : vector<2x16x1xf32>
    %394 = math.exp %393 : vector<2x16x1xf32>
    %cst_155 = arith.constant dense<0.000000e+00> : vector<2x1xf32>
    %395 = vector.multi_reduction <add>, %394, %cst_155 [1] : vector<2x16x1xf32> to vector<2x1xf32>
    %396 = vector.shape_cast %395 : vector<2x1xf32> to vector<2x1x1xf32>
    %397 = vector.broadcast %396 : vector<2x1x1xf32> to vector<2x16x1xf32>
    %398 = arith.divf %394, %397 : vector<2x16x1xf32>
    %399 = vector.broadcast %398 : vector<2x16x1xf32> to vector<2x16x32xf32>
    %400 = arith.mulf %399, %14 : vector<2x16x32xf32>
    %cst_156 = arith.constant dense<0.000000e+00> : vector<2x32xf32>
    %401 = vector.multi_reduction <add>, %400, %cst_156 [1] : vector<2x16x32xf32> to vector<2x32xf32>
    %c0_157 = arith.constant 0 : index
    %c6 = arith.constant 6 : index
    %402 = memref.load %arg0[%c0_157, %c6] : memref<2x8xi32, #tpu.memory_space<smem>>
    %403 = arith.index_cast %402 : i32 to index
    %c0_158 = arith.constant 0 : index
    %404 = vector.load %arg2[%403, %c0_158] : memref<48x16xf32, #tpu.memory_space<vmem>>, vector<1x16xf32>
    %c1_159 = arith.constant 1 : index
    %c6_160 = arith.constant 6 : index
    %405 = memref.load %arg0[%c1_159, %c6_160] : memref<2x8xi32, #tpu.memory_space<smem>>
    %406 = arith.index_cast %405 : i32 to index
    %c0_161 = arith.constant 0 : index
    %407 = vector.load %arg2[%406, %c0_161] : memref<48x16xf32, #tpu.memory_space<vmem>>, vector<1x16xf32>
    %408 = tpu.concatenate %404, %407 in 0 : vector<1x16xf32>, vector<1x16xf32> -> vector<2x16xf32>
    %409 = tpu.concatenate %408, %401, %371 in 1 : vector<2x16xf32>, vector<2x32xf32>, vector<2x32xf32> -> vector<2x80xf32>
    %cst_162 = arith.constant dense<0.000000e+00> : vector<2x128xf32>
    %410 = tpu.matmul %409, %37, %cst_162 {dimension_numbers = #tpu.dot_dimension_numbers<[1], [0], [0], [1], [0, 0, 1, 1], [], []>} : vector<2x80xf32>, vector<80x128xf32>, vector<2x128xf32> -> vector<2x128xf32>
    %411 = vector.broadcast %38 : vector<1x128xf32> to vector<2x128xf32>
    %412 = arith.addf %410, %411 : vector<2x128xf32>
    %413 = arith.negf %412 : vector<2x128xf32>
    %414 = math.exp %413 : vector<2x128xf32>
    %cst_163 = arith.constant 1.000000e+00 : f32
    %415 = vector.broadcast %cst_163 : f32 to vector<2x128xf32>
    %416 = arith.addf %415, %414 : vector<2x128xf32>
    %417 = arith.divf %415, %416 : vector<2x128xf32>
    %418 = math.tanh %412 : vector<2x128xf32>
    %419 = vector.extract_strided_slice %417 {offsets = [0, 0], sizes = [2, 32], strides = [1, 1]} : vector<2x128xf32> to vector<2x32xf32>
    %420 = vector.extract_strided_slice %417 {offsets = [0, 32], sizes = [2, 32], strides = [1, 1]} : vector<2x128xf32> to vector<2x32xf32>
    %421 = vector.extract_strided_slice %418 {offsets = [0, 64], sizes = [2, 32], strides = [1, 1]} : vector<2x128xf32> to vector<2x32xf32>
    %422 = vector.extract_strided_slice %417 {offsets = [0, 96], sizes = [2, 32], strides = [1, 1]} : vector<2x128xf32> to vector<2x32xf32>
    %423 = arith.mulf %420, %369 : vector<2x32xf32>
    %424 = arith.mulf %419, %421 : vector<2x32xf32>
    %425 = arith.addf %423, %424 : vector<2x32xf32>
    %426 = math.tanh %425 : vector<2x32xf32>
    %427 = arith.mulf %422, %426 : vector<2x32xf32>
    %cst_164 = arith.constant dense<0.000000e+00> : vector<2x128xf32>
    %428 = tpu.matmul %427, %39, %cst_164 {dimension_numbers = #tpu.dot_dimension_numbers<[1], [0], [0], [1], [0, 0, 1, 1], [], []>} : vector<2x32xf32>, vector<32x128xf32>, vector<2x128xf32> -> vector<2x128xf32>
    %429 = vector.broadcast %40 : vector<1x128xf32> to vector<2x128xf32>
    %430 = arith.addf %428, %429 : vector<2x128xf32>
    %431 = vector.shape_cast %430 : vector<2x128xf32> to vector<2x1x128xf32>
    %c0_165 = arith.constant 0 : index
    %c6_166 = arith.constant 6 : index
    %c0_167 = arith.constant 0 : index
    %432 = vector.load %arg19[%c0_165, %c6_166, %c0_167] : memref<2x8x128xf32, #tpu.memory_space<vmem>>, vector<2x1x128xf32>
    tpu.vector_store %arg19[%c0_165, %c6_166, %c0_167], %431 {strides = array<i32>} : memref<2x8x128xf32, #tpu.memory_space<vmem>>, vector<2x1x128xf32>,
    %cst_168 = arith.constant dense<0.000000e+00> : vector<2x32xf32>
    %433 = tpu.matmul %427, %34, %cst_168 {dimension_numbers = #tpu.dot_dimension_numbers<[1], [0], [0], [1], [0, 0, 1, 1], [], []>} : vector<2x32xf32>, vector<32x32xf32>, vector<2x32xf32> -> vector<2x32xf32>
    %434 = vector.broadcast %35 : vector<1x32xf32> to vector<2x32xf32>
    %435 = arith.addf %433, %434 : vector<2x32xf32>
    %436 = vector.shape_cast %435 : vector<2x32xf32> to vector<2x1x32xf32>
    %437 = vector.broadcast %436 : vector<2x1x32xf32> to vector<2x16x32xf32>
    %438 = arith.addf %20, %437 : vector<2x16x32xf32>
    %cst_169 = arith.constant 0.000000e+00 : f32
    %439 = vector.broadcast %cst_169 : f32 to vector<2x16x32xf32>
    %440 = arith.maximumf %438, %439 : vector<2x16x32xf32>
    %441 = vector.shape_cast %440 : vector<2x16x32xf32> to vector<32x32xf32>
    %cst_170 = arith.constant dense<0.000000e+00> : vector<32x1xf32>
    %442 = tpu.matmul %441, %36, %cst_170 {dimension_numbers = #tpu.dot_dimension_numbers<[1], [0], [0], [1], [0, 0, 1, 1], [], []>} : vector<32x32xf32>, vector<32x1xf32>, vector<32x1xf32> -> vector<32x1xf32>
    %443 = vector.shape_cast %442 : vector<32x1xf32> to vector<2x16x1xf32>
    %cst_171 = arith.constant dense<0xFF800000> : vector<2x1xf32>
    %444 = vector.multi_reduction <maximumf>, %443, %cst_171 [1] : vector<2x16x1xf32> to vector<2x1xf32>
    %cst_172 = arith.constant 0xFF800000 : f32
    %445 = vector.broadcast %cst_172 : f32 to vector<2x1xf32>
    %446 = arith.maximumf %445, %444 : vector<2x1xf32>
    %447 = vector.shape_cast %446 : vector<2x1xf32> to vector<2x1x1xf32>
    %448 = vector.broadcast %447 : vector<2x1x1xf32> to vector<2x16x1xf32>
    %449 = arith.subf %443, %448 : vector<2x16x1xf32>
    %450 = math.exp %449 : vector<2x16x1xf32>
    %cst_173 = arith.constant dense<0.000000e+00> : vector<2x1xf32>
    %451 = vector.multi_reduction <add>, %450, %cst_173 [1] : vector<2x16x1xf32> to vector<2x1xf32>
    %452 = vector.shape_cast %451 : vector<2x1xf32> to vector<2x1x1xf32>
    %453 = vector.broadcast %452 : vector<2x1x1xf32> to vector<2x16x1xf32>
    %454 = arith.divf %450, %453 : vector<2x16x1xf32>
    %455 = vector.broadcast %454 : vector<2x16x1xf32> to vector<2x16x32xf32>
    %456 = arith.mulf %455, %14 : vector<2x16x32xf32>
    %cst_174 = arith.constant dense<0.000000e+00> : vector<2x32xf32>
    %457 = vector.multi_reduction <add>, %456, %cst_174 [1] : vector<2x16x32xf32> to vector<2x32xf32>
    %c0_175 = arith.constant 0 : index
    %c7 = arith.constant 7 : index
    %458 = memref.load %arg0[%c0_175, %c7] : memref<2x8xi32, #tpu.memory_space<smem>>
    %459 = arith.index_cast %458 : i32 to index
    %c0_176 = arith.constant 0 : index
    %460 = vector.load %arg2[%459, %c0_176] : memref<48x16xf32, #tpu.memory_space<vmem>>, vector<1x16xf32>
    %c1_177 = arith.constant 1 : index
    %c7_178 = arith.constant 7 : index
    %461 = memref.load %arg0[%c1_177, %c7_178] : memref<2x8xi32, #tpu.memory_space<smem>>
    %462 = arith.index_cast %461 : i32 to index
    %c0_179 = arith.constant 0 : index
    %463 = vector.load %arg2[%462, %c0_179] : memref<48x16xf32, #tpu.memory_space<vmem>>, vector<1x16xf32>
    %464 = tpu.concatenate %460, %463 in 0 : vector<1x16xf32>, vector<1x16xf32> -> vector<2x16xf32>
    %465 = tpu.concatenate %464, %457, %427 in 1 : vector<2x16xf32>, vector<2x32xf32>, vector<2x32xf32> -> vector<2x80xf32>
    %cst_180 = arith.constant dense<0.000000e+00> : vector<2x128xf32>
    %466 = tpu.matmul %465, %37, %cst_180 {dimension_numbers = #tpu.dot_dimension_numbers<[1], [0], [0], [1], [0, 0, 1, 1], [], []>} : vector<2x80xf32>, vector<80x128xf32>, vector<2x128xf32> -> vector<2x128xf32>
    %467 = vector.broadcast %38 : vector<1x128xf32> to vector<2x128xf32>
    %468 = arith.addf %466, %467 : vector<2x128xf32>
    %469 = arith.negf %468 : vector<2x128xf32>
    %470 = math.exp %469 : vector<2x128xf32>
    %cst_181 = arith.constant 1.000000e+00 : f32
    %471 = vector.broadcast %cst_181 : f32 to vector<2x128xf32>
    %472 = arith.addf %471, %470 : vector<2x128xf32>
    %473 = arith.divf %471, %472 : vector<2x128xf32>
    %474 = math.tanh %468 : vector<2x128xf32>
    %475 = vector.extract_strided_slice %473 {offsets = [0, 0], sizes = [2, 32], strides = [1, 1]} : vector<2x128xf32> to vector<2x32xf32>
    %476 = vector.extract_strided_slice %473 {offsets = [0, 32], sizes = [2, 32], strides = [1, 1]} : vector<2x128xf32> to vector<2x32xf32>
    %477 = vector.extract_strided_slice %474 {offsets = [0, 64], sizes = [2, 32], strides = [1, 1]} : vector<2x128xf32> to vector<2x32xf32>
    %478 = vector.extract_strided_slice %473 {offsets = [0, 96], sizes = [2, 32], strides = [1, 1]} : vector<2x128xf32> to vector<2x32xf32>
    %479 = arith.mulf %476, %425 : vector<2x32xf32>
    %480 = arith.mulf %475, %477 : vector<2x32xf32>
    %481 = arith.addf %479, %480 : vector<2x32xf32>
    %482 = math.tanh %481 : vector<2x32xf32>
    %483 = arith.mulf %478, %482 : vector<2x32xf32>
    %cst_182 = arith.constant dense<0.000000e+00> : vector<2x128xf32>
    %484 = tpu.matmul %483, %39, %cst_182 {dimension_numbers = #tpu.dot_dimension_numbers<[1], [0], [0], [1], [0, 0, 1, 1], [], []>} : vector<2x32xf32>, vector<32x128xf32>, vector<2x128xf32> -> vector<2x128xf32>
    %485 = vector.broadcast %40 : vector<1x128xf32> to vector<2x128xf32>
    %486 = arith.addf %484, %485 : vector<2x128xf32>
    %487 = vector.shape_cast %486 : vector<2x128xf32> to vector<2x1x128xf32>
    %c0_183 = arith.constant 0 : index
    %c7_184 = arith.constant 7 : index
    %c0_185 = arith.constant 0 : index
    %488 = vector.load %arg19[%c0_183, %c7_184, %c0_185] : memref<2x8x128xf32, #tpu.memory_space<vmem>>, vector<2x1x128xf32>
    tpu.vector_store %arg19[%c0_183, %c7_184, %c0_185], %487 {strides = array<i32>} : memref<2x8x128xf32, #tpu.memory_space<vmem>>, vector<2x1x128xf32>,
    return
  }
}

</mosaic_0001>

<llo_original>
// kernel: image_captioning_forward.1
$region0: #{image_captioning_forward.1}
  #allocation0 [shape = 'u32[]', space=smem, size = 0x4, offset = 0x4, fixed_abs, tag = 'smem constant byte address 0x4 - core index']
  #allocation1 [shape = 'u32[72,128]{1,0:T(1,128)}', space=vmem, size = 0x9000, scoped, tag = 'internal scratch']
  %s0 = inlined_call_operand.vmem [shape: s32[2,8], index: 0, kind: input, shape index: {}]
  %s1 = inlined_call_operand.vmem [shape: f32[512,4], index: 1, kind: input, shape index: {}]
  %s2 = inlined_call_operand.vmem [shape: f32[48,16], index: 2, kind: input, shape index: {}]
  %s3 = inlined_call_operand.vmem [shape: f32[4,32], index: 3, kind: input, shape index: {}]
  %s4 = inlined_call_operand.vmem [shape: f32[1,32], index: 4, kind: input, shape index: {}]
  %s5 = inlined_call_operand.vmem [shape: f32[16,256], index: 5, kind: input, shape index: {}]
  %s6 = inlined_call_operand.vmem [shape: f32[32,32], index: 6, kind: input, shape index: {}]
  %s7 = inlined_call_operand.vmem [shape: f32[1,32], index: 7, kind: input, shape index: {}]
  %s8 = inlined_call_operand.vmem [shape: f32[32,32], index: 8, kind: input, shape index: {}]
  %s9 = inlined_call_operand.vmem [shape: f32[1,32], index: 9, kind: input, shape index: {}]
  %s10 = inlined_call_operand.vmem [shape: f32[32,32], index: 10, kind: input, shape index: {}]
  %s11 = inlined_call_operand.vmem [shape: f32[1,32], index: 11, kind: input, shape index: {}]
  %s12 = inlined_call_operand.vmem [shape: f32[32,32], index: 12, kind: input, shape index: {}]
  %s13 = inlined_call_operand.vmem [shape: f32[1,32], index: 13, kind: input, shape index: {}]
  %s14 = inlined_call_operand.vmem [shape: f32[32,1], index: 14, kind: input, shape index: {}]
  %s15 = inlined_call_operand.vmem [shape: f32[80,128], index: 15, kind: input, shape index: {}]
  %s16 = inlined_call_operand.vmem [shape: f32[1,128], index: 16, kind: input, shape index: {}]
  %s17 = inlined_call_operand.vmem [shape: f32[32,128], index: 17, kind: input, shape index: {}]
  %s18 = inlined_call_operand.vmem [shape: f32[1,128], index: 18, kind: input, shape index: {}]
  %s19 = inlined_call_operand.hbm [shape: f32[2,8,128], index: 19, kind: output, shape index: {}]
  %s20 = sld [smem:[#allocation0]]
  $region90: #{image_captioning_forward.1} parent=0
    _
  %s22 = ssub.s32 1, %s20
  %s23 = scalar_select 0, %s22, %s20
  $region1: #{image_captioning_forward.1} parent=0
    #allocation2 [shape = 'u8[1024]{0}', space=smem, size = 0x400, scoped, tag = 'input window, operand 0, single buffered']
    #allocation3 [shape = 's32[1]{0}', space=sflag, size = 0x4, scoped, tag = 'scoped memory for image_captioning_forward.1']
    #allocation4 [shape = 's32[1]{0}', space=sflag, size = 0x4, scoped, tag = 'scoped memory for image_captioning_forward.1']
    #allocation5 [shape = 'u8[8192]{0}', space=vmem, size = 0x2000, scoped, tag = 'output window, operand 0, single buffered']
    %24 = vsyncpa [#allocation4], 0
    %25 = vsyncpa [#allocation3], 0
    // Predicated region
    $region2: #{image_captioning_forward.1} parent=1 // pred_check
      _
    $region3: #{image_captioning_forward.1} parent=1 // pred_check_branch
      %27 = sbr.rel (0) target = $region5
    $region4: #{image_captioning_forward.1} parent=1 // pred_region
      %29 = vsyncadd [#allocation4], 0
      %s31 = sshll.u32 %s0, 4
      %s32 = int_to_ptr.vmem [resolvable:$true] %s31
      %34 = dma.vmem_to_smem %s32, 32, [#allocation2], [#allocation4]
    $region5: #{image_captioning_forward.1} parent=1 // pred_fallthru
      _
    // Predicated region
    $region6: #{image_captioning_forward.1} parent=1 // pred_check
      _
    $region7: #{image_captioning_forward.1} parent=1 // pred_check_branch
      %36 = sbr.rel (0) target = $region9
    $region8: #{image_captioning_forward.1} parent=1 // pred_region
      _
    $region9: #{image_captioning_forward.1} parent=1 // pred_fallthru
      _
    // Predicated region
    $region10: #{image_captioning_forward.1} parent=1 // pred_check
      _
    $region11: #{image_captioning_forward.1} parent=1 // pred_check_branch
      %38 = sbr.rel (0) target = $region13
    $region12: #{image_captioning_forward.1} parent=1 // pred_region
      _
    $region13: #{image_captioning_forward.1} parent=1 // pred_fallthru
      _
    // Predicated region
    $region14: #{image_captioning_forward.1} parent=1 // pred_check
      _
    $region15: #{image_captioning_forward.1} parent=1 // pred_check_branch
      %40 = sbr.rel (0) target = $region17
    $region16: #{image_captioning_forward.1} parent=1 // pred_region
      _
    $region17: #{image_captioning_forward.1} parent=1 // pred_fallthru
      _
    // Predicated region
    $region18: #{image_captioning_forward.1} parent=1 // pred_check
      _
    $region19: #{image_captioning_forward.1} parent=1 // pred_check_branch
      %42 = sbr.rel (0) target = $region21
    $region20: #{image_captioning_forward.1} parent=1 // pred_region
      _
    $region21: #{image_captioning_forward.1} parent=1 // pred_fallthru
      _
    // Predicated region
    $region22: #{image_captioning_forward.1} parent=1 // pred_check
      _
    $region23: #{image_captioning_forward.1} parent=1 // pred_check_branch
      %44 = sbr.rel (0) target = $region25
    $region24: #{image_captioning_forward.1} parent=1 // pred_region
      _
    $region25: #{image_captioning_forward.1} parent=1 // pred_fallthru
      _
    // Predicated region
    $region26: #{image_captioning_forward.1} parent=1 // pred_check
      _
    $region27: #{image_captioning_forward.1} parent=1 // pred_check_branch
      %46 = sbr.rel (0) target = $region29
    $region28: #{image_captioning_forward.1} parent=1 // pred_region
      _
    $region29: #{image_captioning_forward.1} parent=1 // pred_fallthru
      _
    // Predicated region
    $region30: #{image_captioning_forward.1} parent=1 // pred_check
      _
    $region31: #{image_captioning_forward.1} parent=1 // pred_check_branch
      %48 = sbr.rel (0) target = $region33
    $region32: #{image_captioning_forward.1} parent=1 // pred_region
      _
    $region33: #{image_captioning_forward.1} parent=1 // pred_fallthru
      _
    // Predicated region
    $region34: #{image_captioning_forward.1} parent=1 // pred_check
      _
    $region35: #{image_captioning_forward.1} parent=1 // pred_check_branch
      %50 = sbr.rel (0) target = $region37
    $region36: #{image_captioning_forward.1} parent=1 // pred_region
      _
    $region37: #{image_captioning_forward.1} parent=1 // pred_fallthru
      _
    // Predicated region
    $region38: #{image_captioning_forward.1} parent=1 // pred_check
      _
    $region39: #{image_captioning_forward.1} parent=1 // pred_check_branch
      %52 = sbr.rel (0) target = $region41
    $region40: #{image_captioning_forward.1} parent=1 // pred_region
      _
    $region41: #{image_captioning_forward.1} parent=1 // pred_fallthru
      _
    // Predicated region
    $region42: #{image_captioning_forward.1} parent=1 // pred_check
      _
    $region43: #{image_captioning_forward.1} parent=1 // pred_check_branch
      %54 = sbr.rel (0) target = $region45
    $region44: #{image_captioning_forward.1} parent=1 // pred_region
      _
    $region45: #{image_captioning_forward.1} parent=1 // pred_fallthru
      _
    // Predicated region
    $region46: #{image_captioning_forward.1} parent=1 // pred_check
      _
    $region47: #{image_captioning_forward.1} parent=1 // pred_check_branch
      %56 = sbr.rel (0) target = $region49
    $region48: #{image_captioning_forward.1} parent=1 // pred_region
      _
    $region49: #{image_captioning_forward.1} parent=1 // pred_fallthru
      _
    // Predicated region
    $region50: #{image_captioning_forward.1} parent=1 // pred_check
      _
    $region51: #{image_captioning_forward.1} parent=1 // pred_check_branch
      %58 = sbr.rel (0) target = $region53
    $region52: #{image_captioning_forward.1} parent=1 // pred_region
      _
    $region53: #{image_captioning_forward.1} parent=1 // pred_fallthru
      _
    // Predicated region
    $region54: #{image_captioning_forward.1} parent=1 // pred_check
      _
    $region55: #{image_captioning_forward.1} parent=1 // pred_check_branch
      %60 = sbr.rel (0) target = $region57
    $region56: #{image_captioning_forward.1} parent=1 // pred_region
      _
    $region57: #{image_captioning_forward.1} parent=1 // pred_fallthru
      _
    // Predicated region
    $region58: #{image_captioning_forward.1} parent=1 // pred_check
      _
    $region59: #{image_captioning_forward.1} parent=1 // pred_check_branch
      %62 = sbr.rel (0) target = $region61
    $region60: #{image_captioning_forward.1} parent=1 // pred_region
      _
    $region61: #{image_captioning_forward.1} parent=1 // pred_fallthru
      _
    // Predicated region
    $region62: #{image_captioning_forward.1} parent=1 // pred_check
      _
    $region63: #{image_captioning_forward.1} parent=1 // pred_check_branch
      %64 = sbr.rel (0) target = $region65
    $region64: #{image_captioning_forward.1} parent=1 // pred_region
      _
    $region65: #{image_captioning_forward.1} parent=1 // pred_fallthru
      _
    // Predicated region
    $region66: #{image_captioning_forward.1} parent=1 // pred_check
      _
    $region67: #{image_captioning_forward.1} parent=1 // pred_check_branch
      %66 = sbr.rel (0) target = $region69
    $region68: #{image_captioning_forward.1} parent=1 // pred_region
      _
    $region69: #{image_captioning_forward.1} parent=1 // pred_fallthru
      _
    // Predicated region
    $region70: #{image_captioning_forward.1} parent=1 // pred_check
      _
    $region71: #{image_captioning_forward.1} parent=1 // pred_check_branch
      %68 = sbr.rel (0) target = $region73
    $region72: #{image_captioning_forward.1} parent=1 // pred_region
      _
    $region73: #{image_captioning_forward.1} parent=1 // pred_fallthru
      _
    // Predicated region
    $region74: #{image_captioning_forward.1} parent=1 // pred_check
      _
    $region75: #{image_captioning_forward.1} parent=1 // pred_check_branch
      %70 = sbr.rel (0) target = $region77
    $region76: #{image_captioning_forward.1} parent=1 // pred_region
      _
    $region77: #{image_captioning_forward.1} parent=1 // pred_fallthru
      _
    // Predicated region
    $region78: #{image_captioning_forward.1} parent=1 // pred_check
      _
    $region79: #{image_captioning_forward.1} parent=1 // pred_check_branch
      %72 = sbr.rel (0) target = $region81
    $region80: #{image_captioning_forward.1} parent=1 // pred_region
      %74 = dma.done [#allocation4], 32
    $region81: #{image_captioning_forward.1} parent=1 // pred_fallthru
      _
    %75 = sfence
    %v76 = vld [vmem:[%s1] sm:$0xff]
    %v77 = vld [vmem:[%s1 + $0x8] sm:$0xff]
    %v78 = vld [vmem:[%s1 + $0x10] sm:$0xff]
    %v79 = vld [vmem:[%s1 + $0x18] sm:$0xff]
    %v80 = vld [vmem:[%s1 + $0x20] sm:$0xff]
    %v81 = vld [vmem:[%s1 + $0x28] sm:$0xff]
    %v82 = vld [vmem:[%s1 + $0x30] sm:$0xff]
    %v83 = vld [vmem:[%s1 + $0x38] sm:$0xff]
    %v84 = vld [vmem:[%s1 + $0x40] sm:$0xff]
    %v85 = vld [vmem:[%s1 + $0x48] sm:$0xff]
    %v86 = vld [vmem:[%s1 + $0x50] sm:$0xff]
    %v87 = vld [vmem:[%s1 + $0x58] sm:$0xff]
    %v88 = vld [vmem:[%s1 + $0x60] sm:$0xff]
    %v89 = vld [vmem:[%s1 + $0x68] sm:$0xff]
    %v90 = vld [vmem:[%s1 + $0x70] sm:$0xff]
    %v91 = vld [vmem:[%s1 + $0x78] sm:$0xff]
    %v92 = vld [vmem:[%s1 + $0x80] sm:$0xff]
    %v93 = vld [vmem:[%s1 + $0x88] sm:$0xff]
    %v94 = vld [vmem:[%s1 + $0x90] sm:$0xff]
    %v95 = vld [vmem:[%s1 + $0x98] sm:$0xff]
    %v96 = vld [vmem:[%s1 + $0xa0] sm:$0xff]
    %v97 = vld [vmem:[%s1 + $0xa8] sm:$0xff]
    %v98 = vld [vmem:[%s1 + $0xb0] sm:$0xff]
    %v99 = vld [vmem:[%s1 + $0xb8] sm:$0xff]
    %v100 = vld [vmem:[%s1 + $0xc0] sm:$0xff]
    %v101 = vld [vmem:[%s1 + $0xc8] sm:$0xff]
    %v102 = vld [vmem:[%s1 + $0xd0] sm:$0xff]
    %v103 = vld [vmem:[%s1 + $0xd8] sm:$0xff]
    %v104 = vld [vmem:[%s1 + $0xe0] sm:$0xff]
    %v105 = vld [vmem:[%s1 + $0xe8] sm:$0xff]
    %v106 = vld [vmem:[%s1 + $0xf0] sm:$0xff]
    %v107 = vld [vmem:[%s1 + $0xf8] sm:$0xff]
    %v108 = vld [vmem:[%s1 + $0x100] sm:$0xff]
    %v109 = vld [vmem:[%s1 + $0x108] sm:$0xff]
    %v110 = vld [vmem:[%s1 + $0x110] sm:$0xff]
    %v111 = vld [vmem:[%s1 + $0x118] sm:$0xff]
    %v112 = vld [vmem:[%s1 + $0x120] sm:$0xff]
    %v113 = vld [vmem:[%s1 + $0x128] sm:$0xff]
    %v114 = vld [vmem:[%s1 + $0x130] sm:$0xff]
    %v115 = vld [vmem:[%s1 + $0x138] sm:$0xff]
    %v116 = vld [vmem:[%s1 + $0x140] sm:$0xff]
    %v117 = vld [vmem:[%s1 + $0x148] sm:$0xff]
    %v118 = vld [vmem:[%s1 + $0x150] sm:$0xff]
    %v119 = vld [vmem:[%s1 + $0x158] sm:$0xff]
    %v120 = vld [vmem:[%s1 + $0x160] sm:$0xff]
    %v121 = vld [vmem:[%s1 + $0x168] sm:$0xff]
    %v122 = vld [vmem:[%s1 + $0x170] sm:$0xff]
    %v123 = vld [vmem:[%s1 + $0x178] sm:$0xff]
    %v124 = vld [vmem:[%s1 + $0x180] sm:$0xff]
    %v125 = vld [vmem:[%s1 + $0x188] sm:$0xff]
    %v126 = vld [vmem:[%s1 + $0x190] sm:$0xff]
    %v127 = vld [vmem:[%s1 + $0x198] sm:$0xff]
    %v128 = vld [vmem:[%s1 + $0x1a0] sm:$0xff]
    %v129 = vld [vmem:[%s1 + $0x1a8] sm:$0xff]
    %v130 = vld [vmem:[%s1 + $0x1b0] sm:$0xff]
    %v131 = vld [vmem:[%s1 + $0x1b8] sm:$0xff]
    %v132 = vld [vmem:[%s1 + $0x1c0] sm:$0xff]
    %v133 = vld [vmem:[%s1 + $0x1c8] sm:$0xff]
    %v134 = vld [vmem:[%s1 + $0x1d0] sm:$0xff]
    %v135 = vld [vmem:[%s1 + $0x1d8] sm:$0xff]
    %v136 = vld [vmem:[%s1 + $0x1e0] sm:$0xff]
    %v137 = vld [vmem:[%s1 + $0x1e8] sm:$0xff]
    %v138 = vld [vmem:[%s1 + $0x1f0] sm:$0xff]
    %v139 = vld [vmem:[%s1 + $0x1f8] sm:$0xff]
    %v140 = vld [vmem:[%s3] sm:$0xf]
    %v141 = vld [vmem:[%s4] sm:$0x1]
    %v143 = vperm.slane %v141, 0
    %vm145 = vcmask 31744
    %v147 = vsel %vm145, %v76, 0
    %v150 = vsel %vm145, %v77, 0
    %v153 = vsel %vm145, %v78, 0
    %v156 = vsel %vm145, %v79, 0
    %v159 = vsel %vm145, %v80, 0
    %v162 = vsel %vm145, %v81, 0
    %v165 = vsel %vm145, %v82, 0
    %v168 = vsel %vm145, %v83, 0
    %v171 = vsel %vm145, %v84, 0
    %v174 = vsel %vm145, %v85, 0
    %v177 = vsel %vm145, %v86, 0
    %v180 = vsel %vm145, %v87, 0
    %v183 = vsel %vm145, %v88, 0
    %v186 = vsel %vm145, %v89, 0
    %v189 = vsel %vm145, %v90, 0
    %v192 = vsel %vm145, %v91, 0
    %v195 = vsel %vm145, %v92, 0
    %v198 = vsel %vm145, %v93, 0
    %v201 = vsel %vm145, %v94, 0
    %v204 = vsel %vm145, %v95, 0
    %v207 = vsel %vm145, %v96, 0
    %v210 = vsel %vm145, %v97, 0
    %v213 = vsel %vm145, %v98, 0
    %v216 = vsel %vm145, %v99, 0
    %v219 = vsel %vm145, %v100, 0
    %v222 = vsel %vm145, %v101, 0
    %v225 = vsel %vm145, %v102, 0
    %v228 = vsel %vm145, %v103, 0
    %v231 = vsel %vm145, %v104, 0
    %v234 = vsel %vm145, %v105, 0
    %v237 = vsel %vm145, %v106, 0
    %v240 = vsel %vm145, %v107, 0
    %v243 = vsel %vm145, %v108, 0
    %v246 = vsel %vm145, %v109, 0
    %v249 = vsel %vm145, %v110, 0
    %v252 = vsel %vm145, %v111, 0
    %v255 = vsel %vm145, %v112, 0
    %v258 = vsel %vm145, %v113, 0
    %v261 = vsel %vm145, %v114, 0
    %v264 = vsel %vm145, %v115, 0
    %v267 = vsel %vm145, %v116, 0
    %v270 = vsel %vm145, %v117, 0
    %v273 = vsel %vm145, %v118, 0
    %v276 = vsel %vm145, %v119, 0
    %v279 = vsel %vm145, %v120, 0
    %v282 = vsel %vm145, %v121, 0
    %v285 = vsel %vm145, %v122, 0
    %v288 = vsel %vm145, %v123, 0
    %v291 = vsel %vm145, %v124, 0
    %v294 = vsel %vm145, %v125, 0
    %v297 = vsel %vm145, %v126, 0
    %v300 = vsel %vm145, %v127, 0
    %v303 = vsel %vm145, %v128, 0
    %v306 = vsel %vm145, %v129, 0
    %v309 = vsel %vm145, %v130, 0
    %v312 = vsel %vm145, %v131, 0
    %v315 = vsel %vm145, %v132, 0
    %v318 = vsel %vm145, %v133, 0
    %v321 = vsel %vm145, %v134, 0
    %v324 = vsel %vm145, %v135, 0
    %v327 = vsel %vm145, %v136, 0
    %v330 = vsel %vm145, %v137, 0
    %v333 = vsel %vm145, %v138, 0
    %v336 = vsel %vm145, %v139, 0
    %vm338 = vcmask 1043456
    %v340 = vsel %vm338, %v140, 0
    %342 = vmatpush.msra.mxu0 0.0
    %343 = vmatpush.msra.mxu0 0.0
    %344 = vmatpush.msra.mxu0 0.0
    %345 = vmatpush.msra.mxu0 0.0
    %346 = vmatpush.msra.mxu0 0.0
    %347 = vmatpush.msra.mxu0 0.0
    %348 = vmatpush.msra.mxu0 0.0
    %349 = vmatpush.msra.mxu0 0.0
    %350 = vmatpush.msra.mxu0 0.0
    %351 = vmatpush.msra.mxu0 0.0
    %352 = vmatpush.msra.mxu0 0.0
    %353 = vmatpush.msra.mxu0 0.0
    %354 = vmatpush.msra.mxu0 0.0
    %355 = vmatpush.msra.mxu0 0.0
    %356 = vmatpush.msra.mxu0 0.0
    %357 = vmatpush.msra.mxu0 %v340
    %358 = vmatmul.f32.gmra.mxu0 %v147
    %v359 = vpop.f32.mrf.mxu0
    %v360 = vadd.f32 %v143, %v359
    %361 = vmatmul.f32.gmra.mxu0 %v150
    %v362 = vpop.f32.mrf.mxu0
    %v363 = vadd.f32 %v143, %v362
    %364 = vmatmul.f32.gmra.mxu0 %v153
    %v365 = vpop.f32.mrf.mxu0
    %v366 = vadd.f32 %v143, %v365
    %367 = vmatmul.f32.gmra.mxu0 %v156
    %v368 = vpop.f32.mrf.mxu0
    %v369 = vadd.f32 %v143, %v368
    %370 = vmatmul.f32.gmra.mxu0 %v159
    %v371 = vpop.f32.mrf.mxu0
    %v372 = vadd.f32 %v143, %v371
    %373 = vmatmul.f32.gmra.mxu0 %v162
    %v374 = vpop.f32.mrf.mxu0
    %v375 = vadd.f32 %v143, %v374
    %376 = vmatmul.f32.gmra.mxu0 %v165
    %v377 = vpop.f32.mrf.mxu0
    %v378 = vadd.f32 %v143, %v377
    %379 = vmatmul.f32.gmra.mxu0 %v168
    %v380 = vpop.f32.mrf.mxu0
    %v381 = vadd.f32 %v143, %v380
    %382 = vmatmul.f32.gmra.mxu0 %v171
    %v383 = vpop.f32.mrf.mxu0
    %v384 = vadd.f32 %v143, %v383
    %385 = vmatmul.f32.gmra.mxu0 %v174
    %v386 = vpop.f32.mrf.mxu0
    %v387 = vadd.f32 %v143, %v386
    %388 = vmatmul.f32.gmra.mxu0 %v177
    %v389 = vpop.f32.mrf.mxu0
    %v390 = vadd.f32 %v143, %v389
    %391 = vmatmul.f32.gmra.mxu0 %v180
    %v392 = vpop.f32.mrf.mxu0
    %v393 = vadd.f32 %v143, %v392
    %394 = vmatmul.f32.gmra.mxu0 %v183
    %v395 = vpop.f32.mrf.mxu0
    %v396 = vadd.f32 %v143, %v395
    %397 = vmatmul.f32.gmra.mxu0 %v186
    %v398 = vpop.f32.mrf.mxu0
    %v399 = vadd.f32 %v143, %v398
    %400 = vmatmul.f32.gmra.mxu0 %v189
    %v401 = vpop.f32.mrf.mxu0
    %v402 = vadd.f32 %v143, %v401
    %403 = vmatmul.f32.gmra.mxu0 %v192
    %v404 = vpop.f32.mrf.mxu0
    %v405 = vadd.f32 %v143, %v404
    %406 = vmatmul.f32.gmra.mxu0 %v195
    %v407 = vpop.f32.mrf.mxu0
    %v408 = vadd.f32 %v143, %v407
    %409 = vmatmul.f32.gmra.mxu0 %v198
    %v410 = vpop.f32.mrf.mxu0
    %v411 = vadd.f32 %v143, %v410
    %412 = vmatmul.f32.gmra.mxu0 %v201
    %v413 = vpop.f32.mrf.mxu0
    %v414 = vadd.f32 %v143, %v413
    %415 = vmatmul.f32.gmra.mxu0 %v204
    %v416 = vpop.f32.mrf.mxu0
    %v417 = vadd.f32 %v143, %v416
    %418 = vmatmul.f32.gmra.mxu0 %v207
    %v419 = vpop.f32.mrf.mxu0
    %v420 = vadd.f32 %v143, %v419
    %421 = vmatmul.f32.gmra.mxu0 %v210
    %v422 = vpop.f32.mrf.mxu0
    %v423 = vadd.f32 %v143, %v422
    %424 = vmatmul.f32.gmra.mxu0 %v213
    %v425 = vpop.f32.mrf.mxu0
    %v426 = vadd.f32 %v143, %v425
    %427 = vmatmul.f32.gmra.mxu0 %v216
    %v428 = vpop.f32.mrf.mxu0
    %v429 = vadd.f32 %v143, %v428
    %430 = vmatmul.f32.gmra.mxu0 %v219
    %v431 = vpop.f32.mrf.mxu0
    %v432 = vadd.f32 %v143, %v431
    %433 = vmatmul.f32.gmra.mxu0 %v222
    %v434 = vpop.f32.mrf.mxu0
    %v435 = vadd.f32 %v143, %v434
    %436 = vmatmul.f32.gmra.mxu0 %v225
    %v437 = vpop.f32.mrf.mxu0
    %v438 = vadd.f32 %v143, %v437
    %439 = vmatmul.f32.gmra.mxu0 %v228
    %v440 = vpop.f32.mrf.mxu0
    %v441 = vadd.f32 %v143, %v440
    %442 = vmatmul.f32.gmra.mxu0 %v231
    %v443 = vpop.f32.mrf.mxu0
    %v444 = vadd.f32 %v143, %v443
    %445 = vmatmul.f32.gmra.mxu0 %v234
    %v446 = vpop.f32.mrf.mxu0
    %v447 = vadd.f32 %v143, %v446
    %448 = vmatmul.f32.gmra.mxu0 %v237
    %v449 = vpop.f32.mrf.mxu0
    %v450 = vadd.f32 %v143, %v449
    %451 = vmatmul.f32.gmra.mxu0 %v240
    %v452 = vpop.f32.mrf.mxu0
    %v453 = vadd.f32 %v143, %v452
    %454 = vmatmul.f32.gmra.mxu0 %v243
    %v455 = vpop.f32.mrf.mxu0
    %v456 = vadd.f32 %v143, %v455
    %457 = vmatmul.f32.gmra.mxu0 %v246
    %v458 = vpop.f32.mrf.mxu0
    %v459 = vadd.f32 %v143, %v458
    %460 = vmatmul.f32.gmra.mxu0 %v249
    %v461 = vpop.f32.mrf.mxu0
    %v462 = vadd.f32 %v143, %v461
    %463 = vmatmul.f32.gmra.mxu0 %v252
    %v464 = vpop.f32.mrf.mxu0
    %v465 = vadd.f32 %v143, %v464
    %466 = vmatmul.f32.gmra.mxu0 %v255
    %v467 = vpop.f32.mrf.mxu0
    %v468 = vadd.f32 %v143, %v467
    %469 = vmatmul.f32.gmra.mxu0 %v258
    %v470 = vpop.f32.mrf.mxu0
    %v471 = vadd.f32 %v143, %v470
    %472 = vmatmul.f32.gmra.mxu0 %v261
    %v473 = vpop.f32.mrf.mxu0
    %v474 = vadd.f32 %v143, %v473
    %475 = vmatmul.f32.gmra.mxu0 %v264
    %v476 = vpop.f32.mrf.mxu0
    %v477 = vadd.f32 %v143, %v476
    %478 = vmatmul.f32.gmra.mxu0 %v267
    %v479 = vpop.f32.mrf.mxu0
    %v480 = vadd.f32 %v143, %v479
    %481 = vmatmul.f32.gmra.mxu0 %v270
    %v482 = vpop.f32.mrf.mxu0
    %v483 = vadd.f32 %v143, %v482
    %484 = vmatmul.f32.gmra.mxu0 %v273
    %v485 = vpop.f32.mrf.mxu0
    %v486 = vadd.f32 %v143, %v485
    %487 = vmatmul.f32.gmra.mxu0 %v276
    %v488 = vpop.f32.mrf.mxu0
    %v489 = vadd.f32 %v143, %v488
    %490 = vmatmul.f32.gmra.mxu0 %v279
    %v491 = vpop.f32.mrf.mxu0
    %v492 = vadd.f32 %v143, %v491
    %493 = vmatmul.f32.gmra.mxu0 %v282
    %v494 = vpop.f32.mrf.mxu0
    %v495 = vadd.f32 %v143, %v494
    %496 = vmatmul.f32.gmra.mxu0 %v285
    %v497 = vpop.f32.mrf.mxu0
    %v498 = vadd.f32 %v143, %v497
    %499 = vmatmul.f32.gmra.mxu0 %v288
    %v500 = vpop.f32.mrf.mxu0
    %v501 = vadd.f32 %v143, %v500
    %502 = vmatmul.f32.gmra.mxu0 %v291
    %v503 = vpop.f32.mrf.mxu0
    %v504 = vadd.f32 %v143, %v503
    %505 = vmatmul.f32.gmra.mxu0 %v294
    %v506 = vpop.f32.mrf.mxu0
    %v507 = vadd.f32 %v143, %v506
    %508 = vmatmul.f32.gmra.mxu0 %v297
    %v509 = vpop.f32.mrf.mxu0
    %v510 = vadd.f32 %v143, %v509
    %511 = vmatmul.f32.gmra.mxu0 %v300
    %v512 = vpop.f32.mrf.mxu0
    %v513 = vadd.f32 %v143, %v512
    %514 = vmatmul.f32.gmra.mxu0 %v303
    %v515 = vpop.f32.mrf.mxu0
    %v516 = vadd.f32 %v143, %v515
    %517 = vmatmul.f32.gmra.mxu0 %v306
    %v518 = vpop.f32.mrf.mxu0
    %v519 = vadd.f32 %v143, %v518
    %520 = vmatmul.f32.gmra.mxu0 %v309
    %v521 = vpop.f32.mrf.mxu0
    %v522 = vadd.f32 %v143, %v521
    %523 = vmatmul.f32.gmra.mxu0 %v312
    %v524 = vpop.f32.mrf.mxu0
    %v525 = vadd.f32 %v143, %v524
    %526 = vmatmul.f32.gmra.mxu0 %v315
    %v527 = vpop.f32.mrf.mxu0
    %v528 = vadd.f32 %v143, %v527
    %529 = vmatmul.f32.gmra.mxu0 %v318
    %v530 = vpop.f32.mrf.mxu0
    %v531 = vadd.f32 %v143, %v530
    %532 = vmatmul.f32.gmra.mxu0 %v321
    %v533 = vpop.f32.mrf.mxu0
    %v534 = vadd.f32 %v143, %v533
    %535 = vmatmul.f32.gmra.mxu0 %v324
    %v536 = vpop.f32.mrf.mxu0
    %v537 = vadd.f32 %v143, %v536
    %538 = vmatmul.f32.gmra.mxu0 %v327
    %v539 = vpop.f32.mrf.mxu0
    %v540 = vadd.f32 %v143, %v539
    %541 = vmatmul.f32.gmra.mxu0 %v330
    %v542 = vpop.f32.mrf.mxu0
    %v543 = vadd.f32 %v143, %v542
    %544 = vmatmul.f32.gmra.mxu0 %v333
    %v545 = vpop.f32.mrf.mxu0
    %v546 = vadd.f32 %v143, %v545
    %547 = vmatmul.f32.gmra.mxu0 %v336
    %v548 = vpop.f32.mrf.mxu0
    %v549 = vadd.f32 %v143, %v548
    %550 = vdwg.mxu0
    %v551 = vmax.f32 %v360, 0.0
    %v552 = vmax.f32 %v363, 0.0
    %v553 = vmax.f32 %v366, 0.0
    %v554 = vmax.f32 %v369, 0.0
    %v555 = vmax.f32 %v372, 0.0
    %v556 = vmax.f32 %v375, 0.0
    %v557 = vmax.f32 %v378, 0.0
    %v558 = vmax.f32 %v381, 0.0
    %v559 = vmax.f32 %v384, 0.0
    %v560 = vmax.f32 %v387, 0.0
    %v561 = vmax.f32 %v390, 0.0
    %v562 = vmax.f32 %v393, 0.0
    %v563 = vmax.f32 %v396, 0.0
    %v564 = vmax.f32 %v399, 0.0
    %v565 = vmax.f32 %v402, 0.0
    %v566 = vmax.f32 %v405, 0.0
    %v567 = vmax.f32 %v408, 0.0
    %v568 = vmax.f32 %v411, 0.0
    %v569 = vmax.f32 %v414, 0.0
    %v570 = vmax.f32 %v417, 0.0
    %v571 = vmax.f32 %v420, 0.0
    %v572 = vmax.f32 %v423, 0.0
    %v573 = vmax.f32 %v426, 0.0
    %v574 = vmax.f32 %v429, 0.0
    %v575 = vmax.f32 %v432, 0.0
    %v576 = vmax.f32 %v435, 0.0
    %v577 = vmax.f32 %v438, 0.0
    %v578 = vmax.f32 %v441, 0.0
    %v579 = vmax.f32 %v444, 0.0
    %v580 = vmax.f32 %v447, 0.0
    %v581 = vmax.f32 %v450, 0.0
    %v582 = vmax.f32 %v453, 0.0
    %v583 = vmax.f32 %v456, 0.0
    %v584 = vmax.f32 %v459, 0.0
    %v585 = vmax.f32 %v462, 0.0
    %v586 = vmax.f32 %v465, 0.0
    %v587 = vmax.f32 %v468, 0.0
    %v588 = vmax.f32 %v471, 0.0
    %v589 = vmax.f32 %v474, 0.0
    %v590 = vmax.f32 %v477, 0.0
    %v591 = vmax.f32 %v480, 0.0
    %v592 = vmax.f32 %v483, 0.0
    %v593 = vmax.f32 %v486, 0.0
    %v594 = vmax.f32 %v489, 0.0
    %v595 = vmax.f32 %v492, 0.0
    %v596 = vmax.f32 %v495, 0.0
    %v597 = vmax.f32 %v498, 0.0
    %v598 = vmax.f32 %v501, 0.0
    %v599 = vmax.f32 %v504, 0.0
    %v600 = vmax.f32 %v507, 0.0
    %v601 = vmax.f32 %v510, 0.0
    %v602 = vmax.f32 %v513, 0.0
    %v603 = vmax.f32 %v516, 0.0
    %v604 = vmax.f32 %v519, 0.0
    %v605 = vmax.f32 %v522, 0.0
    %v606 = vmax.f32 %v525, 0.0
    %v607 = vmax.f32 %v528, 0.0
    %v608 = vmax.f32 %v531, 0.0
    %v609 = vmax.f32 %v534, 0.0
    %v610 = vmax.f32 %v537, 0.0
    %v611 = vmax.f32 %v540, 0.0
    %v612 = vmax.f32 %v543, 0.0
    %v613 = vmax.f32 %v546, 0.0
    %v614 = vmax.f32 %v549, 0.0
    %v615 = vld [vmem:[%s5] sm:$0xff]
    %v616 = vld [vmem:[%s5 + $0x8] sm:$0xff]
    %v617 = vld [vmem:[%s5 + $0x10] sm:$0xff]
    %v618 = vld [vmem:[%s5 + $0x18] sm:$0xff]
    %619 = vmatpush.msra.mxu0 %v566
    %620 = vmatpush.msra.mxu0 %v565
    %621 = vmatpush.msra.mxu0 %v564
    %622 = vmatpush.msra.mxu0 %v563
    %623 = vmatpush.msra.mxu0 %v562
    %624 = vmatpush.msra.mxu0 %v561
    %625 = vmatpush.msra.mxu0 %v560
    %626 = vmatpush.msra.mxu0 %v559
    %627 = vmatpush.msra.mxu0 %v558
    %628 = vmatpush.msra.mxu0 %v557
    %629 = vmatpush.msra.mxu0 %v556
    %630 = vmatpush.msra.mxu0 %v555
    %631 = vmatpush.msra.mxu0 %v554
    %632 = vmatpush.msra.mxu0 %v553
    %633 = vmatpush.msra.mxu0 %v552
    %634 = vmatpush.msra.mxu0 %v551
    %635 = vmatmul.f32.gmra.mxu0 %v615
    %v636 = vpop.f32.mrf.mxu0
    %v637 = vadd.f32 0.0, %v636
    %638 = vmatmul.f32.gmra.mxu0 %v617
    %v639 = vpop.f32.mrf.mxu0
    %v640 = vadd.f32 0.0, %v639
    %641 = vdwg.mxu0
    %642 = vmatpush.msra.mxu0 %v582
    %643 = vmatpush.msra.mxu0 %v581
    %644 = vmatpush.msra.mxu0 %v580
    %645 = vmatpush.msra.mxu0 %v579
    %646 = vmatpush.msra.mxu0 %v578
    %647 = vmatpush.msra.mxu0 %v577
    %648 = vmatpush.msra.mxu0 %v576
    %649 = vmatpush.msra.mxu0 %v575
    %650 = vmatpush.msra.mxu0 %v574
    %651 = vmatpush.msra.mxu0 %v573
    %652 = vmatpush.msra.mxu0 %v572
    %653 = vmatpush.msra.mxu0 %v571
    %654 = vmatpush.msra.mxu0 %v570
    %655 = vmatpush.msra.mxu0 %v569
    %656 = vmatpush.msra.mxu0 %v568
    %657 = vmatpush.msra.mxu0 %v567
    %658 = vmatmul.f32.gmra.mxu0 %v616
    %v659 = vpop.f32.mrf.mxu0
    %v660 = vadd.f32 %v637, %v659
    %661 = vmatmul.f32.gmra.mxu0 %v618
    %v662 = vpop.f32.mrf.mxu0
    %v663 = vadd.f32 %v640, %v662
    %664 = vdwg.mxu0
    %665 = vmatpush.msra.mxu0 %v598
    %666 = vmatpush.msra.mxu0 %v597
    %667 = vmatpush.msra.mxu0 %v596
    %668 = vmatpush.msra.mxu0 %v595
    %669 = vmatpush.msra.mxu0 %v594
    %670 = vmatpush.msra.mxu0 %v593
    %671 = vmatpush.msra.mxu0 %v592
    %672 = vmatpush.msra.mxu0 %v591
    %673 = vmatpush.msra.mxu0 %v590
    %674 = vmatpush.msra.mxu0 %v589
    %675 = vmatpush.msra.mxu0 %v588
    %676 = vmatpush.msra.mxu0 %v587
    %677 = vmatpush.msra.mxu0 %v586
    %678 = vmatpush.msra.mxu0 %v585
    %679 = vmatpush.msra.mxu0 %v584
    %680 = vmatpush.msra.mxu0 %v583
    %681 = vmatmul.f32.gmra.mxu0 %v615
    %v682 = vpop.f32.mrf.mxu0
    %v683 = vadd.f32 0.0, %v682
    %684 = vmatmul.f32.gmra.mxu0 %v617
    %v685 = vpop.f32.mrf.mxu0
    %v686 = vadd.f32 0.0, %v685
    %687 = vdwg.mxu0
    %688 = vmatpush.msra.mxu0 %v614
    %689 = vmatpush.msra.mxu0 %v613
    %690 = vmatpush.msra.mxu0 %v612
    %691 = vmatpush.msra.mxu0 %v611
    %692 = vmatpush.msra.mxu0 %v610
    %693 = vmatpush.msra.mxu0 %v609
    %694 = vmatpush.msra.mxu0 %v608
    %695 = vmatpush.msra.mxu0 %v607
    %696 = vmatpush.msra.mxu0 %v606
    %697 = vmatpush.msra.mxu0 %v605
    %698 = vmatpush.msra.mxu0 %v604
    %699 = vmatpush.msra.mxu0 %v603
    %700 = vmatpush.msra.mxu0 %v602
    %701 = vmatpush.msra.mxu0 %v601
    %702 = vmatpush.msra.mxu0 %v600
    %703 = vmatpush.msra.mxu0 %v599
    %704 = vmatmul.f32.gmra.mxu0 %v616
    %v705 = vpop.f32.mrf.mxu0
    %v706 = vadd.f32 %v683, %v705
    %707 = vmatmul.f32.gmra.mxu0 %v618
    %v708 = vpop.f32.mrf.mxu0
    %v709 = vadd.f32 %v686, %v708
    %710 = vdwg.mxu0
    %v711 = vld [vmem:[%s10] sm:$0xff]
    %v712 = vld [vmem:[%s10 + $0x8] sm:$0xff]
    %v713 = vld [vmem:[%s10 + $0x10] sm:$0xff]
    %v714 = vld [vmem:[%s10 + $0x18] sm:$0xff]
    %v715 = vld [vmem:[%s11] sm:$0x1]
    %v717 = vperm.slane %v715, 0
    %vm719 = vcmask 261120
    %v721 = vsel %vm719, %v660, 0
    %v724 = vsel %vm719, %v663, 0
    %v727 = vsel %vm719, %v706, 0
    %v730 = vsel %vm719, %v709, 0
    %732 = vmatpush.msra.mxu0 0.0
    %733 = vmatpush.msra.mxu0 0.0
    %734 = vmatpush.msra.mxu0 0.0
    %735 = vmatpush.msra.mxu0 0.0
    %736 = vmatpush.msra.mxu0 0.0
    %737 = vmatpush.msra.mxu0 0.0
    %738 = vmatpush.msra.mxu0 0.0
    %739 = vmatpush.msra.mxu0 0.0
    %740 = vmatpush.msra.mxu0 0.0
    %741 = vmatpush.msra.mxu0 0.0
    %742 = vmatpush.msra.mxu0 0.0
    %743 = vmatpush.msra.mxu0 0.0
    %744 = vmatpush.msra.mxu0 %v714
    %745 = vmatpush.msra.mxu0 %v713
    %746 = vmatpush.msra.mxu0 %v712
    %747 = vmatpush.msra.mxu0 %v711
    %748 = vmatmul.f32.gmra.mxu0 %v721
    %v749 = vpop.f32.mrf.mxu0
    %v750 = vadd.f32 %v717, %v749
    %751 = vmatmul.f32.gmra.mxu0 %v724
    %v752 = vpop.f32.mrf.mxu0
    %v753 = vadd.f32 %v717, %v752
    %754 = vmatmul.f32.gmra.mxu0 %v727
    %v755 = vpop.f32.mrf.mxu0
    %v756 = vadd.f32 %v717, %v755
    %757 = vmatmul.f32.gmra.mxu0 %v730
    %v758 = vpop.f32.mrf.mxu0
    %v759 = vadd.f32 %v717, %v758
    %760 = vdwg.mxu0
    %v761 = vsel %vm719, %v660, 0.0
    %v762 = vsel %vm719, %v663, 0.0
    %v763 = vadd.f32 %v761, %v762
    %v764 = vrot.slane %v763, 4
    %v765 = vadd.f32 %v763, %v764
    %v766 = vrot.slane %v765, 2
    %v767 = vadd.f32 %v765, %v766
    %v768 = vrot.slane %v767, 1
    %v769 = vadd.f32 %v767, %v768
    %v770 = vsel %vm719, %v706, 0.0
    %v771 = vsel %vm719, %v709, 0.0
    %v772 = vadd.f32 %v770, %v771
    %v773 = vrot.slane %v772, 4
    %v774 = vadd.f32 %v772, %v773
    %v775 = vrot.slane %v774, 2
    %v776 = vadd.f32 %v774, %v775
    %v777 = vrot.slane %v776, 1
    %v778 = vadd.f32 %v776, %v777
    %v779 = vrcp.pop 16.0
    %v780 = vmul.f32 16.0, %v779
    %v781 = vsub.f32 1.0, %v780
    %v782 = vmul.f32 %v779, %v781
    %v783 = vadd.f32 %v779, %v782
    %vm784 = vweird.f32 %v779
    %v785 = vsel %vm784, %v779, %v783
    %v786 = vmul.f32 %v769, %v785
    %v787 = vmul.f32 %v778, %v785
    %v788 = vld [vmem:[%s6] sm:$0xff]
    %v789 = vld [vmem:[%s6 + $0x8] sm:$0xff]
    %v790 = vld [vmem:[%s6 + $0x10] sm:$0xff]
    %v791 = vld [vmem:[%s6 + $0x18] sm:$0xff]
    %v792 = vld [vmem:[%s7] sm:$0x1]
    %v794 = vperm.slane %v792, 0
    %vm798 = vcmask 1041409
    %v799 = vsel %vm798, %v787, %v786
    %v800 = vsel %vm719, %v799, 0
    %802 = vmatpush.msra.mxu0 0.0
    %803 = vmatpush.msra.mxu0 0.0
    %804 = vmatpush.msra.mxu0 0.0
    %805 = vmatpush.msra.mxu0 0.0
    %806 = vmatpush.msra.mxu0 0.0
    %807 = vmatpush.msra.mxu0 0.0
    %808 = vmatpush.msra.mxu0 0.0
    %809 = vmatpush.msra.mxu0 0.0
    %810 = vmatpush.msra.mxu0 0.0
    %811 = vmatpush.msra.mxu0 0.0
    %812 = vmatpush.msra.mxu0 0.0
    %813 = vmatpush.msra.mxu0 0.0
    %814 = vmatpush.msra.mxu0 %v791
    %815 = vmatpush.msra.mxu0 %v790
    %816 = vmatpush.msra.mxu0 %v789
    %817 = vmatpush.msra.mxu0 %v788
    %818 = vmatmul.f32.gmra.mxu0 %v800
    %v819 = vpop.f32.mrf.mxu0
    %v820 = vadd.f32 %v794, %v819
    %821 = vdwg.mxu0
    %v822 = vld [vmem:[%s8] sm:$0xff]
    %v823 = vld [vmem:[%s8 + $0x8] sm:$0xff]
    %v824 = vld [vmem:[%s8 + $0x10] sm:$0xff]
    %v825 = vld [vmem:[%s8 + $0x18] sm:$0xff]
    %v826 = vld [vmem:[%s9] sm:$0x1]
    %v828 = vperm.slane %v826, 0
    %830 = vmatpush.msra.mxu0 0.0
    %831 = vmatpush.msra.mxu0 0.0
    %832 = vmatpush.msra.mxu0 0.0
    %833 = vmatpush.msra.mxu0 0.0
    %834 = vmatpush.msra.mxu0 0.0
    %835 = vmatpush.msra.mxu0 0.0
    %836 = vmatpush.msra.mxu0 0.0
    %837 = vmatpush.msra.mxu0 0.0
    %838 = vmatpush.msra.mxu0 0.0
    %839 = vmatpush.msra.mxu0 0.0
    %840 = vmatpush.msra.mxu0 0.0
    %841 = vmatpush.msra.mxu0 0.0
    %842 = vmatpush.msra.mxu0 %v825
    %843 = vmatpush.msra.mxu0 %v824
    %844 = vmatpush.msra.mxu0 %v823
    %845 = vmatpush.msra.mxu0 %v822
    %846 = vmatmul.f32.gmra.mxu0 %v800
    %v847 = vpop.f32.mrf.mxu0
    %v848 = vadd.f32 %v828, %v847
    %849 = vdwg.mxu0
    %v850 = vld [vmem:[%s12] sm:$0xff]
    %v851 = vld [vmem:[%s12 + $0x8] sm:$0xff]
    %v852 = vld [vmem:[%s12 + $0x10] sm:$0xff]
    %v853 = vld [vmem:[%s12 + $0x18] sm:$0xff]
    %v854 = vld [vmem:[%s13] sm:$0x1]
    %v855 = vld [vmem:[%s14] sm:$0xff]
    %v856 = vld [vmem:[%s14 + $0x8] sm:$0xff]
    %v857 = vld [vmem:[%s14 + $0x10] sm:$0xff]
    %v858 = vld [vmem:[%s14 + $0x18] sm:$0xff]
    %v859 = vld [vmem:[%s15] sm:$0xff]
    %v860 = vld [vmem:[%s15 + $0x8] sm:$0xff]
    %v861 = vld [vmem:[%s15 + $0x10] sm:$0xff]
    %v862 = vld [vmem:[%s15 + $0x18] sm:$0xff]
    %v863 = vld [vmem:[%s15 + $0x20] sm:$0xff]
    %v864 = vld [vmem:[%s15 + $0x28] sm:$0xff]
    %v865 = vld [vmem:[%s15 + $0x30] sm:$0xff]
    %v866 = vld [vmem:[%s15 + $0x38] sm:$0xff]
    %v867 = vld [vmem:[%s15 + $0x40] sm:$0xff]
    %v868 = vld [vmem:[%s15 + $0x48] sm:$0xff]
    %v869 = vld [vmem:[%s16] sm:$0x1]
    %v870 = vld [vmem:[%s17] sm:$0xff]
    %v871 = vld [vmem:[%s17 + $0x8] sm:$0xff]
    %v872 = vld [vmem:[%s17 + $0x10] sm:$0xff]
    %v873 = vld [vmem:[%s17 + $0x18] sm:$0xff]
    %v874 = vld [vmem:[%s18] sm:$0x1]
    %v876 = vperm.slane %v854, 0
    %v879 = vsel %vm719, %v820, 0
    %881 = vmatpush.msra.mxu0 0.0
    %882 = vmatpush.msra.mxu0 0.0
    %883 = vmatpush.msra.mxu0 0.0
    %884 = vmatpush.msra.mxu0 0.0
    %885 = vmatpush.msra.mxu0 0.0
    %886 = vmatpush.msra.mxu0 0.0
    %887 = vmatpush.msra.mxu0 0.0
    %888 = vmatpush.msra.mxu0 0.0
    %889 = vmatpush.msra.mxu0 0.0
    %890 = vmatpush.msra.mxu0 0.0
    %891 = vmatpush.msra.mxu0 0.0
    %892 = vmatpush.msra.mxu0 0.0
    %893 = vmatpush.msra.mxu0 %v853
    %894 = vmatpush.msra.mxu0 %v852
    %895 = vmatpush.msra.mxu0 %v851
    %896 = vmatpush.msra.mxu0 %v850
    %897 = vmatmul.f32.gmra.mxu0 %v879
    %v898 = vpop.f32.mrf.mxu0
    %v899 = vadd.f32 %v876, %v898
    %900 = vdwg.mxu0
    %v902 = vrot.slane %v899, 1
    %v903 = vperm.slane %v899, 0
    %v904 = vperm.slane %v902, 0
    %v907 = vadd.f32 %v750, %v903
    %v908 = vadd.f32 %v753, %v903
    %v909 = vadd.f32 %v756, %v904
    %v910 = vadd.f32 %v759, %v904
    %v911 = vmax.f32 %v907, 0.0
    %v912 = vmax.f32 %v908, 0.0
    %v913 = vmax.f32 %v909, 0.0
    %v914 = vmax.f32 %v910, 0.0
    %v916 = vsel %vm719, %v911, 0
    %v919 = vsel %vm719, %v912, 0
    %v922 = vsel %vm719, %v913, 0
    %v925 = vsel %vm719, %v914, 0
    %927 = vmatpush.msra.mxu0 0.0
    %928 = vmatpush.msra.mxu0 0.0
    %929 = vmatpush.msra.mxu0 0.0
    %930 = vmatpush.msra.mxu0 0.0
    %931 = vmatpush.msra.mxu0 0.0
    %932 = vmatpush.msra.mxu0 0.0
    %933 = vmatpush.msra.mxu0 0.0
    %934 = vmatpush.msra.mxu0 0.0
    %935 = vmatpush.msra.mxu0 0.0
    %936 = vmatpush.msra.mxu0 0.0
    %937 = vmatpush.msra.mxu0 0.0
    %938 = vmatpush.msra.mxu0 0.0
    %939 = vmatpush.msra.mxu0 %v858
    %940 = vmatpush.msra.mxu0 %v857
    %941 = vmatpush.msra.mxu0 %v856
    %942 = vmatpush.msra.mxu0 %v855
    %943 = vmatmul.f32.gmra.mxu0 %v916
    %v944 = vpop.f32.mrf.mxu0
    %v945 = vadd.f32 0.0, %v944
    %946 = vmatmul.f32.gmra.mxu0 %v919
    %v947 = vpop.f32.mrf.mxu0
    %v948 = vadd.f32 0.0, %v947
    %949 = vmatmul.f32.gmra.mxu0 %v922
    %v950 = vpop.f32.mrf.mxu0
    %v951 = vadd.f32 0.0, %v950
    %952 = vmatmul.f32.gmra.mxu0 %v925
    %v953 = vpop.f32.mrf.mxu0
    %v954 = vadd.f32 0.0, %v953
    %955 = vdwg.mxu0
    %vm956 = vcmask 7168
    %v957 = vsel %vm956, %v945, -inf
    %v958 = vsel %vm956, %v948, -inf
    %v959 = vmax.f32 %v957, %v958
    %v960 = vrot.slane %v959, 4
    %v961 = vmax.f32 %v959, %v960
    %v962 = vrot.slane %v961, 2
    %v963 = vmax.f32 %v961, %v962
    %v964 = vrot.slane %v963, 1
    %v965 = vmax.f32 %v963, %v964
    %v966 = vsel %vm956, %v951, -inf
    %v967 = vsel %vm956, %v954, -inf
    %v968 = vmax.f32 %v966, %v967
    %v969 = vrot.slane %v968, 4
    %v970 = vmax.f32 %v968, %v969
    %v971 = vrot.slane %v970, 2
    %v972 = vmax.f32 %v970, %v971
    %v973 = vrot.slane %v972, 1
    %v974 = vmax.f32 %v972, %v973
    %v975 = vsub.f32 %v945, %v965
    %v976 = vsub.f32 %v948, %v965
    %v977 = vsub.f32 %v951, %v974
    %v978 = vsub.f32 %v954, %v974
    %v979 = vmul.f32 %v975, 1.442695
    %v980 = vpow.pop %v979
    %v981 = vmul.f32 %v976, 1.442695
    %v982 = vpow.pop %v981
    %v983 = vmul.f32 %v977, 1.442695
    %v984 = vpow.pop %v983
    %v985 = vmul.f32 %v978, 1.442695
    %v986 = vpow.pop %v985
    %v987 = vsel %vm956, %v980, 0.0
    %v988 = vsel %vm956, %v982, 0.0
    %v989 = vadd.f32 %v987, %v988
    %v990 = vrot.slane %v989, 4
    %v991 = vadd.f32 %v989, %v990
    %v992 = vrot.slane %v991, 2
    %v993 = vadd.f32 %v991, %v992
    %v994 = vrot.slane %v993, 1
    %v995 = vadd.f32 %v993, %v994
    %v996 = vsel %vm956, %v984, 0.0
    %v997 = vsel %vm956, %v986, 0.0
    %v998 = vadd.f32 %v996, %v997
    %v999 = vrot.slane %v998, 4
    %v1000 = vadd.f32 %v998, %v999
    %v1001 = vrot.slane %v1000, 2
    %v1002 = vadd.f32 %v1000, %v1001
    %v1003 = vrot.slane %v1002, 1
    %v1004 = vadd.f32 %v1002, %v1003
    %v1005 = vrcp.pop %v995
    %v1006 = vmul.f32 %v995, %v1005
    %v1007 = vsub.f32 1.0, %v1006
    %v1008 = vmul.f32 %v1005, %v1007
    %v1009 = vadd.f32 %v1005, %v1008
    %vm1010 = vweird.f32 %v995
    %vm1011 = vweird.f32 %v1005
    %vm1012 = vmor %vm1010, %vm1011
    %v1013 = vsel %vm1012, %v1005, %v1009
    %v1014 = vand.u32 2147483647, %v995
    %vm1015 = vcmp.eq.f32.partialorder %v1014, 8.507059e+37
    %v1016 = vand.u32 %v995, 2147483648
    %v1017 = vor.u32 1.1754944e-38, %v1016
    %v1018 = vsel %vm1015, %v1017, %v1013
    %v1019 = vmul.f32 %v980, %v1018
    %v1020 = vmul.f32 %v982, %v1018
    %v1021 = vrcp.pop %v1004
    %v1022 = vmul.f32 %v1004, %v1021
    %v1023 = vsub.f32 1.0, %v1022
    %v1024 = vmul.f32 %v1021, %v1023
    %v1025 = vadd.f32 %v1021, %v1024
    %vm1026 = vweird.f32 %v1004
    %vm1027 = vweird.f32 %v1021
    %vm1028 = vmor %vm1026, %vm1027
    %v1029 = vsel %vm1028, %v1021, %v1025
    %v1030 = vand.u32 2147483647, %v1004
    %vm1031 = vcmp.eq.f32.partialorder %v1030, 8.507059e+37
    %v1032 = vand.u32 %v1004, 2147483648
    %v1033 = vor.u32 1.1754944e-38, %v1032
    %v1034 = vsel %vm1031, %v1033, %v1029
    %v1035 = vmul.f32 %v984, %v1034
    %v1036 = vmul.f32 %v986, %v1034
    %1038 = vset.pattern.permute.xlu0 0
    %1039 = vperm.xlu0 %1038, %v1019
    %v1040 = vpop.permute.xlu0 %1039
    %1043 = vset.pattern.permute.xlu0 0
    %1044 = vperm.xlu0 %1043, %v1020
    %v1045 = vpop.permute.xlu0 %1044
    %1048 = vset.pattern.permute.xlu0 0
    %1049 = vperm.xlu0 %1048, %v1035
    %v1050 = vpop.permute.xlu0 %1049
    %1053 = vset.pattern.permute.xlu0 0
    %1054 = vperm.xlu0 %1053, %v1036
    %v1055 = vpop.permute.xlu0 %1054
    %v1057 = vmul.f32 %v1040, %v660
    %v1058 = vmul.f32 %v1045, %v663
    %v1059 = vmul.f32 %v1050, %v706
    %v1060 = vmul.f32 %v1055, %v709
    %v1061 = vsel %vm719, %v1057, 0.0
    %v1062 = vsel %vm719, %v1058, 0.0
    %v1063 = vadd.f32 %v1061, %v1062
    %v1064 = vrot.slane %v1063, 4
    %v1065 = vadd.f32 %v1063, %v1064
    %v1066 = vrot.slane %v1065, 2
    %v1067 = vadd.f32 %v1065, %v1066
    %v1068 = vrot.slane %v1067, 1
    %v1069 = vadd.f32 %v1067, %v1068
    %v1070 = vsel %vm719, %v1059, 0.0
    %v1071 = vsel %vm719, %v1060, 0.0
    %v1072 = vadd.f32 %v1070, %v1071
    %v1073 = vrot.slane %v1072, 4
    %v1074 = vadd.f32 %v1072, %v1073
    %v1075 = vrot.slane %v1074, 2
    %v1076 = vadd.f32 %v1074, %v1075
    %v1077 = vrot.slane %v1076, 1
    %v1078 = vadd.f32 %v1076, %v1077
    %s1079 = sld [smem:[#allocation2]]
    %s1080 = scalar_lea.vmem %s2, %s1079
    %v1081 = vld [vmem:[%s1080] sm:$0x1]
    %s1082 = sld [smem:[#allocation2 + $0x80]]
    %s1083 = scalar_lea.vmem %s2, %s1082
    %v1084 = vld [vmem:[%s1083] sm:$0x1]
    %v1086 = vrot.slane %v1084, 7
    %vm1088 = vcmask 1040384
    %v1089 = vsel %vm1088, %v1081, %v1086
    %v1092 = vsel %vm798, %v1078, %v1069
    %1093 = vrot.lane.b32.xlu0 %v1092, 16
    %v1094 = vpop.permute.xlu0 %1093
    %1096 = vrot.lane.b32.xlu0 %v820, 48
    %v1097 = vpop.permute.xlu0 %1096
    %vm1099 = vcmask 130048
    %v1100 = vsel %vm1099, %v1089, %v1094
    %vm1101 = vcmask 392192
    %v1102 = vsel %vm1101, %v1100, %v1097
    %v1104 = vperm.slane %v869, 0
    %vm1106 = vcmask 654336
    %v1108 = vsel %vm1106, %v1102, 0
    %1110 = vmatpush.msra.mxu0 0.0
    %1111 = vmatpush.msra.mxu0 0.0
    %1112 = vmatpush.msra.mxu0 0.0
    %1113 = vmatpush.msra.mxu0 0.0
    %1114 = vmatpush.msra.mxu0 0.0
    %1115 = vmatpush.msra.mxu0 0.0
    %1116 = vmatpush.msra.mxu0 %v868
    %1117 = vmatpush.msra.mxu0 %v867
    %1118 = vmatpush.msra.mxu0 %v866
    %1119 = vmatpush.msra.mxu0 %v865
    %1120 = vmatpush.msra.mxu0 %v864
    %1121 = vmatpush.msra.mxu0 %v863
    %1122 = vmatpush.msra.mxu0 %v862
    %1123 = vmatpush.msra.mxu0 %v861
    %1124 = vmatpush.msra.mxu0 %v860
    %1125 = vmatpush.msra.mxu0 %v859
    %1126 = vmatmul.f32.gmra.mxu0 %v1108
    %v1127 = vpop.f32.mrf.mxu0
    %v1128 = vadd.f32 %v1104, %v1127
    %1129 = vdwg.mxu0
    %v1130 = vxor.u32 %v1128, 2147483648
    %v1131 = vmul.f32 %v1130, 1.442695
    %v1132 = vpow.pop %v1131
    %v1133 = vadd.f32 %v1132, 1.0
    %v1134 = vrcp.pop %v1133
    %v1135 = vmul.f32 %v1133, %v1134
    %v1136 = vsub.f32 1.0, %v1135
    %v1137 = vmul.f32 %v1134, %v1136
    %v1138 = vadd.f32 %v1134, %v1137
    %vm1139 = vweird.f32 %v1133
    %vm1140 = vweird.f32 %v1134
    %vm1141 = vmor %vm1139, %vm1140
    %v1142 = vsel %vm1141, %v1134, %v1138
    %v1143 = vand.u32 2147483647, %v1133
    %vm1144 = vcmp.eq.f32.partialorder %v1143, 8.507059e+37
    %v1145 = vand.u32 %v1133, 2147483648
    %v1146 = vor.u32 1.1754944e-38, %v1145
    %v1147 = vsel %vm1144, %v1146, %v1142
    %v1148 = vmul.f32 1.0, %v1147
    %v1149 = vtanh.pop %v1128
    %1151 = vrot.lane.b32.xlu0 %v848, 32
    %v1152 = vpop.permute.xlu0 %1151
    %v1154 = vmul.f32 %v1148, %v1152
    %1156 = vrot.lane.b32.xlu0 %v1149, 64
    %v1157 = vpop.permute.xlu0 %1156
    %v1159 = vmul.f32 %v1148, %v1157
    %1161 = vrot.lane.b32.xlu0 %v1159, 32
    %v1162 = vpop.permute.xlu0 %1161
    %v1164 = vadd.f32 %v1154, %v1162
    %v1165 = vtanh.pop %v1164
    %1167 = vrot.lane.b32.xlu0 %v1165, 64
    %v1168 = vpop.permute.xlu0 %1167
    %v1170 = vmul.f32 %v1148, %v1168
    %v1172 = vperm.slane %v874, 0
    %1175 = vrot.lane.b32.xlu0 %v1170, 32
    %v1176 = vpop.permute.xlu0 %1175
    %v1177 = vsel %vm719, %v1176, 0
    %1179 = vmatpush.msra.mxu0 0.0
    %1180 = vmatpush.msra.mxu0 0.0
    %1181 = vmatpush.msra.mxu0 0.0
    %1182 = vmatpush.msra.mxu0 0.0
    %1183 = vmatpush.msra.mxu0 0.0
    %1184 = vmatpush.msra.mxu0 0.0
    %1185 = vmatpush.msra.mxu0 0.0
    %1186 = vmatpush.msra.mxu0 0.0
    %1187 = vmatpush.msra.mxu0 0.0
    %1188 = vmatpush.msra.mxu0 0.0
    %1189 = vmatpush.msra.mxu0 0.0
    %1190 = vmatpush.msra.mxu0 0.0
    %1191 = vmatpush.msra.mxu0 %v873
    %1192 = vmatpush.msra.mxu0 %v872
    %1193 = vmatpush.msra.mxu0 %v871
    %1194 = vmatpush.msra.mxu0 %v870
    %1195 = vmatmul.f32.gmra.mxu0 %v1177
    %v1196 = vpop.f32.mrf.mxu0
    %v1197 = vadd.f32 %v1172, %v1196
    %1198 = vdwg.mxu0
    %v1200 = vrot.slane %v1197, 1
    %1202 = vst [vmem:[#allocation5] sm:$0x1] %v1197
    %1203 = vst [vmem:[#allocation5 + $0x8] sm:$0x1] %v1200
    %1204 = vmatpush.msra.mxu0 0.0
    %1205 = vmatpush.msra.mxu0 0.0
    %1206 = vmatpush.msra.mxu0 0.0
    %1207 = vmatpush.msra.mxu0 0.0
    %1208 = vmatpush.msra.mxu0 0.0
    %1209 = vmatpush.msra.mxu0 0.0
    %1210 = vmatpush.msra.mxu0 0.0
    %1211 = vmatpush.msra.mxu0 0.0
    %1212 = vmatpush.msra.mxu0 0.0
    %1213 = vmatpush.msra.mxu0 0.0
    %1214 = vmatpush.msra.mxu0 0.0
    %1215 = vmatpush.msra.mxu0 0.0
    %1216 = vmatpush.msra.mxu0 %v853
    %1217 = vmatpush.msra.mxu0 %v852
    %1218 = vmatpush.msra.mxu0 %v851
    %1219 = vmatpush.msra.mxu0 %v850
    %1220 = vmatmul.f32.gmra.mxu0 %v1177
    %v1221 = vpop.f32.mrf.mxu0
    %v1222 = vadd.f32 %v876, %v1221
    %1223 = vdwg.mxu0
    %v1225 = vrot.slane %v1222, 1
    %v1226 = vperm.slane %v1222, 0
    %v1227 = vperm.slane %v1225, 0
    %v1230 = vadd.f32 %v750, %v1226
    %v1231 = vadd.f32 %v753, %v1226
    %v1232 = vadd.f32 %v756, %v1227
    %v1233 = vadd.f32 %v759, %v1227
    %v1234 = vmax.f32 %v1230, 0.0
    %v1235 = vmax.f32 %v1231, 0.0
    %v1236 = vmax.f32 %v1232, 0.0
    %v1237 = vmax.f32 %v1233, 0.0
    %v1239 = vsel %vm719, %v1234, 0
    %v1242 = vsel %vm719, %v1235, 0
    %v1245 = vsel %vm719, %v1236, 0
    %v1248 = vsel %vm719, %v1237, 0
    %1250 = vmatpush.msra.mxu0 0.0
    %1251 = vmatpush.msra.mxu0 0.0
    %1252 = vmatpush.msra.mxu0 0.0
    %1253 = vmatpush.msra.mxu0 0.0
    %1254 = vmatpush.msra.mxu0 0.0
    %1255 = vmatpush.msra.mxu0 0.0
    %1256 = vmatpush.msra.mxu0 0.0
    %1257 = vmatpush.msra.mxu0 0.0
    %1258 = vmatpush.msra.mxu0 0.0
    %1259 = vmatpush.msra.mxu0 0.0
    %1260 = vmatpush.msra.mxu0 0.0
    %1261 = vmatpush.msra.mxu0 0.0
    %1262 = vmatpush.msra.mxu0 %v858
    %1263 = vmatpush.msra.mxu0 %v857
    %1264 = vmatpush.msra.mxu0 %v856
    %1265 = vmatpush.msra.mxu0 %v855
    %1266 = vmatmul.f32.gmra.mxu0 %v1239
    %v1267 = vpop.f32.mrf.mxu0
    %v1268 = vadd.f32 0.0, %v1267
    %1269 = vmatmul.f32.gmra.mxu0 %v1242
    %v1270 = vpop.f32.mrf.mxu0
    %v1271 = vadd.f32 0.0, %v1270
    %1272 = vmatmul.f32.gmra.mxu0 %v1245
    %v1273 = vpop.f32.mrf.mxu0
    %v1274 = vadd.f32 0.0, %v1273
    %1275 = vmatmul.f32.gmra.mxu0 %v1248
    %v1276 = vpop.f32.mrf.mxu0
    %v1277 = vadd.f32 0.0, %v1276
    %1278 = vdwg.mxu0
    %v1279 = vsel %vm956, %v1268, -inf
    %v1280 = vsel %vm956, %v1271, -inf
    %v1281 = vmax.f32 %v1279, %v1280
    %v1282 = vrot.slane %v1281, 4
    %v1283 = vmax.f32 %v1281, %v1282
    %v1284 = vrot.slane %v1283, 2
    %v1285 = vmax.f32 %v1283, %v1284
    %v1286 = vrot.slane %v1285, 1
    %v1287 = vmax.f32 %v1285, %v1286
    %v1288 = vsel %vm956, %v1274, -inf
    %v1289 = vsel %vm956, %v1277, -inf
    %v1290 = vmax.f32 %v1288, %v1289
    %v1291 = vrot.slane %v1290, 4
    %v1292 = vmax.f32 %v1290, %v1291
    %v1293 = vrot.slane %v1292, 2
    %v1294 = vmax.f32 %v1292, %v1293
    %v1295 = vrot.slane %v1294, 1
    %v1296 = vmax.f32 %v1294, %v1295
    %v1297 = vsub.f32 %v1268, %v1287
    %v1298 = vsub.f32 %v1271, %v1287
    %v1299 = vsub.f32 %v1274, %v1296
    %v1300 = vsub.f32 %v1277, %v1296
    %v1301 = vmul.f32 %v1297, 1.442695
    %v1302 = vpow.pop %v1301
    %v1303 = vmul.f32 %v1298, 1.442695
    %v1304 = vpow.pop %v1303
    %v1305 = vmul.f32 %v1299, 1.442695
    %v1306 = vpow.pop %v1305
    %v1307 = vmul.f32 %v1300, 1.442695
    %v1308 = vpow.pop %v1307
    %v1309 = vsel %vm956, %v1302, 0.0
    %v1310 = vsel %vm956, %v1304, 0.0
    %v1311 = vadd.f32 %v1309, %v1310
    %v1312 = vrot.slane %v1311, 4
    %v1313 = vadd.f32 %v1311, %v1312
    %v1314 = vrot.slane %v1313, 2
    %v1315 = vadd.f32 %v1313, %v1314
    %v1316 = vrot.slane %v1315, 1
    %v1317 = vadd.f32 %v1315, %v1316
    %v1318 = vsel %vm956, %v1306, 0.0
    %v1319 = vsel %vm956, %v1308, 0.0
    %v1320 = vadd.f32 %v1318, %v1319
    %v1321 = vrot.slane %v1320, 4
    %v1322 = vadd.f32 %v1320, %v1321
    %v1323 = vrot.slane %v1322, 2
    %v1324 = vadd.f32 %v1322, %v1323
    %v1325 = vrot.slane %v1324, 1
    %v1326 = vadd.f32 %v1324, %v1325
    %v1327 = vrcp.pop %v1317
    %v1328 = vmul.f32 %v1317, %v1327
    %v1329 = vsub.f32 1.0, %v1328
    %v1330 = vmul.f32 %v1327, %v1329
    %v1331 = vadd.f32 %v1327, %v1330
    %vm1332 = vweird.f32 %v1317
    %vm1333 = vweird.f32 %v1327
    %vm1334 = vmor %vm1332, %vm1333
    %v1335 = vsel %vm1334, %v1327, %v1331
    %v1336 = vand.u32 2147483647, %v1317
    %vm1337 = vcmp.eq.f32.partialorder %v1336, 8.507059e+37
    %v1338 = vand.u32 %v1317, 2147483648
    %v1339 = vor.u32 1.1754944e-38, %v1338
    %v1340 = vsel %vm1337, %v1339, %v1335
    %v1341 = vmul.f32 %v1302, %v1340
    %v1342 = vmul.f32 %v1304, %v1340
    %v1343 = vrcp.pop %v1326
    %v1344 = vmul.f32 %v1326, %v1343
    %v1345 = vsub.f32 1.0, %v1344
    %v1346 = vmul.f32 %v1343, %v1345
    %v1347 = vadd.f32 %v1343, %v1346
    %vm1348 = vweird.f32 %v1326
    %vm1349 = vweird.f32 %v1343
    %vm1350 = vmor %vm1348, %vm1349
    %v1351 = vsel %vm1350, %v1343, %v1347
    %v1352 = vand.u32 2147483647, %v1326
    %vm1353 = vcmp.eq.f32.partialorder %v1352, 8.507059e+37
    %v1354 = vand.u32 %v1326, 2147483648
    %v1355 = vor.u32 1.1754944e-38, %v1354
    %v1356 = vsel %vm1353, %v1355, %v1351
    %v1357 = vmul.f32 %v1306, %v1356
    %v1358 = vmul.f32 %v1308, %v1356
    %1360 = vset.pattern.permute.xlu0 0
    %1361 = vperm.xlu0 %1360, %v1341
    %v1362 = vpop.permute.xlu0 %1361
    %1365 = vset.pattern.permute.xlu0 0
    %1366 = vperm.xlu0 %1365, %v1342
    %v1367 = vpop.permute.xlu0 %1366
    %1370 = vset.pattern.permute.xlu0 0
    %1371 = vperm.xlu0 %1370, %v1357
    %v1372 = vpop.permute.xlu0 %1371
    %1375 = vset.pattern.permute.xlu0 0
    %1376 = vperm.xlu0 %1375, %v1358
    %v1377 = vpop.permute.xlu0 %1376
    %v1379 = vmul.f32 %v1362, %v660
    %v1380 = vmul.f32 %v1367, %v663
    %v1381 = vmul.f32 %v1372, %v706
    %v1382 = vmul.f32 %v1377, %v709
    %v1383 = vsel %vm719, %v1379, 0.0
    %v1384 = vsel %vm719, %v1380, 0.0
    %v1385 = vadd.f32 %v1383, %v1384
    %v1386 = vrot.slane %v1385, 4
    %v1387 = vadd.f32 %v1385, %v1386
    %v1388 = vrot.slane %v1387, 2
    %v1389 = vadd.f32 %v1387, %v1388
    %v1390 = vrot.slane %v1389, 1
    %v1391 = vadd.f32 %v1389, %v1390
    %v1392 = vsel %vm719, %v1381, 0.0
    %v1393 = vsel %vm719, %v1382, 0.0
    %v1394 = vadd.f32 %v1392, %v1393
    %v1395 = vrot.slane %v1394, 4
    %v1396 = vadd.f32 %v1394, %v1395
    %v1397 = vrot.slane %v1396, 2
    %v1398 = vadd.f32 %v1396, %v1397
    %v1399 = vrot.slane %v1398, 1
    %v1400 = vadd.f32 %v1398, %v1399
    %s1401 = sld [smem:[#allocation2 + $0x1]]
    %s1402 = scalar_lea.vmem %s2, %s1401
    %v1403 = vld [vmem:[%s1402] sm:$0x1]
    %s1404 = sld [smem:[#allocation2 + $0x81]]
    %s1405 = scalar_lea.vmem %s2, %s1404
    %v1406 = vld [vmem:[%s1405] sm:$0x1]
    %v1408 = vrot.slane %v1406, 7
    %v1410 = vsel %vm1088, %v1403, %v1408
    %v1413 = vsel %vm798, %v1400, %v1391
    %1414 = vrot.lane.b32.xlu0 %v1413, 16
    %v1415 = vpop.permute.xlu0 %1414
    %1417 = vrot.lane.b32.xlu0 %v1170, 80
    %v1418 = vpop.permute.xlu0 %1417
    %v1420 = vsel %vm1099, %v1410, %v1415
    %v1421 = vsel %vm1101, %v1420, %v1418
    %v1423 = vsel %vm1106, %v1421, 0
    %1425 = vmatpush.msra.mxu0 0.0
    %1426 = vmatpush.msra.mxu0 0.0
    %1427 = vmatpush.msra.mxu0 0.0
    %1428 = vmatpush.msra.mxu0 0.0
    %1429 = vmatpush.msra.mxu0 0.0
    %1430 = vmatpush.msra.mxu0 0.0
    %1431 = vmatpush.msra.mxu0 %v868
    %1432 = vmatpush.msra.mxu0 %v867
    %1433 = vmatpush.msra.mxu0 %v866
    %1434 = vmatpush.msra.mxu0 %v865
    %1435 = vmatpush.msra.mxu0 %v864
    %1436 = vmatpush.msra.mxu0 %v863
    %1437 = vmatpush.msra.mxu0 %v862
    %1438 = vmatpush.msra.mxu0 %v861
    %1439 = vmatpush.msra.mxu0 %v860
    %1440 = vmatpush.msra.mxu0 %v859
    %1441 = vmatmul.f32.gmra.mxu0 %v1423
    %v1442 = vpop.f32.mrf.mxu0
    %v1443 = vadd.f32 %v1104, %v1442
    %1444 = vdwg.mxu0
    %v1445 = vxor.u32 %v1443, 2147483648
    %v1446 = vmul.f32 %v1445, 1.442695
    %v1447 = vpow.pop %v1446
    %v1448 = vadd.f32 %v1447, 1.0
    %v1449 = vrcp.pop %v1448
    %v1450 = vmul.f32 %v1448, %v1449
    %v1451 = vsub.f32 1.0, %v1450
    %v1452 = vmul.f32 %v1449, %v1451
    %v1453 = vadd.f32 %v1449, %v1452
    %vm1454 = vweird.f32 %v1448
    %vm1455 = vweird.f32 %v1449
    %vm1456 = vmor %vm1454, %vm1455
    %v1457 = vsel %vm1456, %v1449, %v1453
    %v1458 = vand.u32 2147483647, %v1448
    %vm1459 = vcmp.eq.f32.partialorder %v1458, 8.507059e+37
    %v1460 = vand.u32 %v1448, 2147483648
    %v1461 = vor.u32 1.1754944e-38, %v1460
    %v1462 = vsel %vm1459, %v1461, %v1457
    %v1463 = vmul.f32 1.0, %v1462
    %v1464 = vtanh.pop %v1443
    %v1465 = vmul.f32 %v1463, %v1164
    %1467 = vrot.lane.b32.xlu0 %v1464, 64
    %v1468 = vpop.permute.xlu0 %1467
    %v1470 = vmul.f32 %v1463, %v1468
    %1472 = vrot.lane.b32.xlu0 %v1470, 32
    %v1473 = vpop.permute.xlu0 %1472
    %v1475 = vadd.f32 %v1465, %v1473
    %v1476 = vtanh.pop %v1475
    %1478 = vrot.lane.b32.xlu0 %v1476, 64
    %v1479 = vpop.permute.xlu0 %1478
    %v1481 = vmul.f32 %v1463, %v1479
    %1483 = vrot.lane.b32.xlu0 %v1481, 32
    %v1484 = vpop.permute.xlu0 %1483
    %v1485 = vsel %vm719, %v1484, 0
    %1487 = vmatpush.msra.mxu0 0.0
    %1488 = vmatpush.msra.mxu0 0.0
    %1489 = vmatpush.msra.mxu0 0.0
    %1490 = vmatpush.msra.mxu0 0.0
    %1491 = vmatpush.msra.mxu0 0.0
    %1492 = vmatpush.msra.mxu0 0.0
    %1493 = vmatpush.msra.mxu0 0.0
    %1494 = vmatpush.msra.mxu0 0.0
    %1495 = vmatpush.msra.mxu0 0.0
    %1496 = vmatpush.msra.mxu0 0.0
    %1497 = vmatpush.msra.mxu0 0.0
    %1498 = vmatpush.msra.mxu0 0.0
    %1499 = vmatpush.msra.mxu0 %v873
    %1500 = vmatpush.msra.mxu0 %v872
    %1501 = vmatpush.msra.mxu0 %v871
    %1502 = vmatpush.msra.mxu0 %v870
    %1503 = vmatmul.f32.gmra.mxu0 %v1485
    %v1504 = vpop.f32.mrf.mxu0
    %v1505 = vadd.f32 %v1172, %v1504
    %1506 = vdwg.mxu0
    %v1508 = vrot.slane %v1505, 1
    %1510 = vst [vmem:[#allocation5 + $0x1] sm:$0x1] %v1505
    %1511 = vst [vmem:[#allocation5 + $0x9] sm:$0x1] %v1508
    %1512 = vmatpush.msra.mxu0 0.0
    %1513 = vmatpush.msra.mxu0 0.0
    %1514 = vmatpush.msra.mxu0 0.0
    %1515 = vmatpush.msra.mxu0 0.0
    %1516 = vmatpush.msra.mxu0 0.0
    %1517 = vmatpush.msra.mxu0 0.0
    %1518 = vmatpush.msra.mxu0 0.0
    %1519 = vmatpush.msra.mxu0 0.0
    %1520 = vmatpush.msra.mxu0 0.0
    %1521 = vmatpush.msra.mxu0 0.0
    %1522 = vmatpush.msra.mxu0 0.0
    %1523 = vmatpush.msra.mxu0 0.0
    %1524 = vmatpush.msra.mxu0 %v853
    %1525 = vmatpush.msra.mxu0 %v852
    %1526 = vmatpush.msra.mxu0 %v851
    %1527 = vmatpush.msra.mxu0 %v850
    %1528 = vmatmul.f32.gmra.mxu0 %v1485
    %v1529 = vpop.f32.mrf.mxu0
    %v1530 = vadd.f32 %v876, %v1529
    %1531 = vdwg.mxu0
    %v1533 = vrot.slane %v1530, 1
    %v1534 = vperm.slane %v1530, 0
    %v1535 = vperm.slane %v1533, 0
    %v1538 = vadd.f32 %v750, %v1534
    %v1539 = vadd.f32 %v753, %v1534
    %v1540 = vadd.f32 %v756, %v1535
    %v1541 = vadd.f32 %v759, %v1535
    %v1542 = vmax.f32 %v1538, 0.0
    %v1543 = vmax.f32 %v1539, 0.0
    %v1544 = vmax.f32 %v1540, 0.0
    %v1545 = vmax.f32 %v1541, 0.0
    %v1547 = vsel %vm719, %v1542, 0
    %v1550 = vsel %vm719, %v1543, 0
    %v1553 = vsel %vm719, %v1544, 0
    %v1556 = vsel %vm719, %v1545, 0
    %1558 = vmatpush.msra.mxu0 0.0
    %1559 = vmatpush.msra.mxu0 0.0
    %1560 = vmatpush.msra.mxu0 0.0
    %1561 = vmatpush.msra.mxu0 0.0
    %1562 = vmatpush.msra.mxu0 0.0
    %1563 = vmatpush.msra.mxu0 0.0
    %1564 = vmatpush.msra.mxu0 0.0
    %1565 = vmatpush.msra.mxu0 0.0
    %1566 = vmatpush.msra.mxu0 0.0
    %1567 = vmatpush.msra.mxu0 0.0
    %1568 = vmatpush.msra.mxu0 0.0
    %1569 = vmatpush.msra.mxu0 0.0
    %1570 = vmatpush.msra.mxu0 %v858
    %1571 = vmatpush.msra.mxu0 %v857
    %1572 = vmatpush.msra.mxu0 %v856
    %1573 = vmatpush.msra.mxu0 %v855
    %1574 = vmatmul.f32.gmra.mxu0 %v1547
    %v1575 = vpop.f32.mrf.mxu0
    %v1576 = vadd.f32 0.0, %v1575
    %1577 = vmatmul.f32.gmra.mxu0 %v1550
    %v1578 = vpop.f32.mrf.mxu0
    %v1579 = vadd.f32 0.0, %v1578
    %1580 = vmatmul.f32.gmra.mxu0 %v1553
    %v1581 = vpop.f32.mrf.mxu0
    %v1582 = vadd.f32 0.0, %v1581
    %1583 = vmatmul.f32.gmra.mxu0 %v1556
    %v1584 = vpop.f32.mrf.mxu0
    %v1585 = vadd.f32 0.0, %v1584
    %1586 = vdwg.mxu0
    %v1587 = vsel %vm956, %v1576, -inf
    %v1588 = vsel %vm956, %v1579, -inf
    %v1589 = vmax.f32 %v1587, %v1588
    %v1590 = vrot.slane %v1589, 4
    %v1591 = vmax.f32 %v1589, %v1590
    %v1592 = vrot.slane %v1591, 2
    %v1593 = vmax.f32 %v1591, %v1592
    %v1594 = vrot.slane %v1593, 1
    %v1595 = vmax.f32 %v1593, %v1594
    %v1596 = vsel %vm956, %v1582, -inf
    %v1597 = vsel %vm956, %v1585, -inf
    %v1598 = vmax.f32 %v1596, %v1597
    %v1599 = vrot.slane %v1598, 4
    %v1600 = vmax.f32 %v1598, %v1599
    %v1601 = vrot.slane %v1600, 2
    %v1602 = vmax.f32 %v1600, %v1601
    %v1603 = vrot.slane %v1602, 1
    %v1604 = vmax.f32 %v1602, %v1603
    %v1605 = vsub.f32 %v1576, %v1595
    %v1606 = vsub.f32 %v1579, %v1595
    %v1607 = vsub.f32 %v1582, %v1604
    %v1608 = vsub.f32 %v1585, %v1604
    %v1609 = vmul.f32 %v1605, 1.442695
    %v1610 = vpow.pop %v1609
    %v1611 = vmul.f32 %v1606, 1.442695
    %v1612 = vpow.pop %v1611
    %v1613 = vmul.f32 %v1607, 1.442695
    %v1614 = vpow.pop %v1613
    %v1615 = vmul.f32 %v1608, 1.442695
    %v1616 = vpow.pop %v1615
    %v1617 = vsel %vm956, %v1610, 0.0
    %v1618 = vsel %vm956, %v1612, 0.0
    %v1619 = vadd.f32 %v1617, %v1618
    %v1620 = vrot.slane %v1619, 4
    %v1621 = vadd.f32 %v1619, %v1620
    %v1622 = vrot.slane %v1621, 2
    %v1623 = vadd.f32 %v1621, %v1622
    %v1624 = vrot.slane %v1623, 1
    %v1625 = vadd.f32 %v1623, %v1624
    %v1626 = vsel %vm956, %v1614, 0.0
    %v1627 = vsel %vm956, %v1616, 0.0
    %v1628 = vadd.f32 %v1626, %v1627
    %v1629 = vrot.slane %v1628, 4
    %v1630 = vadd.f32 %v1628, %v1629
    %v1631 = vrot.slane %v1630, 2
    %v1632 = vadd.f32 %v1630, %v1631
    %v1633 = vrot.slane %v1632, 1
    %v1634 = vadd.f32 %v1632, %v1633
    %v1635 = vrcp.pop %v1625
    %v1636 = vmul.f32 %v1625, %v1635
    %v1637 = vsub.f32 1.0, %v1636
    %v1638 = vmul.f32 %v1635, %v1637
    %v1639 = vadd.f32 %v1635, %v1638
    %vm1640 = vweird.f32 %v1625
    %vm1641 = vweird.f32 %v1635
    %vm1642 = vmor %vm1640, %vm1641
    %v1643 = vsel %vm1642, %v1635, %v1639
    %v1644 = vand.u32 2147483647, %v1625
    %vm1645 = vcmp.eq.f32.partialorder %v1644, 8.507059e+37
    %v1646 = vand.u32 %v1625, 2147483648
    %v1647 = vor.u32 1.1754944e-38, %v1646
    %v1648 = vsel %vm1645, %v1647, %v1643
    %v1649 = vmul.f32 %v1610, %v1648
    %v1650 = vmul.f32 %v1612, %v1648
    %v1651 = vrcp.pop %v1634
    %v1652 = vmul.f32 %v1634, %v1651
    %v1653 = vsub.f32 1.0, %v1652
    %v1654 = vmul.f32 %v1651, %v1653
    %v1655 = vadd.f32 %v1651, %v1654
    %vm1656 = vweird.f32 %v1634
    %vm1657 = vweird.f32 %v1651
    %vm1658 = vmor %vm1656, %vm1657
    %v1659 = vsel %vm1658, %v1651, %v1655
    %v1660 = vand.u32 2147483647, %v1634
    %vm1661 = vcmp.eq.f32.partialorder %v1660, 8.507059e+37
    %v1662 = vand.u32 %v1634, 2147483648
    %v1663 = vor.u32 1.1754944e-38, %v1662
    %v1664 = vsel %vm1661, %v1663, %v1659
    %v1665 = vmul.f32 %v1614, %v1664
    %v1666 = vmul.f32 %v1616, %v1664
    %1668 = vset.pattern.permute.xlu0 0
    %1669 = vperm.xlu0 %1668, %v1649
    %v1670 = vpop.permute.xlu0 %1669
    %1673 = vset.pattern.permute.xlu0 0
    %1674 = vperm.xlu0 %1673, %v1650
    %v1675 = vpop.permute.xlu0 %1674
    %1678 = vset.pattern.permute.xlu0 0
    %1679 = vperm.xlu0 %1678, %v1665
    %v1680 = vpop.permute.xlu0 %1679
    %1683 = vset.pattern.permute.xlu0 0
    %1684 = vperm.xlu0 %1683, %v1666
    %v1685 = vpop.permute.xlu0 %1684
    %v1687 = vmul.f32 %v1670, %v660
    %v1688 = vmul.f32 %v1675, %v663
    %v1689 = vmul.f32 %v1680, %v706
    %v1690 = vmul.f32 %v1685, %v709
    %v1691 = vsel %vm719, %v1687, 0.0
    %v1692 = vsel %vm719, %v1688, 0.0
    %v1693 = vadd.f32 %v1691, %v1692
    %v1694 = vrot.slane %v1693, 4
    %v1695 = vadd.f32 %v1693, %v1694
    %v1696 = vrot.slane %v1695, 2
    %v1697 = vadd.f32 %v1695, %v1696
    %v1698 = vrot.slane %v1697, 1
    %v1699 = vadd.f32 %v1697, %v1698
    %v1700 = vsel %vm719, %v1689, 0.0
    %v1701 = vsel %vm719, %v1690, 0.0
    %v1702 = vadd.f32 %v1700, %v1701
    %v1703 = vrot.slane %v1702, 4
    %v1704 = vadd.f32 %v1702, %v1703
    %v1705 = vrot.slane %v1704, 2
    %v1706 = vadd.f32 %v1704, %v1705
    %v1707 = vrot.slane %v1706, 1
    %v1708 = vadd.f32 %v1706, %v1707
    %s1709 = sld [smem:[#allocation2 + $0x2]]
    %s1710 = scalar_lea.vmem %s2, %s1709
    %v1711 = vld [vmem:[%s1710] sm:$0x1]
    %s1712 = sld [smem:[#allocation2 + $0x82]]
    %s1713 = scalar_lea.vmem %s2, %s1712
    %v1714 = vld [vmem:[%s1713] sm:$0x1]
    %v1716 = vrot.slane %v1714, 7
    %v1718 = vsel %vm1088, %v1711, %v1716
    %v1721 = vsel %vm798, %v1708, %v1699
    %1722 = vrot.lane.b32.xlu0 %v1721, 16
    %v1723 = vpop.permute.xlu0 %1722
    %1725 = vrot.lane.b32.xlu0 %v1481, 80
    %v1726 = vpop.permute.xlu0 %1725
    %v1728 = vsel %vm1099, %v1718, %v1723
    %v1729 = vsel %vm1101, %v1728, %v1726
    %v1731 = vsel %vm1106, %v1729, 0
    %1733 = vmatpush.msra.mxu0 0.0
    %1734 = vmatpush.msra.mxu0 0.0
    %1735 = vmatpush.msra.mxu0 0.0
    %1736 = vmatpush.msra.mxu0 0.0
    %1737 = vmatpush.msra.mxu0 0.0
    %1738 = vmatpush.msra.mxu0 0.0
    %1739 = vmatpush.msra.mxu0 %v868
    %1740 = vmatpush.msra.mxu0 %v867
    %1741 = vmatpush.msra.mxu0 %v866
    %1742 = vmatpush.msra.mxu0 %v865
    %1743 = vmatpush.msra.mxu0 %v864
    %1744 = vmatpush.msra.mxu0 %v863
    %1745 = vmatpush.msra.mxu0 %v862
    %1746 = vmatpush.msra.mxu0 %v861
    %1747 = vmatpush.msra.mxu0 %v860
    %1748 = vmatpush.msra.mxu0 %v859
    %1749 = vmatmul.f32.gmra.mxu0 %v1731
    %v1750 = vpop.f32.mrf.mxu0
    %v1751 = vadd.f32 %v1104, %v1750
    %1752 = vdwg.mxu0
    %v1753 = vxor.u32 %v1751, 2147483648
    %v1754 = vmul.f32 %v1753, 1.442695
    %v1755 = vpow.pop %v1754
    %v1756 = vadd.f32 %v1755, 1.0
    %v1757 = vrcp.pop %v1756
    %v1758 = vmul.f32 %v1756, %v1757
    %v1759 = vsub.f32 1.0, %v1758
    %v1760 = vmul.f32 %v1757, %v1759
    %v1761 = vadd.f32 %v1757, %v1760
    %vm1762 = vweird.f32 %v1756
    %vm1763 = vweird.f32 %v1757
    %vm1764 = vmor %vm1762, %vm1763
    %v1765 = vsel %vm1764, %v1757, %v1761
    %v1766 = vand.u32 2147483647, %v1756
    %vm1767 = vcmp.eq.f32.partialorder %v1766, 8.507059e+37
    %v1768 = vand.u32 %v1756, 2147483648
    %v1769 = vor.u32 1.1754944e-38, %v1768
    %v1770 = vsel %vm1767, %v1769, %v1765
    %v1771 = vmul.f32 1.0, %v1770
    %v1772 = vtanh.pop %v1751
    %v1773 = vmul.f32 %v1771, %v1475
    %1775 = vrot.lane.b32.xlu0 %v1772, 64
    %v1776 = vpop.permute.xlu0 %1775
    %v1778 = vmul.f32 %v1771, %v1776
    %1780 = vrot.lane.b32.xlu0 %v1778, 32
    %v1781 = vpop.permute.xlu0 %1780
    %v1783 = vadd.f32 %v1773, %v1781
    %v1784 = vtanh.pop %v1783
    %1786 = vrot.lane.b32.xlu0 %v1784, 64
    %v1787 = vpop.permute.xlu0 %1786
    %v1789 = vmul.f32 %v1771, %v1787
    %1791 = vrot.lane.b32.xlu0 %v1789, 32
    %v1792 = vpop.permute.xlu0 %1791
    %v1793 = vsel %vm719, %v1792, 0
    %1795 = vmatpush.msra.mxu0 0.0
    %1796 = vmatpush.msra.mxu0 0.0
    %1797 = vmatpush.msra.mxu0 0.0
    %1798 = vmatpush.msra.mxu0 0.0
    %1799 = vmatpush.msra.mxu0 0.0
    %1800 = vmatpush.msra.mxu0 0.0
    %1801 = vmatpush.msra.mxu0 0.0
    %1802 = vmatpush.msra.mxu0 0.0
    %1803 = vmatpush.msra.mxu0 0.0
    %1804 = vmatpush.msra.mxu0 0.0
    %1805 = vmatpush.msra.mxu0 0.0
    %1806 = vmatpush.msra.mxu0 0.0
    %1807 = vmatpush.msra.mxu0 %v873
    %1808 = vmatpush.msra.mxu0 %v872
    %1809 = vmatpush.msra.mxu0 %v871
    %1810 = vmatpush.msra.mxu0 %v870
    %1811 = vmatmul.f32.gmra.mxu0 %v1793
    %v1812 = vpop.f32.mrf.mxu0
    %v1813 = vadd.f32 %v1172, %v1812
    %1814 = vdwg.mxu0
    %v1816 = vrot.slane %v1813, 1
    %1818 = vst [vmem:[#allocation5 + $0x2] sm:$0x1] %v1813
    %1819 = vst [vmem:[#allocation5 + $0xa] sm:$0x1] %v1816
    %1820 = vmatpush.msra.mxu0 0.0
    %1821 = vmatpush.msra.mxu0 0.0
    %1822 = vmatpush.msra.mxu0 0.0
    %1823 = vmatpush.msra.mxu0 0.0
    %1824 = vmatpush.msra.mxu0 0.0
    %1825 = vmatpush.msra.mxu0 0.0
    %1826 = vmatpush.msra.mxu0 0.0
    %1827 = vmatpush.msra.mxu0 0.0
    %1828 = vmatpush.msra.mxu0 0.0
    %1829 = vmatpush.msra.mxu0 0.0
    %1830 = vmatpush.msra.mxu0 0.0
    %1831 = vmatpush.msra.mxu0 0.0
    %1832 = vmatpush.msra.mxu0 %v853
    %1833 = vmatpush.msra.mxu0 %v852
    %1834 = vmatpush.msra.mxu0 %v851
    %1835 = vmatpush.msra.mxu0 %v850
    %1836 = vmatmul.f32.gmra.mxu0 %v1793
    %v1837 = vpop.f32.mrf.mxu0
    %v1838 = vadd.f32 %v876, %v1837
    %1839 = vdwg.mxu0
    %v1841 = vrot.slane %v1838, 1
    %v1842 = vperm.slane %v1838, 0
    %v1843 = vperm.slane %v1841, 0
    %v1846 = vadd.f32 %v750, %v1842
    %v1847 = vadd.f32 %v753, %v1842
    %v1848 = vadd.f32 %v756, %v1843
    %v1849 = vadd.f32 %v759, %v1843
    %v1850 = vmax.f32 %v1846, 0.0
    %v1851 = vmax.f32 %v1847, 0.0
    %v1852 = vmax.f32 %v1848, 0.0
    %v1853 = vmax.f32 %v1849, 0.0
    %v1855 = vsel %vm719, %v1850, 0
    %v1858 = vsel %vm719, %v1851, 0
    %v1861 = vsel %vm719, %v1852, 0
    %v1864 = vsel %vm719, %v1853, 0
    %1866 = vmatpush.msra.mxu0 0.0
    %1867 = vmatpush.msra.mxu0 0.0
    %1868 = vmatpush.msra.mxu0 0.0
    %1869 = vmatpush.msra.mxu0 0.0
    %1870 = vmatpush.msra.mxu0 0.0
    %1871 = vmatpush.msra.mxu0 0.0
    %1872 = vmatpush.msra.mxu0 0.0
    %1873 = vmatpush.msra.mxu0 0.0
    %1874 = vmatpush.msra.mxu0 0.0
    %1875 = vmatpush.msra.mxu0 0.0
    %1876 = vmatpush.msra.mxu0 0.0
    %1877 = vmatpush.msra.mxu0 0.0
    %1878 = vmatpush.msra.mxu0 %v858
    %1879 = vmatpush.msra.mxu0 %v857
    %1880 = vmatpush.msra.mxu0 %v856
    %1881 = vmatpush.msra.mxu0 %v855
    %1882 = vmatmul.f32.gmra.mxu0 %v1855
    %v1883 = vpop.f32.mrf.mxu0
    %v1884 = vadd.f32 0.0, %v1883
    %1885 = vmatmul.f32.gmra.mxu0 %v1858
    %v1886 = vpop.f32.mrf.mxu0
    %v1887 = vadd.f32 0.0, %v1886
    %1888 = vmatmul.f32.gmra.mxu0 %v1861
    %v1889 = vpop.f32.mrf.mxu0
    %v1890 = vadd.f32 0.0, %v1889
    %1891 = vmatmul.f32.gmra.mxu0 %v1864
    %v1892 = vpop.f32.mrf.mxu0
    %v1893 = vadd.f32 0.0, %v1892
    %1894 = vdwg.mxu0
    %v1895 = vsel %vm956, %v1884, -inf
    %v1896 = vsel %vm956, %v1887, -inf
    %v1897 = vmax.f32 %v1895, %v1896
    %v1898 = vrot.slane %v1897, 4
    %v1899 = vmax.f32 %v1897, %v1898
    %v1900 = vrot.slane %v1899, 2
    %v1901 = vmax.f32 %v1899, %v1900
    %v1902 = vrot.slane %v1901, 1
    %v1903 = vmax.f32 %v1901, %v1902
    %v1904 = vsel %vm956, %v1890, -inf
    %v1905 = vsel %vm956, %v1893, -inf
    %v1906 = vmax.f32 %v1904, %v1905
    %v1907 = vrot.slane %v1906, 4
    %v1908 = vmax.f32 %v1906, %v1907
    %v1909 = vrot.slane %v1908, 2
    %v1910 = vmax.f32 %v1908, %v1909
    %v1911 = vrot.slane %v1910, 1
    %v1912 = vmax.f32 %v1910, %v1911
    %v1913 = vsub.f32 %v1884, %v1903
    %v1914 = vsub.f32 %v1887, %v1903
    %v1915 = vsub.f32 %v1890, %v1912
    %v1916 = vsub.f32 %v1893, %v1912
    %v1917 = vmul.f32 %v1913, 1.442695
    %v1918 = vpow.pop %v1917
    %v1919 = vmul.f32 %v1914, 1.442695
    %v1920 = vpow.pop %v1919
    %v1921 = vmul.f32 %v1915, 1.442695
    %v1922 = vpow.pop %v1921
    %v1923 = vmul.f32 %v1916, 1.442695
    %v1924 = vpow.pop %v1923
    %v1925 = vsel %vm956, %v1918, 0.0
    %v1926 = vsel %vm956, %v1920, 0.0
    %v1927 = vadd.f32 %v1925, %v1926
    %v1928 = vrot.slane %v1927, 4
    %v1929 = vadd.f32 %v1927, %v1928
    %v1930 = vrot.slane %v1929, 2
    %v1931 = vadd.f32 %v1929, %v1930
    %v1932 = vrot.slane %v1931, 1
    %v1933 = vadd.f32 %v1931, %v1932
    %v1934 = vsel %vm956, %v1922, 0.0
    %v1935 = vsel %vm956, %v1924, 0.0
    %v1936 = vadd.f32 %v1934, %v1935
    %v1937 = vrot.slane %v1936, 4
    %v1938 = vadd.f32 %v1936, %v1937
    %v1939 = vrot.slane %v1938, 2
    %v1940 = vadd.f32 %v1938, %v1939
    %v1941 = vrot.slane %v1940, 1
    %v1942 = vadd.f32 %v1940, %v1941
    %v1943 = vrcp.pop %v1933
    %v1944 = vmul.f32 %v1933, %v1943
    %v1945 = vsub.f32 1.0, %v1944
    %v1946 = vmul.f32 %v1943, %v1945
    %v1947 = vadd.f32 %v1943, %v1946
    %vm1948 = vweird.f32 %v1933
    %vm1949 = vweird.f32 %v1943
    %vm1950 = vmor %vm1948, %vm1949
    %v1951 = vsel %vm1950, %v1943, %v1947
    %v1952 = vand.u32 2147483647, %v1933
    %vm1953 = vcmp.eq.f32.partialorder %v1952, 8.507059e+37
    %v1954 = vand.u32 %v1933, 2147483648
    %v1955 = vor.u32 1.1754944e-38, %v1954
    %v1956 = vsel %vm1953, %v1955, %v1951
    %v1957 = vmul.f32 %v1918, %v1956
    %v1958 = vmul.f32 %v1920, %v1956
    %v1959 = vrcp.pop %v1942
    %v1960 = vmul.f32 %v1942, %v1959
    %v1961 = vsub.f32 1.0, %v1960
    %v1962 = vmul.f32 %v1959, %v1961
    %v1963 = vadd.f32 %v1959, %v1962
    %vm1964 = vweird.f32 %v1942
    %vm1965 = vweird.f32 %v1959
    %vm1966 = vmor %vm1964, %vm1965
    %v1967 = vsel %vm1966, %v1959, %v1963
    %v1968 = vand.u32 2147483647, %v1942
    %vm1969 = vcmp.eq.f32.partialorder %v1968, 8.507059e+37
    %v1970 = vand.u32 %v1942, 2147483648
    %v1971 = vor.u32 1.1754944e-38, %v1970
    %v1972 = vsel %vm1969, %v1971, %v1967
    %v1973 = vmul.f32 %v1922, %v1972
    %v1974 = vmul.f32 %v1924, %v1972
    %1976 = vset.pattern.permute.xlu0 0
    %1977 = vperm.xlu0 %1976, %v1957
    %v1978 = vpop.permute.xlu0 %1977
    %1981 = vset.pattern.permute.xlu0 0
    %1982 = vperm.xlu0 %1981, %v1958
    %v1983 = vpop.permute.xlu0 %1982
    %1986 = vset.pattern.permute.xlu0 0
    %1987 = vperm.xlu0 %1986, %v1973
    %v1988 = vpop.permute.xlu0 %1987
    %1991 = vset.pattern.permute.xlu0 0
    %1992 = vperm.xlu0 %1991, %v1974
    %v1993 = vpop.permute.xlu0 %1992
    %v1995 = vmul.f32 %v1978, %v660
    %v1996 = vmul.f32 %v1983, %v663
    %v1997 = vmul.f32 %v1988, %v706
    %v1998 = vmul.f32 %v1993, %v709
    %v1999 = vsel %vm719, %v1995, 0.0
    %v2000 = vsel %vm719, %v1996, 0.0
    %v2001 = vadd.f32 %v1999, %v2000
    %v2002 = vrot.slane %v2001, 4
    %v2003 = vadd.f32 %v2001, %v2002
    %v2004 = vrot.slane %v2003, 2
    %v2005 = vadd.f32 %v2003, %v2004
    %v2006 = vrot.slane %v2005, 1
    %v2007 = vadd.f32 %v2005, %v2006
    %v2008 = vsel %vm719, %v1997, 0.0
    %v2009 = vsel %vm719, %v1998, 0.0
    %v2010 = vadd.f32 %v2008, %v2009
    %v2011 = vrot.slane %v2010, 4
    %v2012 = vadd.f32 %v2010, %v2011
    %v2013 = vrot.slane %v2012, 2
    %v2014 = vadd.f32 %v2012, %v2013
    %v2015 = vrot.slane %v2014, 1
    %v2016 = vadd.f32 %v2014, %v2015
    %s2017 = sld [smem:[#allocation2 + $0x3]]
    %s2018 = scalar_lea.vmem %s2, %s2017
    %v2019 = vld [vmem:[%s2018] sm:$0x1]
    %s2020 = sld [smem:[#allocation2 + $0x83]]
    %s2021 = scalar_lea.vmem %s2, %s2020
    %v2022 = vld [vmem:[%s2021] sm:$0x1]
    %v2024 = vrot.slane %v2022, 7
    %v2026 = vsel %vm1088, %v2019, %v2024
    %v2029 = vsel %vm798, %v2016, %v2007
    %2030 = vrot.lane.b32.xlu0 %v2029, 16
    %v2031 = vpop.permute.xlu0 %2030
    %2033 = vrot.lane.b32.xlu0 %v1789, 80
    %v2034 = vpop.permute.xlu0 %2033
    %v2036 = vsel %vm1099, %v2026, %v2031
    %v2037 = vsel %vm1101, %v2036, %v2034
    %v2039 = vsel %vm1106, %v2037, 0
    %2041 = vmatpush.msra.mxu0 0.0
    %2042 = vmatpush.msra.mxu0 0.0
    %2043 = vmatpush.msra.mxu0 0.0
    %2044 = vmatpush.msra.mxu0 0.0
    %2045 = vmatpush.msra.mxu0 0.0
    %2046 = vmatpush.msra.mxu0 0.0
    %2047 = vmatpush.msra.mxu0 %v868
    %2048 = vmatpush.msra.mxu0 %v867
    %2049 = vmatpush.msra.mxu0 %v866
    %2050 = vmatpush.msra.mxu0 %v865
    %2051 = vmatpush.msra.mxu0 %v864
    %2052 = vmatpush.msra.mxu0 %v863
    %2053 = vmatpush.msra.mxu0 %v862
    %2054 = vmatpush.msra.mxu0 %v861
    %2055 = vmatpush.msra.mxu0 %v860
    %2056 = vmatpush.msra.mxu0 %v859
    %2057 = vmatmul.f32.gmra.mxu0 %v2039
    %v2058 = vpop.f32.mrf.mxu0
    %v2059 = vadd.f32 %v1104, %v2058
    %2060 = vdwg.mxu0
    %v2061 = vxor.u32 %v2059, 2147483648
    %v2062 = vmul.f32 %v2061, 1.442695
    %v2063 = vpow.pop %v2062
    %v2064 = vadd.f32 %v2063, 1.0
    %v2065 = vrcp.pop %v2064
    %v2066 = vmul.f32 %v2064, %v2065
    %v2067 = vsub.f32 1.0, %v2066
    %v2068 = vmul.f32 %v2065, %v2067
    %v2069 = vadd.f32 %v2065, %v2068
    %vm2070 = vweird.f32 %v2064
    %vm2071 = vweird.f32 %v2065
    %vm2072 = vmor %vm2070, %vm2071
    %v2073 = vsel %vm2072, %v2065, %v2069
    %v2074 = vand.u32 2147483647, %v2064
    %vm2075 = vcmp.eq.f32.partialorder %v2074, 8.507059e+37
    %v2076 = vand.u32 %v2064, 2147483648
    %v2077 = vor.u32 1.1754944e-38, %v2076
    %v2078 = vsel %vm2075, %v2077, %v2073
    %v2079 = vmul.f32 1.0, %v2078
    %v2080 = vtanh.pop %v2059
    %v2081 = vmul.f32 %v2079, %v1783
    %2083 = vrot.lane.b32.xlu0 %v2080, 64
    %v2084 = vpop.permute.xlu0 %2083
    %v2086 = vmul.f32 %v2079, %v2084
    %2088 = vrot.lane.b32.xlu0 %v2086, 32
    %v2089 = vpop.permute.xlu0 %2088
    %v2091 = vadd.f32 %v2081, %v2089
    %v2092 = vtanh.pop %v2091
    %2094 = vrot.lane.b32.xlu0 %v2092, 64
    %v2095 = vpop.permute.xlu0 %2094
    %v2097 = vmul.f32 %v2079, %v2095
    %2099 = vrot.lane.b32.xlu0 %v2097, 32
    %v2100 = vpop.permute.xlu0 %2099
    %v2101 = vsel %vm719, %v2100, 0
    %2103 = vmatpush.msra.mxu0 0.0
    %2104 = vmatpush.msra.mxu0 0.0
    %2105 = vmatpush.msra.mxu0 0.0
    %2106 = vmatpush.msra.mxu0 0.0
    %2107 = vmatpush.msra.mxu0 0.0
    %2108 = vmatpush.msra.mxu0 0.0
    %2109 = vmatpush.msra.mxu0 0.0
    %2110 = vmatpush.msra.mxu0 0.0
    %2111 = vmatpush.msra.mxu0 0.0
    %2112 = vmatpush.msra.mxu0 0.0
    %2113 = vmatpush.msra.mxu0 0.0
    %2114 = vmatpush.msra.mxu0 0.0
    %2115 = vmatpush.msra.mxu0 %v873
    %2116 = vmatpush.msra.mxu0 %v872
    %2117 = vmatpush.msra.mxu0 %v871
    %2118 = vmatpush.msra.mxu0 %v870
    %2119 = vmatmul.f32.gmra.mxu0 %v2101
    %v2120 = vpop.f32.mrf.mxu0
    %v2121 = vadd.f32 %v1172, %v2120
    %2122 = vdwg.mxu0
    %v2124 = vrot.slane %v2121, 1
    %2126 = vst [vmem:[#allocation5 + $0x3] sm:$0x1] %v2121
    %2127 = vst [vmem:[#allocation5 + $0xb] sm:$0x1] %v2124
    %2128 = vmatpush.msra.mxu0 0.0
    %2129 = vmatpush.msra.mxu0 0.0
    %2130 = vmatpush.msra.mxu0 0.0
    %2131 = vmatpush.msra.mxu0 0.0
    %2132 = vmatpush.msra.mxu0 0.0
    %2133 = vmatpush.msra.mxu0 0.0
    %2134 = vmatpush.msra.mxu0 0.0
    %2135 = vmatpush.msra.mxu0 0.0
    %2136 = vmatpush.msra.mxu0 0.0
    %2137 = vmatpush.msra.mxu0 0.0
    %2138 = vmatpush.msra.mxu0 0.0
    %2139 = vmatpush.msra.mxu0 0.0
    %2140 = vmatpush.msra.mxu0 %v853
    %2141 = vmatpush.msra.mxu0 %v852
    %2142 = vmatpush.msra.mxu0 %v851
    %2143 = vmatpush.msra.mxu0 %v850
    %2144 = vmatmul.f32.gmra.mxu0 %v2101
    %v2145 = vpop.f32.mrf.mxu0
    %v2146 = vadd.f32 %v876, %v2145
    %2147 = vdwg.mxu0
    %v2149 = vrot.slane %v2146, 1
    %v2150 = vperm.slane %v2146, 0
    %v2151 = vperm.slane %v2149, 0
    %v2154 = vadd.f32 %v750, %v2150
    %v2155 = vadd.f32 %v753, %v2150
    %v2156 = vadd.f32 %v756, %v2151
    %v2157 = vadd.f32 %v759, %v2151
    %v2158 = vmax.f32 %v2154, 0.0
    %v2159 = vmax.f32 %v2155, 0.0
    %v2160 = vmax.f32 %v2156, 0.0
    %v2161 = vmax.f32 %v2157, 0.0
    %v2163 = vsel %vm719, %v2158, 0
    %v2166 = vsel %vm719, %v2159, 0
    %v2169 = vsel %vm719, %v2160, 0
    %v2172 = vsel %vm719, %v2161, 0
    %2174 = vmatpush.msra.mxu0 0.0
    %2175 = vmatpush.msra.mxu0 0.0
    %2176 = vmatpush.msra.mxu0 0.0
    %2177 = vmatpush.msra.mxu0 0.0
    %2178 = vmatpush.msra.mxu0 0.0
    %2179 = vmatpush.msra.mxu0 0.0
    %2180 = vmatpush.msra.mxu0 0.0
    %2181 = vmatpush.msra.mxu0 0.0
    %2182 = vmatpush.msra.mxu0 0.0
    %2183 = vmatpush.msra.mxu0 0.0
    %2184 = vmatpush.msra.mxu0 0.0
    %2185 = vmatpush.msra.mxu0 0.0
    %2186 = vmatpush.msra.mxu0 %v858
    %2187 = vmatpush.msra.mxu0 %v857
    %2188 = vmatpush.msra.mxu0 %v856
    %2189 = vmatpush.msra.mxu0 %v855
    %2190 = vmatmul.f32.gmra.mxu0 %v2163
    %v2191 = vpop.f32.mrf.mxu0
    %v2192 = vadd.f32 0.0, %v2191
    %2193 = vmatmul.f32.gmra.mxu0 %v2166
    %v2194 = vpop.f32.mrf.mxu0
    %v2195 = vadd.f32 0.0, %v2194
    %2196 = vmatmul.f32.gmra.mxu0 %v2169
    %v2197 = vpop.f32.mrf.mxu0
    %v2198 = vadd.f32 0.0, %v2197
    %2199 = vmatmul.f32.gmra.mxu0 %v2172
    %v2200 = vpop.f32.mrf.mxu0
    %v2201 = vadd.f32 0.0, %v2200
    %2202 = vdwg.mxu0
    %v2203 = vsel %vm956, %v2192, -inf
    %v2204 = vsel %vm956, %v2195, -inf
    %v2205 = vmax.f32 %v2203, %v2204
    %v2206 = vrot.slane %v2205, 4
    %v2207 = vmax.f32 %v2205, %v2206
    %v2208 = vrot.slane %v2207, 2
    %v2209 = vmax.f32 %v2207, %v2208
    %v2210 = vrot.slane %v2209, 1
    %v2211 = vmax.f32 %v2209, %v2210
    %v2212 = vsel %vm956, %v2198, -inf
    %v2213 = vsel %vm956, %v2201, -inf
    %v2214 = vmax.f32 %v2212, %v2213
    %v2215 = vrot.slane %v2214, 4
    %v2216 = vmax.f32 %v2214, %v2215
    %v2217 = vrot.slane %v2216, 2
    %v2218 = vmax.f32 %v2216, %v2217
    %v2219 = vrot.slane %v2218, 1
    %v2220 = vmax.f32 %v2218, %v2219
    %v2221 = vsub.f32 %v2192, %v2211
    %v2222 = vsub.f32 %v2195, %v2211
    %v2223 = vsub.f32 %v2198, %v2220
    %v2224 = vsub.f32 %v2201, %v2220
    %v2225 = vmul.f32 %v2221, 1.442695
    %v2226 = vpow.pop %v2225
    %v2227 = vmul.f32 %v2222, 1.442695
    %v2228 = vpow.pop %v2227
    %v2229 = vmul.f32 %v2223, 1.442695
    %v2230 = vpow.pop %v2229
    %v2231 = vmul.f32 %v2224, 1.442695
    %v2232 = vpow.pop %v2231
    %v2233 = vsel %vm956, %v2226, 0.0
    %v2234 = vsel %vm956, %v2228, 0.0
    %v2235 = vadd.f32 %v2233, %v2234
    %v2236 = vrot.slane %v2235, 4
    %v2237 = vadd.f32 %v2235, %v2236
    %v2238 = vrot.slane %v2237, 2
    %v2239 = vadd.f32 %v2237, %v2238
    %v2240 = vrot.slane %v2239, 1
    %v2241 = vadd.f32 %v2239, %v2240
    %v2242 = vsel %vm956, %v2230, 0.0
    %v2243 = vsel %vm956, %v2232, 0.0
    %v2244 = vadd.f32 %v2242, %v2243
    %v2245 = vrot.slane %v2244, 4
    %v2246 = vadd.f32 %v2244, %v2245
    %v2247 = vrot.slane %v2246, 2
    %v2248 = vadd.f32 %v2246, %v2247
    %v2249 = vrot.slane %v2248, 1
    %v2250 = vadd.f32 %v2248, %v2249
    %v2251 = vrcp.pop %v2241
    %v2252 = vmul.f32 %v2241, %v2251
    %v2253 = vsub.f32 1.0, %v2252
    %v2254 = vmul.f32 %v2251, %v2253
    %v2255 = vadd.f32 %v2251, %v2254
    %vm2256 = vweird.f32 %v2241
    %vm2257 = vweird.f32 %v2251
    %vm2258 = vmor %vm2256, %vm2257
    %v2259 = vsel %vm2258, %v2251, %v2255
    %v2260 = vand.u32 2147483647, %v2241
    %vm2261 = vcmp.eq.f32.partialorder %v2260, 8.507059e+37
    %v2262 = vand.u32 %v2241, 2147483648
    %v2263 = vor.u32 1.1754944e-38, %v2262
    %v2264 = vsel %vm2261, %v2263, %v2259
    %v2265 = vmul.f32 %v2226, %v2264
    %v2266 = vmul.f32 %v2228, %v2264
    %v2267 = vrcp.pop %v2250
    %v2268 = vmul.f32 %v2250, %v2267
    %v2269 = vsub.f32 1.0, %v2268
    %v2270 = vmul.f32 %v2267, %v2269
    %v2271 = vadd.f32 %v2267, %v2270
    %vm2272 = vweird.f32 %v2250
    %vm2273 = vweird.f32 %v2267
    %vm2274 = vmor %vm2272, %vm2273
    %v2275 = vsel %vm2274, %v2267, %v2271
    %v2276 = vand.u32 2147483647, %v2250
    %vm2277 = vcmp.eq.f32.partialorder %v2276, 8.507059e+37
    %v2278 = vand.u32 %v2250, 2147483648
    %v2279 = vor.u32 1.1754944e-38, %v2278
    %v2280 = vsel %vm2277, %v2279, %v2275
    %v2281 = vmul.f32 %v2230, %v2280
    %v2282 = vmul.f32 %v2232, %v2280
    %2284 = vset.pattern.permute.xlu0 0
    %2285 = vperm.xlu0 %2284, %v2265
    %v2286 = vpop.permute.xlu0 %2285
    %2289 = vset.pattern.permute.xlu0 0
    %2290 = vperm.xlu0 %2289, %v2266
    %v2291 = vpop.permute.xlu0 %2290
    %2294 = vset.pattern.permute.xlu0 0
    %2295 = vperm.xlu0 %2294, %v2281
    %v2296 = vpop.permute.xlu0 %2295
    %2299 = vset.pattern.permute.xlu0 0
    %2300 = vperm.xlu0 %2299, %v2282
    %v2301 = vpop.permute.xlu0 %2300
    %v2303 = vmul.f32 %v2286, %v660
    %v2304 = vmul.f32 %v2291, %v663
    %v2305 = vmul.f32 %v2296, %v706
    %v2306 = vmul.f32 %v2301, %v709
    %v2307 = vsel %vm719, %v2303, 0.0
    %v2308 = vsel %vm719, %v2304, 0.0
    %v2309 = vadd.f32 %v2307, %v2308
    %v2310 = vrot.slane %v2309, 4
    %v2311 = vadd.f32 %v2309, %v2310
    %v2312 = vrot.slane %v2311, 2
    %v2313 = vadd.f32 %v2311, %v2312
    %v2314 = vrot.slane %v2313, 1
    %v2315 = vadd.f32 %v2313, %v2314
    %v2316 = vsel %vm719, %v2305, 0.0
    %v2317 = vsel %vm719, %v2306, 0.0
    %v2318 = vadd.f32 %v2316, %v2317
    %v2319 = vrot.slane %v2318, 4
    %v2320 = vadd.f32 %v2318, %v2319
    %v2321 = vrot.slane %v2320, 2
    %v2322 = vadd.f32 %v2320, %v2321
    %v2323 = vrot.slane %v2322, 1
    %v2324 = vadd.f32 %v2322, %v2323
    %s2325 = sld [smem:[#allocation2 + $0x4]]
    %s2326 = scalar_lea.vmem %s2, %s2325
    %v2327 = vld [vmem:[%s2326] sm:$0x1]
    %s2328 = sld [smem:[#allocation2 + $0x84]]
    %s2329 = scalar_lea.vmem %s2, %s2328
    %v2330 = vld [vmem:[%s2329] sm:$0x1]
    %v2332 = vrot.slane %v2330, 7
    %v2334 = vsel %vm1088, %v2327, %v2332
    %v2337 = vsel %vm798, %v2324, %v2315
    %2338 = vrot.lane.b32.xlu0 %v2337, 16
    %v2339 = vpop.permute.xlu0 %2338
    %2341 = vrot.lane.b32.xlu0 %v2097, 80
    %v2342 = vpop.permute.xlu0 %2341
    %v2344 = vsel %vm1099, %v2334, %v2339
    %v2345 = vsel %vm1101, %v2344, %v2342
    %v2347 = vsel %vm1106, %v2345, 0
    %2349 = vmatpush.msra.mxu0 0.0
    %2350 = vmatpush.msra.mxu0 0.0
    %2351 = vmatpush.msra.mxu0 0.0
    %2352 = vmatpush.msra.mxu0 0.0
    %2353 = vmatpush.msra.mxu0 0.0
    %2354 = vmatpush.msra.mxu0 0.0
    %2355 = vmatpush.msra.mxu0 %v868
    %2356 = vmatpush.msra.mxu0 %v867
    %2357 = vmatpush.msra.mxu0 %v866
    %2358 = vmatpush.msra.mxu0 %v865
    %2359 = vmatpush.msra.mxu0 %v864
    %2360 = vmatpush.msra.mxu0 %v863
    %2361 = vmatpush.msra.mxu0 %v862
    %2362 = vmatpush.msra.mxu0 %v861
    %2363 = vmatpush.msra.mxu0 %v860
    %2364 = vmatpush.msra.mxu0 %v859
    %2365 = vmatmul.f32.gmra.mxu0 %v2347
    %v2366 = vpop.f32.mrf.mxu0
    %v2367 = vadd.f32 %v1104, %v2366
    %2368 = vdwg.mxu0
    %v2369 = vxor.u32 %v2367, 2147483648
    %v2370 = vmul.f32 %v2369, 1.442695
    %v2371 = vpow.pop %v2370
    %v2372 = vadd.f32 %v2371, 1.0
    %v2373 = vrcp.pop %v2372
    %v2374 = vmul.f32 %v2372, %v2373
    %v2375 = vsub.f32 1.0, %v2374
    %v2376 = vmul.f32 %v2373, %v2375
    %v2377 = vadd.f32 %v2373, %v2376
    %vm2378 = vweird.f32 %v2372
    %vm2379 = vweird.f32 %v2373
    %vm2380 = vmor %vm2378, %vm2379
    %v2381 = vsel %vm2380, %v2373, %v2377
    %v2382 = vand.u32 2147483647, %v2372
    %vm2383 = vcmp.eq.f32.partialorder %v2382, 8.507059e+37
    %v2384 = vand.u32 %v2372, 2147483648
    %v2385 = vor.u32 1.1754944e-38, %v2384
    %v2386 = vsel %vm2383, %v2385, %v2381
    %v2387 = vmul.f32 1.0, %v2386
    %v2388 = vtanh.pop %v2367
    %v2389 = vmul.f32 %v2387, %v2091
    %2391 = vrot.lane.b32.xlu0 %v2388, 64
    %v2392 = vpop.permute.xlu0 %2391
    %v2394 = vmul.f32 %v2387, %v2392
    %2396 = vrot.lane.b32.xlu0 %v2394, 32
    %v2397 = vpop.permute.xlu0 %2396
    %v2399 = vadd.f32 %v2389, %v2397
    %v2400 = vtanh.pop %v2399
    %2402 = vrot.lane.b32.xlu0 %v2400, 64
    %v2403 = vpop.permute.xlu0 %2402
    %v2405 = vmul.f32 %v2387, %v2403
    %2407 = vrot.lane.b32.xlu0 %v2405, 32
    %v2408 = vpop.permute.xlu0 %2407
    %v2409 = vsel %vm719, %v2408, 0
    %2411 = vmatpush.msra.mxu0 0.0
    %2412 = vmatpush.msra.mxu0 0.0
    %2413 = vmatpush.msra.mxu0 0.0
    %2414 = vmatpush.msra.mxu0 0.0
    %2415 = vmatpush.msra.mxu0 0.0
    %2416 = vmatpush.msra.mxu0 0.0
    %2417 = vmatpush.msra.mxu0 0.0
    %2418 = vmatpush.msra.mxu0 0.0
    %2419 = vmatpush.msra.mxu0 0.0
    %2420 = vmatpush.msra.mxu0 0.0
    %2421 = vmatpush.msra.mxu0 0.0
    %2422 = vmatpush.msra.mxu0 0.0
    %2423 = vmatpush.msra.mxu0 %v873
    %2424 = vmatpush.msra.mxu0 %v872
    %2425 = vmatpush.msra.mxu0 %v871
    %2426 = vmatpush.msra.mxu0 %v870
    %2427 = vmatmul.f32.gmra.mxu0 %v2409
    %v2428 = vpop.f32.mrf.mxu0
    %v2429 = vadd.f32 %v1172, %v2428
    %2430 = vdwg.mxu0
    %v2432 = vrot.slane %v2429, 1
    %2434 = vst [vmem:[#allocation5 + $0x4] sm:$0x1] %v2429
    %2435 = vst [vmem:[#allocation5 + $0xc] sm:$0x1] %v2432
    %2436 = vmatpush.msra.mxu0 0.0
    %2437 = vmatpush.msra.mxu0 0.0
    %2438 = vmatpush.msra.mxu0 0.0
    %2439 = vmatpush.msra.mxu0 0.0
    %2440 = vmatpush.msra.mxu0 0.0
    %2441 = vmatpush.msra.mxu0 0.0
    %2442 = vmatpush.msra.mxu0 0.0
    %2443 = vmatpush.msra.mxu0 0.0
    %2444 = vmatpush.msra.mxu0 0.0
    %2445 = vmatpush.msra.mxu0 0.0
    %2446 = vmatpush.msra.mxu0 0.0
    %2447 = vmatpush.msra.mxu0 0.0
    %2448 = vmatpush.msra.mxu0 %v853
    %2449 = vmatpush.msra.mxu0 %v852
    %2450 = vmatpush.msra.mxu0 %v851
    %2451 = vmatpush.msra.mxu0 %v850
    %2452 = vmatmul.f32.gmra.mxu0 %v2409
    %v2453 = vpop.f32.mrf.mxu0
    %v2454 = vadd.f32 %v876, %v2453
    %2455 = vdwg.mxu0
    %v2457 = vrot.slane %v2454, 1
    %v2458 = vperm.slane %v2454, 0
    %v2459 = vperm.slane %v2457, 0
    %v2462 = vadd.f32 %v750, %v2458
    %v2463 = vadd.f32 %v753, %v2458
    %v2464 = vadd.f32 %v756, %v2459
    %v2465 = vadd.f32 %v759, %v2459
    %v2466 = vmax.f32 %v2462, 0.0
    %v2467 = vmax.f32 %v2463, 0.0
    %v2468 = vmax.f32 %v2464, 0.0
    %v2469 = vmax.f32 %v2465, 0.0
    %v2471 = vsel %vm719, %v2466, 0
    %v2474 = vsel %vm719, %v2467, 0
    %v2477 = vsel %vm719, %v2468, 0
    %v2480 = vsel %vm719, %v2469, 0
    %2482 = vmatpush.msra.mxu0 0.0
    %2483 = vmatpush.msra.mxu0 0.0
    %2484 = vmatpush.msra.mxu0 0.0
    %2485 = vmatpush.msra.mxu0 0.0
    %2486 = vmatpush.msra.mxu0 0.0
    %2487 = vmatpush.msra.mxu0 0.0
    %2488 = vmatpush.msra.mxu0 0.0
    %2489 = vmatpush.msra.mxu0 0.0
    %2490 = vmatpush.msra.mxu0 0.0
    %2491 = vmatpush.msra.mxu0 0.0
    %2492 = vmatpush.msra.mxu0 0.0
    %2493 = vmatpush.msra.mxu0 0.0
    %2494 = vmatpush.msra.mxu0 %v858
    %2495 = vmatpush.msra.mxu0 %v857
    %2496 = vmatpush.msra.mxu0 %v856
    %2497 = vmatpush.msra.mxu0 %v855
    %2498 = vmatmul.f32.gmra.mxu0 %v2471
    %v2499 = vpop.f32.mrf.mxu0
    %v2500 = vadd.f32 0.0, %v2499
    %2501 = vmatmul.f32.gmra.mxu0 %v2474
    %v2502 = vpop.f32.mrf.mxu0
    %v2503 = vadd.f32 0.0, %v2502
    %2504 = vmatmul.f32.gmra.mxu0 %v2477
    %v2505 = vpop.f32.mrf.mxu0
    %v2506 = vadd.f32 0.0, %v2505
    %2507 = vmatmul.f32.gmra.mxu0 %v2480
    %v2508 = vpop.f32.mrf.mxu0
    %v2509 = vadd.f32 0.0, %v2508
    %2510 = vdwg.mxu0
    %v2511 = vsel %vm956, %v2500, -inf
    %v2512 = vsel %vm956, %v2503, -inf
    %v2513 = vmax.f32 %v2511, %v2512
    %v2514 = vrot.slane %v2513, 4
    %v2515 = vmax.f32 %v2513, %v2514
    %v2516 = vrot.slane %v2515, 2
    %v2517 = vmax.f32 %v2515, %v2516
    %v2518 = vrot.slane %v2517, 1
    %v2519 = vmax.f32 %v2517, %v2518
    %v2520 = vsel %vm956, %v2506, -inf
    %v2521 = vsel %vm956, %v2509, -inf
    %v2522 = vmax.f32 %v2520, %v2521
    %v2523 = vrot.slane %v2522, 4
    %v2524 = vmax.f32 %v2522, %v2523
    %v2525 = vrot.slane %v2524, 2
    %v2526 = vmax.f32 %v2524, %v2525
    %v2527 = vrot.slane %v2526, 1
    %v2528 = vmax.f32 %v2526, %v2527
    %v2529 = vsub.f32 %v2500, %v2519
    %v2530 = vsub.f32 %v2503, %v2519
    %v2531 = vsub.f32 %v2506, %v2528
    %v2532 = vsub.f32 %v2509, %v2528
    %v2533 = vmul.f32 %v2529, 1.442695
    %v2534 = vpow.pop %v2533
    %v2535 = vmul.f32 %v2530, 1.442695
    %v2536 = vpow.pop %v2535
    %v2537 = vmul.f32 %v2531, 1.442695
    %v2538 = vpow.pop %v2537
    %v2539 = vmul.f32 %v2532, 1.442695
    %v2540 = vpow.pop %v2539
    %v2541 = vsel %vm956, %v2534, 0.0
    %v2542 = vsel %vm956, %v2536, 0.0
    %v2543 = vadd.f32 %v2541, %v2542
    %v2544 = vrot.slane %v2543, 4
    %v2545 = vadd.f32 %v2543, %v2544
    %v2546 = vrot.slane %v2545, 2
    %v2547 = vadd.f32 %v2545, %v2546
    %v2548 = vrot.slane %v2547, 1
    %v2549 = vadd.f32 %v2547, %v2548
    %v2550 = vsel %vm956, %v2538, 0.0
    %v2551 = vsel %vm956, %v2540, 0.0
    %v2552 = vadd.f32 %v2550, %v2551
    %v2553 = vrot.slane %v2552, 4
    %v2554 = vadd.f32 %v2552, %v2553
    %v2555 = vrot.slane %v2554, 2
    %v2556 = vadd.f32 %v2554, %v2555
    %v2557 = vrot.slane %v2556, 1
    %v2558 = vadd.f32 %v2556, %v2557
    %v2559 = vrcp.pop %v2549
    %v2560 = vmul.f32 %v2549, %v2559
    %v2561 = vsub.f32 1.0, %v2560
    %v2562 = vmul.f32 %v2559, %v2561
    %v2563 = vadd.f32 %v2559, %v2562
    %vm2564 = vweird.f32 %v2549
    %vm2565 = vweird.f32 %v2559
    %vm2566 = vmor %vm2564, %vm2565
    %v2567 = vsel %vm2566, %v2559, %v2563
    %v2568 = vand.u32 2147483647, %v2549
    %vm2569 = vcmp.eq.f32.partialorder %v2568, 8.507059e+37
    %v2570 = vand.u32 %v2549, 2147483648
    %v2571 = vor.u32 1.1754944e-38, %v2570
    %v2572 = vsel %vm2569, %v2571, %v2567
    %v2573 = vmul.f32 %v2534, %v2572
    %v2574 = vmul.f32 %v2536, %v2572
    %v2575 = vrcp.pop %v2558
    %v2576 = vmul.f32 %v2558, %v2575
    %v2577 = vsub.f32 1.0, %v2576
    %v2578 = vmul.f32 %v2575, %v2577
    %v2579 = vadd.f32 %v2575, %v2578
    %vm2580 = vweird.f32 %v2558
    %vm2581 = vweird.f32 %v2575
    %vm2582 = vmor %vm2580, %vm2581
    %v2583 = vsel %vm2582, %v2575, %v2579
    %v2584 = vand.u32 2147483647, %v2558
    %vm2585 = vcmp.eq.f32.partialorder %v2584, 8.507059e+37
    %v2586 = vand.u32 %v2558, 2147483648
    %v2587 = vor.u32 1.1754944e-38, %v2586
    %v2588 = vsel %vm2585, %v2587, %v2583
    %v2589 = vmul.f32 %v2538, %v2588
    %v2590 = vmul.f32 %v2540, %v2588
    %2592 = vset.pattern.permute.xlu0 0
    %2593 = vperm.xlu0 %2592, %v2573
    %v2594 = vpop.permute.xlu0 %2593
    %2597 = vset.pattern.permute.xlu0 0
    %2598 = vperm.xlu0 %2597, %v2574
    %v2599 = vpop.permute.xlu0 %2598
    %2602 = vset.pattern.permute.xlu0 0
    %2603 = vperm.xlu0 %2602, %v2589
    %v2604 = vpop.permute.xlu0 %2603
    %2607 = vset.pattern.permute.xlu0 0
    %2608 = vperm.xlu0 %2607, %v2590
    %v2609 = vpop.permute.xlu0 %2608
    %v2611 = vmul.f32 %v2594, %v660
    %v2612 = vmul.f32 %v2599, %v663
    %v2613 = vmul.f32 %v2604, %v706
    %v2614 = vmul.f32 %v2609, %v709
    %v2615 = vsel %vm719, %v2611, 0.0
    %v2616 = vsel %vm719, %v2612, 0.0
    %v2617 = vadd.f32 %v2615, %v2616
    %v2618 = vrot.slane %v2617, 4
    %v2619 = vadd.f32 %v2617, %v2618
    %v2620 = vrot.slane %v2619, 2
    %v2621 = vadd.f32 %v2619, %v2620
    %v2622 = vrot.slane %v2621, 1
    %v2623 = vadd.f32 %v2621, %v2622
    %v2624 = vsel %vm719, %v2613, 0.0
    %v2625 = vsel %vm719, %v2614, 0.0
    %v2626 = vadd.f32 %v2624, %v2625
    %v2627 = vrot.slane %v2626, 4
    %v2628 = vadd.f32 %v2626, %v2627
    %v2629 = vrot.slane %v2628, 2
    %v2630 = vadd.f32 %v2628, %v2629
    %v2631 = vrot.slane %v2630, 1
    %v2632 = vadd.f32 %v2630, %v2631
    %s2633 = sld [smem:[#allocation2 + $0x5]]
    %s2634 = scalar_lea.vmem %s2, %s2633
    %v2635 = vld [vmem:[%s2634] sm:$0x1]
    %s2636 = sld [smem:[#allocation2 + $0x85]]
    %s2637 = scalar_lea.vmem %s2, %s2636
    %v2638 = vld [vmem:[%s2637] sm:$0x1]
    %v2640 = vrot.slane %v2638, 7
    %v2642 = vsel %vm1088, %v2635, %v2640
    %v2645 = vsel %vm798, %v2632, %v2623
    %2646 = vrot.lane.b32.xlu0 %v2645, 16
    %v2647 = vpop.permute.xlu0 %2646
    %2649 = vrot.lane.b32.xlu0 %v2405, 80
    %v2650 = vpop.permute.xlu0 %2649
    %v2652 = vsel %vm1099, %v2642, %v2647
    %v2653 = vsel %vm1101, %v2652, %v2650
    %v2655 = vsel %vm1106, %v2653, 0
    %2657 = vmatpush.msra.mxu0 0.0
    %2658 = vmatpush.msra.mxu0 0.0
    %2659 = vmatpush.msra.mxu0 0.0
    %2660 = vmatpush.msra.mxu0 0.0
    %2661 = vmatpush.msra.mxu0 0.0
    %2662 = vmatpush.msra.mxu0 0.0
    %2663 = vmatpush.msra.mxu0 %v868
    %2664 = vmatpush.msra.mxu0 %v867
    %2665 = vmatpush.msra.mxu0 %v866
    %2666 = vmatpush.msra.mxu0 %v865
    %2667 = vmatpush.msra.mxu0 %v864
    %2668 = vmatpush.msra.mxu0 %v863
    %2669 = vmatpush.msra.mxu0 %v862
    %2670 = vmatpush.msra.mxu0 %v861
    %2671 = vmatpush.msra.mxu0 %v860
    %2672 = vmatpush.msra.mxu0 %v859
    %2673 = vmatmul.f32.gmra.mxu0 %v2655
    %v2674 = vpop.f32.mrf.mxu0
    %v2675 = vadd.f32 %v1104, %v2674
    %2676 = vdwg.mxu0
    %v2677 = vxor.u32 %v2675, 2147483648
    %v2678 = vmul.f32 %v2677, 1.442695
    %v2679 = vpow.pop %v2678
    %v2680 = vadd.f32 %v2679, 1.0
    %v2681 = vrcp.pop %v2680
    %v2682 = vmul.f32 %v2680, %v2681
    %v2683 = vsub.f32 1.0, %v2682
    %v2684 = vmul.f32 %v2681, %v2683
    %v2685 = vadd.f32 %v2681, %v2684
    %vm2686 = vweird.f32 %v2680
    %vm2687 = vweird.f32 %v2681
    %vm2688 = vmor %vm2686, %vm2687
    %v2689 = vsel %vm2688, %v2681, %v2685
    %v2690 = vand.u32 2147483647, %v2680
    %vm2691 = vcmp.eq.f32.partialorder %v2690, 8.507059e+37
    %v2692 = vand.u32 %v2680, 2147483648
    %v2693 = vor.u32 1.1754944e-38, %v2692
    %v2694 = vsel %vm2691, %v2693, %v2689
    %v2695 = vmul.f32 1.0, %v2694
    %v2696 = vtanh.pop %v2675
    %v2697 = vmul.f32 %v2695, %v2399
    %2699 = vrot.lane.b32.xlu0 %v2696, 64
    %v2700 = vpop.permute.xlu0 %2699
    %v2702 = vmul.f32 %v2695, %v2700
    %2704 = vrot.lane.b32.xlu0 %v2702, 32
    %v2705 = vpop.permute.xlu0 %2704
    %v2707 = vadd.f32 %v2697, %v2705
    %v2708 = vtanh.pop %v2707
    %2710 = vrot.lane.b32.xlu0 %v2708, 64
    %v2711 = vpop.permute.xlu0 %2710
    %v2713 = vmul.f32 %v2695, %v2711
    %2715 = vrot.lane.b32.xlu0 %v2713, 32
    %v2716 = vpop.permute.xlu0 %2715
    %v2717 = vsel %vm719, %v2716, 0
    %2719 = vmatpush.msra.mxu0 0.0
    %2720 = vmatpush.msra.mxu0 0.0
    %2721 = vmatpush.msra.mxu0 0.0
    %2722 = vmatpush.msra.mxu0 0.0
    %2723 = vmatpush.msra.mxu0 0.0
    %2724 = vmatpush.msra.mxu0 0.0
    %2725 = vmatpush.msra.mxu0 0.0
    %2726 = vmatpush.msra.mxu0 0.0
    %2727 = vmatpush.msra.mxu0 0.0
    %2728 = vmatpush.msra.mxu0 0.0
    %2729 = vmatpush.msra.mxu0 0.0
    %2730 = vmatpush.msra.mxu0 0.0
    %2731 = vmatpush.msra.mxu0 %v873
    %2732 = vmatpush.msra.mxu0 %v872
    %2733 = vmatpush.msra.mxu0 %v871
    %2734 = vmatpush.msra.mxu0 %v870
    %2735 = vmatmul.f32.gmra.mxu0 %v2717
    %v2736 = vpop.f32.mrf.mxu0
    %v2737 = vadd.f32 %v1172, %v2736
    %2738 = vdwg.mxu0
    %v2740 = vrot.slane %v2737, 1
    %2742 = vst [vmem:[#allocation5 + $0x5] sm:$0x1] %v2737
    %2743 = vst [vmem:[#allocation5 + $0xd] sm:$0x1] %v2740
    %2744 = vmatpush.msra.mxu0 0.0
    %2745 = vmatpush.msra.mxu0 0.0
    %2746 = vmatpush.msra.mxu0 0.0
    %2747 = vmatpush.msra.mxu0 0.0
    %2748 = vmatpush.msra.mxu0 0.0
    %2749 = vmatpush.msra.mxu0 0.0
    %2750 = vmatpush.msra.mxu0 0.0
    %2751 = vmatpush.msra.mxu0 0.0
    %2752 = vmatpush.msra.mxu0 0.0
    %2753 = vmatpush.msra.mxu0 0.0
    %2754 = vmatpush.msra.mxu0 0.0
    %2755 = vmatpush.msra.mxu0 0.0
    %2756 = vmatpush.msra.mxu0 %v853
    %2757 = vmatpush.msra.mxu0 %v852
    %2758 = vmatpush.msra.mxu0 %v851
    %2759 = vmatpush.msra.mxu0 %v850
    %2760 = vmatmul.f32.gmra.mxu0 %v2717
    %v2761 = vpop.f32.mrf.mxu0
    %v2762 = vadd.f32 %v876, %v2761
    %2763 = vdwg.mxu0
    %v2765 = vrot.slane %v2762, 1
    %v2766 = vperm.slane %v2762, 0
    %v2767 = vperm.slane %v2765, 0
    %v2770 = vadd.f32 %v750, %v2766
    %v2771 = vadd.f32 %v753, %v2766
    %v2772 = vadd.f32 %v756, %v2767
    %v2773 = vadd.f32 %v759, %v2767
    %v2774 = vmax.f32 %v2770, 0.0
    %v2775 = vmax.f32 %v2771, 0.0
    %v2776 = vmax.f32 %v2772, 0.0
    %v2777 = vmax.f32 %v2773, 0.0
    %v2779 = vsel %vm719, %v2774, 0
    %v2782 = vsel %vm719, %v2775, 0
    %v2785 = vsel %vm719, %v2776, 0
    %v2788 = vsel %vm719, %v2777, 0
    %2790 = vmatpush.msra.mxu0 0.0
    %2791 = vmatpush.msra.mxu0 0.0
    %2792 = vmatpush.msra.mxu0 0.0
    %2793 = vmatpush.msra.mxu0 0.0
    %2794 = vmatpush.msra.mxu0 0.0
    %2795 = vmatpush.msra.mxu0 0.0
    %2796 = vmatpush.msra.mxu0 0.0
    %2797 = vmatpush.msra.mxu0 0.0
    %2798 = vmatpush.msra.mxu0 0.0
    %2799 = vmatpush.msra.mxu0 0.0
    %2800 = vmatpush.msra.mxu0 0.0
    %2801 = vmatpush.msra.mxu0 0.0
    %2802 = vmatpush.msra.mxu0 %v858
    %2803 = vmatpush.msra.mxu0 %v857
    %2804 = vmatpush.msra.mxu0 %v856
    %2805 = vmatpush.msra.mxu0 %v855
    %2806 = vmatmul.f32.gmra.mxu0 %v2779
    %v2807 = vpop.f32.mrf.mxu0
    %v2808 = vadd.f32 0.0, %v2807
    %2809 = vmatmul.f32.gmra.mxu0 %v2782
    %v2810 = vpop.f32.mrf.mxu0
    %v2811 = vadd.f32 0.0, %v2810
    %2812 = vmatmul.f32.gmra.mxu0 %v2785
    %v2813 = vpop.f32.mrf.mxu0
    %v2814 = vadd.f32 0.0, %v2813
    %2815 = vmatmul.f32.gmra.mxu0 %v2788
    %v2816 = vpop.f32.mrf.mxu0
    %v2817 = vadd.f32 0.0, %v2816
    %2818 = vdwg.mxu0
    %v2819 = vsel %vm956, %v2808, -inf
    %v2820 = vsel %vm956, %v2811, -inf
    %v2821 = vmax.f32 %v2819, %v2820
    %v2822 = vrot.slane %v2821, 4
    %v2823 = vmax.f32 %v2821, %v2822
    %v2824 = vrot.slane %v2823, 2
    %v2825 = vmax.f32 %v2823, %v2824
    %v2826 = vrot.slane %v2825, 1
    %v2827 = vmax.f32 %v2825, %v2826
    %v2828 = vsel %vm956, %v2814, -inf
    %v2829 = vsel %vm956, %v2817, -inf
    %v2830 = vmax.f32 %v2828, %v2829
    %v2831 = vrot.slane %v2830, 4
    %v2832 = vmax.f32 %v2830, %v2831
    %v2833 = vrot.slane %v2832, 2
    %v2834 = vmax.f32 %v2832, %v2833
    %v2835 = vrot.slane %v2834, 1
    %v2836 = vmax.f32 %v2834, %v2835
    %v2837 = vsub.f32 %v2808, %v2827
    %v2838 = vsub.f32 %v2811, %v2827
    %v2839 = vsub.f32 %v2814, %v2836
    %v2840 = vsub.f32 %v2817, %v2836
    %v2841 = vmul.f32 %v2837, 1.442695
    %v2842 = vpow.pop %v2841
    %v2843 = vmul.f32 %v2838, 1.442695
    %v2844 = vpow.pop %v2843
    %v2845 = vmul.f32 %v2839, 1.442695
    %v2846 = vpow.pop %v2845
    %v2847 = vmul.f32 %v2840, 1.442695
    %v2848 = vpow.pop %v2847
    %v2849 = vsel %vm956, %v2842, 0.0
    %v2850 = vsel %vm956, %v2844, 0.0
    %v2851 = vadd.f32 %v2849, %v2850
    %v2852 = vrot.slane %v2851, 4
    %v2853 = vadd.f32 %v2851, %v2852
    %v2854 = vrot.slane %v2853, 2
    %v2855 = vadd.f32 %v2853, %v2854
    %v2856 = vrot.slane %v2855, 1
    %v2857 = vadd.f32 %v2855, %v2856
    %v2858 = vsel %vm956, %v2846, 0.0
    %v2859 = vsel %vm956, %v2848, 0.0
    %v2860 = vadd.f32 %v2858, %v2859
    %v2861 = vrot.slane %v2860, 4
    %v2862 = vadd.f32 %v2860, %v2861
    %v2863 = vrot.slane %v2862, 2
    %v2864 = vadd.f32 %v2862, %v2863
    %v2865 = vrot.slane %v2864, 1
    %v2866 = vadd.f32 %v2864, %v2865
    %v2867 = vrcp.pop %v2857
    %v2868 = vmul.f32 %v2857, %v2867
    %v2869 = vsub.f32 1.0, %v2868
    %v2870 = vmul.f32 %v2867, %v2869
    %v2871 = vadd.f32 %v2867, %v2870
    %vm2872 = vweird.f32 %v2857
    %vm2873 = vweird.f32 %v2867
    %vm2874 = vmor %vm2872, %vm2873
    %v2875 = vsel %vm2874, %v2867, %v2871
    %v2876 = vand.u32 2147483647, %v2857
    %vm2877 = vcmp.eq.f32.partialorder %v2876, 8.507059e+37
    %v2878 = vand.u32 %v2857, 2147483648
    %v2879 = vor.u32 1.1754944e-38, %v2878
    %v2880 = vsel %vm2877, %v2879, %v2875
    %v2881 = vmul.f32 %v2842, %v2880
    %v2882 = vmul.f32 %v2844, %v2880
    %v2883 = vrcp.pop %v2866
    %v2884 = vmul.f32 %v2866, %v2883
    %v2885 = vsub.f32 1.0, %v2884
    %v2886 = vmul.f32 %v2883, %v2885
    %v2887 = vadd.f32 %v2883, %v2886
    %vm2888 = vweird.f32 %v2866
    %vm2889 = vweird.f32 %v2883
    %vm2890 = vmor %vm2888, %vm2889
    %v2891 = vsel %vm2890, %v2883, %v2887
    %v2892 = vand.u32 2147483647, %v2866
    %vm2893 = vcmp.eq.f32.partialorder %v2892, 8.507059e+37
    %v2894 = vand.u32 %v2866, 2147483648
    %v2895 = vor.u32 1.1754944e-38, %v2894
    %v2896 = vsel %vm2893, %v2895, %v2891
    %v2897 = vmul.f32 %v2846, %v2896
    %v2898 = vmul.f32 %v2848, %v2896
    %2900 = vset.pattern.permute.xlu0 0
    %2901 = vperm.xlu0 %2900, %v2881
    %v2902 = vpop.permute.xlu0 %2901
    %2905 = vset.pattern.permute.xlu0 0
    %2906 = vperm.xlu0 %2905, %v2882
    %v2907 = vpop.permute.xlu0 %2906
    %2910 = vset.pattern.permute.xlu0 0
    %2911 = vperm.xlu0 %2910, %v2897
    %v2912 = vpop.permute.xlu0 %2911
    %2915 = vset.pattern.permute.xlu0 0
    %2916 = vperm.xlu0 %2915, %v2898
    %v2917 = vpop.permute.xlu0 %2916
    %v2919 = vmul.f32 %v2902, %v660
    %v2920 = vmul.f32 %v2907, %v663
    %v2921 = vmul.f32 %v2912, %v706
    %v2922 = vmul.f32 %v2917, %v709
    %v2923 = vsel %vm719, %v2919, 0.0
    %v2924 = vsel %vm719, %v2920, 0.0
    %v2925 = vadd.f32 %v2923, %v2924
    %v2926 = vrot.slane %v2925, 4
    %v2927 = vadd.f32 %v2925, %v2926
    %v2928 = vrot.slane %v2927, 2
    %v2929 = vadd.f32 %v2927, %v2928
    %v2930 = vrot.slane %v2929, 1
    %v2931 = vadd.f32 %v2929, %v2930
    %v2932 = vsel %vm719, %v2921, 0.0
    %v2933 = vsel %vm719, %v2922, 0.0
    %v2934 = vadd.f32 %v2932, %v2933
    %v2935 = vrot.slane %v2934, 4
    %v2936 = vadd.f32 %v2934, %v2935
    %v2937 = vrot.slane %v2936, 2
    %v2938 = vadd.f32 %v2936, %v2937
    %v2939 = vrot.slane %v2938, 1
    %v2940 = vadd.f32 %v2938, %v2939
    %s2941 = sld [smem:[#allocation2 + $0x6]]
    %s2942 = scalar_lea.vmem %s2, %s2941
    %v2943 = vld [vmem:[%s2942] sm:$0x1]
    %s2944 = sld [smem:[#allocation2 + $0x86]]
    %s2945 = scalar_lea.vmem %s2, %s2944
    %v2946 = vld [vmem:[%s2945] sm:$0x1]
    %v2948 = vrot.slane %v2946, 7
    %v2950 = vsel %vm1088, %v2943, %v2948
    %v2953 = vsel %vm798, %v2940, %v2931
    %2954 = vrot.lane.b32.xlu0 %v2953, 16
    %v2955 = vpop.permute.xlu0 %2954
    %2957 = vrot.lane.b32.xlu0 %v2713, 80
    %v2958 = vpop.permute.xlu0 %2957
    %v2960 = vsel %vm1099, %v2950, %v2955
    %v2961 = vsel %vm1101, %v2960, %v2958
    %v2963 = vsel %vm1106, %v2961, 0
    %2965 = vmatpush.msra.mxu0 0.0
    %2966 = vmatpush.msra.mxu0 0.0
    %2967 = vmatpush.msra.mxu0 0.0
    %2968 = vmatpush.msra.mxu0 0.0
    %2969 = vmatpush.msra.mxu0 0.0
    %2970 = vmatpush.msra.mxu0 0.0
    %2971 = vmatpush.msra.mxu0 %v868
    %2972 = vmatpush.msra.mxu0 %v867
    %2973 = vmatpush.msra.mxu0 %v866
    %2974 = vmatpush.msra.mxu0 %v865
    %2975 = vmatpush.msra.mxu0 %v864
    %2976 = vmatpush.msra.mxu0 %v863
    %2977 = vmatpush.msra.mxu0 %v862
    %2978 = vmatpush.msra.mxu0 %v861
    %2979 = vmatpush.msra.mxu0 %v860
    %2980 = vmatpush.msra.mxu0 %v859
    %2981 = vmatmul.f32.gmra.mxu0 %v2963
    %v2982 = vpop.f32.mrf.mxu0
    %v2983 = vadd.f32 %v1104, %v2982
    %2984 = vdwg.mxu0
    %v2985 = vxor.u32 %v2983, 2147483648
    %v2986 = vmul.f32 %v2985, 1.442695
    %v2987 = vpow.pop %v2986
    %v2988 = vadd.f32 %v2987, 1.0
    %v2989 = vrcp.pop %v2988
    %v2990 = vmul.f32 %v2988, %v2989
    %v2991 = vsub.f32 1.0, %v2990
    %v2992 = vmul.f32 %v2989, %v2991
    %v2993 = vadd.f32 %v2989, %v2992
    %vm2994 = vweird.f32 %v2988
    %vm2995 = vweird.f32 %v2989
    %vm2996 = vmor %vm2994, %vm2995
    %v2997 = vsel %vm2996, %v2989, %v2993
    %v2998 = vand.u32 2147483647, %v2988
    %vm2999 = vcmp.eq.f32.partialorder %v2998, 8.507059e+37
    %v3000 = vand.u32 %v2988, 2147483648
    %v3001 = vor.u32 1.1754944e-38, %v3000
    %v3002 = vsel %vm2999, %v3001, %v2997
    %v3003 = vmul.f32 1.0, %v3002
    %v3004 = vtanh.pop %v2983
    %v3005 = vmul.f32 %v3003, %v2707
    %3007 = vrot.lane.b32.xlu0 %v3004, 64
    %v3008 = vpop.permute.xlu0 %3007
    %v3010 = vmul.f32 %v3003, %v3008
    %3012 = vrot.lane.b32.xlu0 %v3010, 32
    %v3013 = vpop.permute.xlu0 %3012
    %v3015 = vadd.f32 %v3005, %v3013
    %v3016 = vtanh.pop %v3015
    %3018 = vrot.lane.b32.xlu0 %v3016, 64
    %v3019 = vpop.permute.xlu0 %3018
    %v3021 = vmul.f32 %v3003, %v3019
    %3023 = vrot.lane.b32.xlu0 %v3021, 32
    %v3024 = vpop.permute.xlu0 %3023
    %v3025 = vsel %vm719, %v3024, 0
    %3027 = vmatpush.msra.mxu0 0.0
    %3028 = vmatpush.msra.mxu0 0.0
    %3029 = vmatpush.msra.mxu0 0.0
    %3030 = vmatpush.msra.mxu0 0.0
    %3031 = vmatpush.msra.mxu0 0.0
    %3032 = vmatpush.msra.mxu0 0.0
    %3033 = vmatpush.msra.mxu0 0.0
    %3034 = vmatpush.msra.mxu0 0.0
    %3035 = vmatpush.msra.mxu0 0.0
    %3036 = vmatpush.msra.mxu0 0.0
    %3037 = vmatpush.msra.mxu0 0.0
    %3038 = vmatpush.msra.mxu0 0.0
    %3039 = vmatpush.msra.mxu0 %v873
    %3040 = vmatpush.msra.mxu0 %v872
    %3041 = vmatpush.msra.mxu0 %v871
    %3042 = vmatpush.msra.mxu0 %v870
    %3043 = vmatmul.f32.gmra.mxu0 %v3025
    %v3044 = vpop.f32.mrf.mxu0
    %v3045 = vadd.f32 %v1172, %v3044
    %3046 = vdwg.mxu0
    %v3048 = vrot.slane %v3045, 1
    %3050 = vst [vmem:[#allocation5 + $0x6] sm:$0x1] %v3045
    %3051 = vst [vmem:[#allocation5 + $0xe] sm:$0x1] %v3048
    %3052 = vmatpush.msra.mxu0 0.0
    %3053 = vmatpush.msra.mxu0 0.0
    %3054 = vmatpush.msra.mxu0 0.0
    %3055 = vmatpush.msra.mxu0 0.0
    %3056 = vmatpush.msra.mxu0 0.0
    %3057 = vmatpush.msra.mxu0 0.0
    %3058 = vmatpush.msra.mxu0 0.0
    %3059 = vmatpush.msra.mxu0 0.0
    %3060 = vmatpush.msra.mxu0 0.0
    %3061 = vmatpush.msra.mxu0 0.0
    %3062 = vmatpush.msra.mxu0 0.0
    %3063 = vmatpush.msra.mxu0 0.0
    %3064 = vmatpush.msra.mxu0 %v853
    %3065 = vmatpush.msra.mxu0 %v852
    %3066 = vmatpush.msra.mxu0 %v851
    %3067 = vmatpush.msra.mxu0 %v850
    %3068 = vmatmul.f32.gmra.mxu0 %v3025
    %v3069 = vpop.f32.mrf.mxu0
    %v3070 = vadd.f32 %v876, %v3069
    %3071 = vdwg.mxu0
    %v3073 = vrot.slane %v3070, 1
    %v3074 = vperm.slane %v3070, 0
    %v3075 = vperm.slane %v3073, 0
    %v3078 = vadd.f32 %v750, %v3074
    %v3079 = vadd.f32 %v753, %v3074
    %v3080 = vadd.f32 %v756, %v3075
    %v3081 = vadd.f32 %v759, %v3075
    %v3082 = vmax.f32 %v3078, 0.0
    %v3083 = vmax.f32 %v3079, 0.0
    %v3084 = vmax.f32 %v3080, 0.0
    %v3085 = vmax.f32 %v3081, 0.0
    %v3087 = vsel %vm719, %v3082, 0
    %v3090 = vsel %vm719, %v3083, 0
    %v3093 = vsel %vm719, %v3084, 0
    %v3096 = vsel %vm719, %v3085, 0
    %3098 = vmatpush.msra.mxu0 0.0
    %3099 = vmatpush.msra.mxu0 0.0
    %3100 = vmatpush.msra.mxu0 0.0
    %3101 = vmatpush.msra.mxu0 0.0
    %3102 = vmatpush.msra.mxu0 0.0
    %3103 = vmatpush.msra.mxu0 0.0
    %3104 = vmatpush.msra.mxu0 0.0
    %3105 = vmatpush.msra.mxu0 0.0
    %3106 = vmatpush.msra.mxu0 0.0
    %3107 = vmatpush.msra.mxu0 0.0
    %3108 = vmatpush.msra.mxu0 0.0
    %3109 = vmatpush.msra.mxu0 0.0
    %3110 = vmatpush.msra.mxu0 %v858
    %3111 = vmatpush.msra.mxu0 %v857
    %3112 = vmatpush.msra.mxu0 %v856
    %3113 = vmatpush.msra.mxu0 %v855
    %3114 = vmatmul.f32.gmra.mxu0 %v3087
    %v3115 = vpop.f32.mrf.mxu0
    %v3116 = vadd.f32 0.0, %v3115
    %3117 = vmatmul.f32.gmra.mxu0 %v3090
    %v3118 = vpop.f32.mrf.mxu0
    %v3119 = vadd.f32 0.0, %v3118
    %3120 = vmatmul.f32.gmra.mxu0 %v3093
    %v3121 = vpop.f32.mrf.mxu0
    %v3122 = vadd.f32 0.0, %v3121
    %3123 = vmatmul.f32.gmra.mxu0 %v3096
    %v3124 = vpop.f32.mrf.mxu0
    %v3125 = vadd.f32 0.0, %v3124
    %3126 = vdwg.mxu0
    %v3127 = vsel %vm956, %v3116, -inf
    %v3128 = vsel %vm956, %v3119, -inf
    %v3129 = vmax.f32 %v3127, %v3128
    %v3130 = vrot.slane %v3129, 4
    %v3131 = vmax.f32 %v3129, %v3130
    %v3132 = vrot.slane %v3131, 2
    %v3133 = vmax.f32 %v3131, %v3132
    %v3134 = vrot.slane %v3133, 1
    %v3135 = vmax.f32 %v3133, %v3134
    %v3136 = vsel %vm956, %v3122, -inf
    %v3137 = vsel %vm956, %v3125, -inf
    %v3138 = vmax.f32 %v3136, %v3137
    %v3139 = vrot.slane %v3138, 4
    %v3140 = vmax.f32 %v3138, %v3139
    %v3141 = vrot.slane %v3140, 2
    %v3142 = vmax.f32 %v3140, %v3141
    %v3143 = vrot.slane %v3142, 1
    %v3144 = vmax.f32 %v3142, %v3143
    %v3145 = vsub.f32 %v3116, %v3135
    %v3146 = vsub.f32 %v3119, %v3135
    %v3147 = vsub.f32 %v3122, %v3144
    %v3148 = vsub.f32 %v3125, %v3144
    %v3149 = vmul.f32 %v3145, 1.442695
    %v3150 = vpow.pop %v3149
    %v3151 = vmul.f32 %v3146, 1.442695
    %v3152 = vpow.pop %v3151
    %v3153 = vmul.f32 %v3147, 1.442695
    %v3154 = vpow.pop %v3153
    %v3155 = vmul.f32 %v3148, 1.442695
    %v3156 = vpow.pop %v3155
    %v3157 = vsel %vm956, %v3150, 0.0
    %v3158 = vsel %vm956, %v3152, 0.0
    %v3159 = vadd.f32 %v3157, %v3158
    %v3160 = vrot.slane %v3159, 4
    %v3161 = vadd.f32 %v3159, %v3160
    %v3162 = vrot.slane %v3161, 2
    %v3163 = vadd.f32 %v3161, %v3162
    %v3164 = vrot.slane %v3163, 1
    %v3165 = vadd.f32 %v3163, %v3164
    %v3166 = vsel %vm956, %v3154, 0.0
    %v3167 = vsel %vm956, %v3156, 0.0
    %v3168 = vadd.f32 %v3166, %v3167
    %v3169 = vrot.slane %v3168, 4
    %v3170 = vadd.f32 %v3168, %v3169
    %v3171 = vrot.slane %v3170, 2
    %v3172 = vadd.f32 %v3170, %v3171
    %v3173 = vrot.slane %v3172, 1
    %v3174 = vadd.f32 %v3172, %v3173
    %v3175 = vrcp.pop %v3165
    %v3176 = vmul.f32 %v3165, %v3175
    %v3177 = vsub.f32 1.0, %v3176
    %v3178 = vmul.f32 %v3175, %v3177
    %v3179 = vadd.f32 %v3175, %v3178
    %vm3180 = vweird.f32 %v3165
    %vm3181 = vweird.f32 %v3175
    %vm3182 = vmor %vm3180, %vm3181
    %v3183 = vsel %vm3182, %v3175, %v3179
    %v3184 = vand.u32 2147483647, %v3165
    %vm3185 = vcmp.eq.f32.partialorder %v3184, 8.507059e+37
    %v3186 = vand.u32 %v3165, 2147483648
    %v3187 = vor.u32 1.1754944e-38, %v3186
    %v3188 = vsel %vm3185, %v3187, %v3183
    %v3189 = vmul.f32 %v3150, %v3188
    %v3190 = vmul.f32 %v3152, %v3188
    %v3191 = vrcp.pop %v3174
    %v3192 = vmul.f32 %v3174, %v3191
    %v3193 = vsub.f32 1.0, %v3192
    %v3194 = vmul.f32 %v3191, %v3193
    %v3195 = vadd.f32 %v3191, %v3194
    %vm3196 = vweird.f32 %v3174
    %vm3197 = vweird.f32 %v3191
    %vm3198 = vmor %vm3196, %vm3197
    %v3199 = vsel %vm3198, %v3191, %v3195
    %v3200 = vand.u32 2147483647, %v3174
    %vm3201 = vcmp.eq.f32.partialorder %v3200, 8.507059e+37
    %v3202 = vand.u32 %v3174, 2147483648
    %v3203 = vor.u32 1.1754944e-38, %v3202
    %v3204 = vsel %vm3201, %v3203, %v3199
    %v3205 = vmul.f32 %v3154, %v3204
    %v3206 = vmul.f32 %v3156, %v3204
    %3208 = vset.pattern.permute.xlu0 0
    %3209 = vperm.xlu0 %3208, %v3189
    %v3210 = vpop.permute.xlu0 %3209
    %3213 = vset.pattern.permute.xlu0 0
    %3214 = vperm.xlu0 %3213, %v3190
    %v3215 = vpop.permute.xlu0 %3214
    %3218 = vset.pattern.permute.xlu0 0
    %3219 = vperm.xlu0 %3218, %v3205
    %v3220 = vpop.permute.xlu0 %3219
    %3223 = vset.pattern.permute.xlu0 0
    %3224 = vperm.xlu0 %3223, %v3206
    %v3225 = vpop.permute.xlu0 %3224
    %v3227 = vmul.f32 %v3210, %v660
    %v3228 = vmul.f32 %v3215, %v663
    %v3229 = vmul.f32 %v3220, %v706
    %v3230 = vmul.f32 %v3225, %v709
    %v3231 = vsel %vm719, %v3227, 0.0
    %v3232 = vsel %vm719, %v3228, 0.0
    %v3233 = vadd.f32 %v3231, %v3232
    %v3234 = vrot.slane %v3233, 4
    %v3235 = vadd.f32 %v3233, %v3234
    %v3236 = vrot.slane %v3235, 2
    %v3237 = vadd.f32 %v3235, %v3236
    %v3238 = vrot.slane %v3237, 1
    %v3239 = vadd.f32 %v3237, %v3238
    %v3240 = vsel %vm719, %v3229, 0.0
    %v3241 = vsel %vm719, %v3230, 0.0
    %v3242 = vadd.f32 %v3240, %v3241
    %v3243 = vrot.slane %v3242, 4
    %v3244 = vadd.f32 %v3242, %v3243
    %v3245 = vrot.slane %v3244, 2
    %v3246 = vadd.f32 %v3244, %v3245
    %v3247 = vrot.slane %v3246, 1
    %v3248 = vadd.f32 %v3246, %v3247
    %s3249 = sld [smem:[#allocation2 + $0x7]]
    %s3250 = scalar_lea.vmem %s2, %s3249
    %v3251 = vld [vmem:[%s3250] sm:$0x1]
    %s3252 = sld [smem:[#allocation2 + $0x87]]
    %s3253 = scalar_lea.vmem %s2, %s3252
    %v3254 = vld [vmem:[%s3253] sm:$0x1]
    %v3256 = vrot.slane %v3254, 7
    %v3258 = vsel %vm1088, %v3251, %v3256
    %v3261 = vsel %vm798, %v3248, %v3239
    %3262 = vrot.lane.b32.xlu0 %v3261, 16
    %v3263 = vpop.permute.xlu0 %3262
    %3265 = vrot.lane.b32.xlu0 %v3021, 80
    %v3266 = vpop.permute.xlu0 %3265
    %v3268 = vsel %vm1099, %v3258, %v3263
    %v3269 = vsel %vm1101, %v3268, %v3266
    %v3271 = vsel %vm1106, %v3269, 0
    %3273 = vmatpush.msra.mxu0 0.0
    %3274 = vmatpush.msra.mxu0 0.0
    %3275 = vmatpush.msra.mxu0 0.0
    %3276 = vmatpush.msra.mxu0 0.0
    %3277 = vmatpush.msra.mxu0 0.0
    %3278 = vmatpush.msra.mxu0 0.0
    %3279 = vmatpush.msra.mxu0 %v868
    %3280 = vmatpush.msra.mxu0 %v867
    %3281 = vmatpush.msra.mxu0 %v866
    %3282 = vmatpush.msra.mxu0 %v865
    %3283 = vmatpush.msra.mxu0 %v864
    %3284 = vmatpush.msra.mxu0 %v863
    %3285 = vmatpush.msra.mxu0 %v862
    %3286 = vmatpush.msra.mxu0 %v861
    %3287 = vmatpush.msra.mxu0 %v860
    %3288 = vmatpush.msra.mxu0 %v859
    %3289 = vmatmul.f32.gmra.mxu0 %v3271
    %v3290 = vpop.f32.mrf.mxu0
    %v3291 = vadd.f32 %v1104, %v3290
    %3292 = vdwg.mxu0
    %v3293 = vxor.u32 %v3291, 2147483648
    %v3294 = vmul.f32 %v3293, 1.442695
    %v3295 = vpow.pop %v3294
    %v3296 = vadd.f32 %v3295, 1.0
    %v3297 = vrcp.pop %v3296
    %v3298 = vmul.f32 %v3296, %v3297
    %v3299 = vsub.f32 1.0, %v3298
    %v3300 = vmul.f32 %v3297, %v3299
    %v3301 = vadd.f32 %v3297, %v3300
    %vm3302 = vweird.f32 %v3296
    %vm3303 = vweird.f32 %v3297
    %vm3304 = vmor %vm3302, %vm3303
    %v3305 = vsel %vm3304, %v3297, %v3301
    %v3306 = vand.u32 2147483647, %v3296
    %vm3307 = vcmp.eq.f32.partialorder %v3306, 8.507059e+37
    %v3308 = vand.u32 %v3296, 2147483648
    %v3309 = vor.u32 1.1754944e-38, %v3308
    %v3310 = vsel %vm3307, %v3309, %v3305
    %v3311 = vmul.f32 1.0, %v3310
    %v3312 = vtanh.pop %v3291
    %v3313 = vmul.f32 %v3311, %v3015
    %3315 = vrot.lane.b32.xlu0 %v3312, 64
    %v3316 = vpop.permute.xlu0 %3315
    %v3318 = vmul.f32 %v3311, %v3316
    %3320 = vrot.lane.b32.xlu0 %v3318, 32
    %v3321 = vpop.permute.xlu0 %3320
    %v3323 = vadd.f32 %v3313, %v3321
    %v3324 = vtanh.pop %v3323
    %3326 = vrot.lane.b32.xlu0 %v3324, 64
    %v3327 = vpop.permute.xlu0 %3326
    %v3329 = vmul.f32 %v3311, %v3327
    %3331 = vrot.lane.b32.xlu0 %v3329, 32
    %v3332 = vpop.permute.xlu0 %3331
    %v3333 = vsel %vm719, %v3332, 0
    %3335 = vmatpush.msra.mxu0 0.0
    %3336 = vmatpush.msra.mxu0 0.0
    %3337 = vmatpush.msra.mxu0 0.0
    %3338 = vmatpush.msra.mxu0 0.0
    %3339 = vmatpush.msra.mxu0 0.0
    %3340 = vmatpush.msra.mxu0 0.0
    %3341 = vmatpush.msra.mxu0 0.0
    %3342 = vmatpush.msra.mxu0 0.0
    %3343 = vmatpush.msra.mxu0 0.0
    %3344 = vmatpush.msra.mxu0 0.0
    %3345 = vmatpush.msra.mxu0 0.0
    %3346 = vmatpush.msra.mxu0 0.0
    %3347 = vmatpush.msra.mxu0 %v873
    %3348 = vmatpush.msra.mxu0 %v872
    %3349 = vmatpush.msra.mxu0 %v871
    %3350 = vmatpush.msra.mxu0 %v870
    %3351 = vmatmul.f32.gmra.mxu0 %v3333
    %v3352 = vpop.f32.mrf.mxu0
    %v3353 = vadd.f32 %v1172, %v3352
    %3354 = vdwg.mxu0
    %v3356 = vrot.slane %v3353, 1
    %3358 = vst [vmem:[#allocation5 + $0x7] sm:$0x1] %v3353
    %3359 = vst [vmem:[#allocation5 + $0xf] sm:$0x1] %v3356
    // Predicated region
    $region82: #{image_captioning_forward.1} parent=1 // pred_check
      _
    $region83: #{image_captioning_forward.1} parent=1 // pred_check_branch
      %3361 = sbr.rel (0) target = $region85
    $region84: #{image_captioning_forward.1} parent=1 // pred_region
      %3363 = vsyncadd [#allocation3], 0
      %s3364 = sshll.u32 [#allocation5], 4
      %s3365 = int_to_ptr.vmem [resolvable:$true] %s3364
      %s3366 = sshll.u32 %s19, 4
      %s3367 = int_to_ptr.hbm [resolvable:$true] %s3366
      %3372 = dma.vmem_to_hbm [thread:$0]  %s3365, 256, %s3367, [#allocation3], 128, 128, 8
    $region85: #{image_captioning_forward.1} parent=1 // pred_fallthru
      _
    // Predicated region
    $region86: #{image_captioning_forward.1} parent=1 // pred_check
      _
    $region87: #{image_captioning_forward.1} parent=1 // pred_check_branch
      %3374 = sbr.rel (0) target = $region89
    $region88: #{image_captioning_forward.1} parent=1 // pred_region
      %3376 = dma.done [#allocation3], 256
    $region89: #{image_captioning_forward.1} parent=1 // pred_fallthru
      _
    %3377 = vsyncpa [#allocation3], 1
    %3378 = vsyncpa [#allocation4], 1

</llo_original>
